<compile_context>
chip_gen: v7x
topology: tpu7x:2x2x1
jax: 0.10.0
libtpu: 0.0.40
codegen_flags: <defaults>
</compile_context>

<pallas_src>
import functools

import jax
import jax.numpy as jnp
from jax.experimental import pallas as pl
from jax.experimental.pallas import tpu as pltpu


def _round_up(x, m):
    return ((x + m - 1) // m) * m


# ----------------------------------------------------------------------------
# Kernel 1: conv3x3 (im2col matmul) + (MaxPool2d(2) o MaxPool2d(2)) + bias+ReLU
# ----------------------------------------------------------------------------
def _conv_pool_kernel(cols_ref, w_ref, b_ref, out_ref):
    # cols_ref: (16, TM, F)  bf16 -- pool-window position k for TM output rows
    #                                (rows ordered (n, h4, w4)); F = 9*Cin
    # w_ref:    (F, Cout)    bf16
    # b_ref:    (1, Cout)    f32
    # out_ref:  (TM, Cout)   f32  = ReLU(max_k conv_k + bias)
    nwin, tm, f = cols_ref.shape
    cols = cols_ref[...].reshape(nwin * tm, f)          # free leading-dim merge
    y = jnp.dot(cols, w_ref[...], preferred_element_type=jnp.float32)
    y = jnp.max(y.reshape(nwin, tm, -1), axis=0)        # 4x4 block max (2 pools)
    y = y + b_ref[...]                                   # bias hoisted out of max
    out_ref[...] = jnp.maximum(y, 0.0)                   # score_net leading ReLU


# ----------------------------------------------------------------------------
# Kernel 2: score_net tail = Linear(+bias) -> ReLU -> Linear (no bias, padded)
# ----------------------------------------------------------------------------
def _mlp_kernel(x_ref, w1_ref, b1_ref, w2_ref, out_ref):
    h = jnp.dot(x_ref[...], w1_ref[...], preferred_element_type=jnp.float32)
    h = jnp.maximum(h + b1_ref[...], 0.0)
    out_ref[...] = jnp.dot(h, w2_ref[...], preferred_element_type=jnp.float32)


# ----------------------------------------------------------------------------
# Wrapper (glue: padding, im2col, pool-window row ordering, weight permutation)
# ----------------------------------------------------------------------------
@functools.partial(jax.jit, static_argnames=("tile_m",))
def model_cnn_classifier_forward(x, wc, bc, w1, b1, w2, *, tile_m=512):
    """x: (N, 3, H, W) f32 NCHW.  Weights in PyTorch layouts:
       wc (Cout, Cin, 3, 3), bc (Cout,), w1 (hidden, fc_start), b1 (hidden,),
       w2 (num_classes, hidden)."""
    N, C, H, W = x.shape
    Cout = wc.shape[0]
    assert wc.shape[1:] == (C, 3, 3)
    assert H % 4 == 0 and W % 4 == 0
    H4, W4 = H // 4, W // 4
    F = C * 9
    P = H4 * W4                      # pooled spatial positions per sample
    M = N * P                        # conv/pool output rows
    hidden = w1.shape[0]
    ncls = w2.shape[0]
    fc_start = Cout * P
    assert w1.shape[1] == fc_start

    # ---- glue: pad + im2col, features ordered (ci, ky, kx) ------------------
    xp = jnp.pad(x, ((0, 0), (0, 0), (1, 1), (1, 1)))
    patches = jnp.stack(
        [xp[:, :, ky:ky + H, kx:kx + W] for ky in range(3) for kx in range(3)],
        axis=2)                                              # (N, C, 9, H, W)
    cols = patches.transpose(0, 3, 4, 1, 2).reshape(N, H, W, F)
    # rows ordered (pool_window_pos[0..15], n, h4, w4)
    cols = (cols.reshape(N, H4, 4, W4, 4, F)
                .transpose(2, 4, 0, 1, 3, 5)
                .reshape(16, M, F))

    # bf16 MXU inputs (f32 accumulate) halve HBM/VMEM bytes of the dominant array.
    cols = cols.astype(jnp.bfloat16)
    wmat = wc.reshape(Cout, F).T.astype(jnp.bfloat16)        # (F, Cout)
    brow = bc.reshape(1, Cout).astype(jnp.float32)

    # ---- kernel 1: tiled + pipelined conv / double-maxpool / ReLU -----------
    tm = min(_round_up(tile_m, 16), _round_up(M, 16))        # bf16 sublane pack
    n_m = pl.cdiv(M, tm)
    Mp = tm * n_m
    if Mp != M:
        cols = jnp.pad(cols, ((0, 0), (0, Mp - M), (0, 0)))

    conv_flops = 2 * 16 * Mp * F * Cout
    conv_bytes = (cols.size * cols.dtype.itemsize + wmat.size * 2
                  + brow.size * 4 + Mp * Cout * 4)

    pooled = pl.pallas_call(
        _conv_pool_kernel,
        out_shape=jax.ShapeDtypeStruct((Mp, Cout), jnp.float32),
        grid_spec=pltpu.PrefetchScalarGridSpec(
            num_scalar_prefetch=0,
            grid=(n_m,),
            in_specs=[
                pl.BlockSpec((16, tm, F), lambda i: (0, i, 0)),
                pl.BlockSpec((F, Cout), lambda i: (0, 0)),
                pl.BlockSpec((1, Cout), lambda i: (0, 0)),
            ],
            out_specs=pl.BlockSpec((tm, Cout), lambda i: (i, 0)),
        ),
        compiler_params=pltpu.CompilerParams(
            dimension_semantics=("parallel",),
            vmem_limit_bytes=32 * 1024 * 1024,
        ),
        cost_estimate=pl.CostEstimate(
            flops=conv_flops, transcendentals=0, bytes_accessed=conv_bytes),
    )(cols, wmat, brow)

    # ---- glue: flatten is a FREE contiguous reshape (no transpose) ----------
    # pooled rows are (n, h4, w4) x Cout, so feat features are in (h4, w4, c)
    # order; the PyTorch (c, h4, w4) flatten order is absorbed by permuting the
    # input columns of w1 instead (elementwise ReLU commutes with permutation).
    feat = pooled[:M].reshape(N, fc_start)

    w1p = (w1.T.reshape(Cout, H4, W4, hidden)
               .transpose(1, 2, 0, 3)
               .reshape(fc_start, hidden)).astype(jnp.float32)
    b1row = b1.reshape(1, hidden).astype(jnp.float32)

    ncls_pad = _round_up(ncls, 128)                          # lane-dense store
    w2p = jnp.zeros((hidden, ncls_pad), jnp.float32).at[:, :ncls].set(w2.T)

    if N <= 128:
        tn = _round_up(N, 8)
        NP = tn
    else:
        tn = 128
        NP = _round_up(N, 128)
    if NP != N:
        feat = jnp.pad(feat, ((0, NP - N), (0, 0)))

    mlp_flops = 2 * NP * (fc_start * hidden + hidden * ncls_pad)
    mlp_bytes = (NP * fc_start * 4 + fc_start * hidden * 4
                 + hidden * ncls_pad * 4 + NP * ncls_pad * 4)

    logits = pl.pallas_call(
        _mlp_kernel,
        out_shape=jax.ShapeDtypeStruct((NP, ncls_pad), jnp.float32),
        grid_spec=pltpu.PrefetchScalarGridSpec(
            num_scalar_prefetch=0,
            grid=(NP // tn,),
            in_specs=[
                pl.BlockSpec((tn, fc_start), lambda i: (i, 0)),
                pl.BlockSpec((fc_start, hidden), lambda i: (0, 0)),
                pl.BlockSpec((1, hidden), lambda i: (0, 0)),
                pl.BlockSpec((hidden, ncls_pad), lambda i: (0, 0)),
            ],
            out_specs=pl.BlockSpec((tn, ncls_pad), lambda i: (i, 0)),
        ),
        compiler_params=pltpu.CompilerParams(
            dimension_semantics=("parallel",),
            vmem_limit_bytes=32 * 1024 * 1024,
        ),
        cost_estimate=pl.CostEstimate(
            flops=mlp_flops, transcendentals=0, bytes_accessed=mlp_bytes),
    )(feat, w1p, b1row, w2p)

    return logits[:N, :ncls]


# ----------------------------------------------------------------------------
# Pure-JAX reference (mirrors the PyTorch forward) for a sanity check
# ----------------------------------------------------------------------------
def reference_forward(x, wc, bc, w1, b1, w2):
    y = jax.lax.conv_general_dilated(
        x, wc, window_strides=(1, 1), padding=((1, 1), (1, 1)),
        dimension_numbers=("NCHW", "OIHW", "NCHW"),
    ) + bc.reshape(1, -1, 1, 1)

    def maxpool2(t):
        return jax.lax.reduce_window(
            t, -jnp.inf, jax.lax.max, (1, 1, 2, 2), (1, 1, 2, 2), "VALID")

    y = maxpool2(y)          # Dropout(0.2) in eval mode == identity
    y = maxpool2(y)          # num_hidden_layers == 0
    y = y.reshape(x.shape[0], -1)
    y = jnp.maximum(y, 0.0)
    y = y @ w1.T + b1
    y = jnp.maximum(y, 0.0)
    y = y @ w2.T
    return y


if __name__ == "__main__":
    # Config consistent with the module:
    #   input (N=8, C=3, H=32, W=32) -> input_size = 3*32*32 = 3072
    #   hidden_channels = 10, kernel_size = 3, num_hidden_layers = 0
    #   fc_start_size = 3072*10 // 48 = 640, hidden_size = 32, num_classes = 2
    N, C, H, W = 8, 3, 32, 32
    hidden_channels, hidden_size, num_classes = 10, 32, 2
    fc_start_size = (C * H * W) * hidden_channels // (3 * 16)

    key = jax.random.PRNGKey(0)
    kx, k1, k2, k3, k4, k5 = jax.random.split(key, 6)

    x = jax.random.normal(kx, (N, C, H, W), dtype=jnp.float32)
    wc = jax.random.normal(k1, (hidden_channels, C, 3, 3), dtype=jnp.float32) * 0.1
    bc = jax.random.normal(k2, (hidden_channels,), dtype=jnp.float32) * 0.1
    w1 = jax.random.normal(k3, (hidden_size, fc_start_size), dtype=jnp.float32) * (
        1.0 / (fc_start_size ** 0.5))
    b1 = jax.random.normal(k4, (hidden_size,), dtype=jnp.float32) * 0.1
    w2 = jax.random.normal(k5, (num_classes, hidden_size), dtype=jnp.float32) * (
        1.0 / (hidden_size ** 0.5))

    # tile_m=128 -> conv grid = (4,) at these sizes, exercising the pipeline.
    out = model_cnn_classifier_forward(x, wc, bc, w1, b1, w2, tile_m=128)
    out = jax.block_until_ready(out)

    ref = jax.block_until_ready(reference_forward(x, wc, bc, w1, b1, w2))
    assert out.shape == (N, num_classes), out.shape
    assert jnp.allclose(out, ref, rtol=2e-2, atol=2e-2), (out, ref)

    print("KERNEL_OK")
</pallas_src>

<mosaic_0001>
module attributes {stable_mosaic.version = 11 : i64} {
  func.func @_conv_pool_kernel(%arg0: i32, %arg1: memref<16x128x27xbf16, #tpu.memory_space<vmem>>, %arg2: memref<27x10xbf16, #tpu.memory_space<vmem>>, %arg3: memref<1x10xf32, #tpu.memory_space<vmem>>, %arg4: memref<128x10xf32, #tpu.memory_space<vmem>>) attributes {dimension_semantics = [#tpu.dimension_semantics<parallel>], iteration_bounds = array<i64: 4>, scalar_prefetch = 0 : i64, scratch_operands = 0 : i64, tpu.core_type = #tpu.core_type<tc>, window_params = [{transform_indices = @transform_0, window_bounds = array<i64: 16, 128, 27>}, {pipeline_mode = #tpu.pipeline_mode<synchronous>, transform_indices = @transform_1, window_bounds = array<i64: 27, 10>}, {pipeline_mode = #tpu.pipeline_mode<synchronous>, transform_indices = @transform_2, window_bounds = array<i64: 1, 10>}, {transform_indices = @transform_3, window_bounds = array<i64: 128, 10>}]} {
    %c0 = arith.constant 0 : index
    %c0_0 = arith.constant 0 : index
    %c0_1 = arith.constant 0 : index
    %0 = vector.load %arg1[%c0, %c0_0, %c0_1] : memref<16x128x27xbf16, #tpu.memory_space<vmem>>, vector<16x128x27xbf16>
    %1 = vector.shape_cast %0 : vector<16x128x27xbf16> to vector<2048x27xbf16>
    %c0_2 = arith.constant 0 : index
    %c0_3 = arith.constant 0 : index
    %2 = vector.load %arg2[%c0_2, %c0_3] : memref<27x10xbf16, #tpu.memory_space<vmem>>, vector<27x10xbf16>
    %cst = arith.constant dense<0.000000e+00> : vector<2048x10xf32>
    %3 = tpu.matmul %1, %2, %cst {dimension_numbers = #tpu.dot_dimension_numbers<[1], [0], [0], [1], [0, 0, 1, 1], [], []>} : vector<2048x27xbf16>, vector<27x10xbf16>, vector<2048x10xf32> -> vector<2048x10xf32>
    %4 = vector.shape_cast %3 : vector<2048x10xf32> to vector<16x128x10xf32>
    %cst_4 = arith.constant dense<0xFF800000> : vector<128x10xf32>
    %5 = vector.multi_reduction <maximumf>, %4, %cst_4 [0] : vector<16x128x10xf32> to vector<128x10xf32>
    %c0_5 = arith.constant 0 : index
    %c0_6 = arith.constant 0 : index
    %6 = vector.load %arg3[%c0_5, %c0_6] : memref<1x10xf32, #tpu.memory_space<vmem>>, vector<1x10xf32>
    %7 = vector.broadcast %6 : vector<1x10xf32> to vector<128x10xf32>
    %8 = arith.addf %5, %7 : vector<128x10xf32>
    %cst_7 = arith.constant 0.000000e+00 : f32
    %9 = vector.broadcast %cst_7 : f32 to vector<128x10xf32>
    %10 = arith.maximumf %8, %9 : vector<128x10xf32>
    %c0_8 = arith.constant 0 : index
    %c0_9 = arith.constant 0 : index
    %11 = vector.load %arg4[%c0_8, %c0_9] : memref<128x10xf32, #tpu.memory_space<vmem>>, vector<128x10xf32>
    tpu.vector_store %arg4[%c0_8, %c0_9], %10 {strides = array<i32>} : memref<128x10xf32, #tpu.memory_space<vmem>>, vector<128x10xf32>,
    return
  }
  func.func @transform_0(%arg0: i32) -> (i32, i32, i32) {
    %c0_i32 = arith.constant 0 : i32
    %c0_i32_0 = arith.constant 0 : i32
    %c0_i32_1 = arith.constant 0 : i32
    return %c0_i32, %arg0, %c0_i32_0 : i32, i32, i32
  }
  func.func @transform_1(%arg0: i32) -> (i32, i32) {
    %c0_i32 = arith.constant 0 : i32
    %c0_i32_0 = arith.constant 0 : i32
    %c0_i32_1 = arith.constant 0 : i32
    return %c0_i32, %c0_i32_0 : i32, i32
  }
  func.func @transform_2(%arg0: i32) -> (i32, i32) {
    %c0_i32 = arith.constant 0 : i32
    %c0_i32_0 = arith.constant 0 : i32
    %c0_i32_1 = arith.constant 0 : i32
    return %c0_i32, %c0_i32_0 : i32, i32
  }
  func.func @transform_3(%arg0: i32) -> (i32, i32) {
    %c0_i32 = arith.constant 0 : i32
    %c0_i32_0 = arith.constant 0 : i32
    return %arg0, %c0_i32 : i32, i32
  }
}

module attributes {stable_mosaic.version = 11 : i64} {
  func.func @_mlp_kernel(%arg0: i32, %arg1: memref<8x640xf32, #tpu.memory_space<vmem>>, %arg2: memref<640x32xf32, #tpu.memory_space<vmem>>, %arg3: memref<1x32xf32, #tpu.memory_space<vmem>>, %arg4: memref<32x128xf32, #tpu.memory_space<vmem>>, %arg5: memref<8x128xf32, #tpu.memory_space<vmem>>) attributes {dimension_semantics = [#tpu.dimension_semantics<parallel>], iteration_bounds = array<i64: 1>, scalar_prefetch = 0 : i64, scratch_operands = 0 : i64, tpu.core_type = #tpu.core_type<tc>, window_params = [{transform_indices = @transform_0, window_bounds = array<i64: 8, 640>}, {pipeline_mode = #tpu.pipeline_mode<synchronous>, transform_indices = @transform_1, window_bounds = array<i64: 640, 32>}, {pipeline_mode = #tpu.pipeline_mode<synchronous>, transform_indices = @transform_2, window_bounds = array<i64: 1, 32>}, {pipeline_mode = #tpu.pipeline_mode<synchronous>, transform_indices = @transform_3, window_bounds = array<i64: 32, 128>}, {transform_indices = @transform_4, window_bounds = array<i64: 8, 128>}]} {
    %c0 = arith.constant 0 : index
    %c0_0 = arith.constant 0 : index
    %0 = vector.load %arg1[%c0, %c0_0] : memref<8x640xf32, #tpu.memory_space<vmem>>, vector<8x640xf32>
    %c0_1 = arith.constant 0 : index
    %c0_2 = arith.constant 0 : index
    %1 = vector.load %arg2[%c0_1, %c0_2] : memref<640x32xf32, #tpu.memory_space<vmem>>, vector<640x32xf32>
    %cst = arith.constant dense<0.000000e+00> : vector<8x32xf32>
    %2 = tpu.matmul %0, %1, %cst {dimension_numbers = #tpu.dot_dimension_numbers<[1], [0], [0], [1], [0, 0, 1, 1], [], []>} : vector<8x640xf32>, vector<640x32xf32>, vector<8x32xf32> -> vector<8x32xf32>
    %c0_3 = arith.constant 0 : index
    %c0_4 = arith.constant 0 : index
    %3 = vector.load %arg3[%c0_3, %c0_4] : memref<1x32xf32, #tpu.memory_space<vmem>>, vector<1x32xf32>
    %4 = vector.broadcast %3 : vector<1x32xf32> to vector<8x32xf32>
    %5 = arith.addf %2, %4 : vector<8x32xf32>
    %cst_5 = arith.constant 0.000000e+00 : f32
    %6 = vector.broadcast %cst_5 : f32 to vector<8x32xf32>
    %7 = arith.maximumf %5, %6 : vector<8x32xf32>
    %c0_6 = arith.constant 0 : index
    %c0_7 = arith.constant 0 : index
    %8 = vector.load %arg4[%c0_6, %c0_7] : memref<32x128xf32, #tpu.memory_space<vmem>>, vector<32x128xf32>
    %cst_8 = arith.constant dense<0.000000e+00> : vector<8x128xf32>
    %9 = tpu.matmul %7, %8, %cst_8 {dimension_numbers = #tpu.dot_dimension_numbers<[1], [0], [0], [1], [0, 0, 1, 1], [], []>} : vector<8x32xf32>, vector<32x128xf32>, vector<8x128xf32> -> vector<8x128xf32>
    %c0_9 = arith.constant 0 : index
    %c0_10 = arith.constant 0 : index
    %10 = vector.load %arg5[%c0_9, %c0_10] : memref<8x128xf32, #tpu.memory_space<vmem>>, vector<8x128xf32>
    tpu.vector_store %arg5[%c0_9, %c0_10], %9 {strides = array<i32>} : memref<8x128xf32, #tpu.memory_space<vmem>>, vector<8x128xf32>,
    return
  }
  func.func @transform_0(%arg0: i32) -> (i32, i32) {
    %c0_i32 = arith.constant 0 : i32
    %c0_i32_0 = arith.constant 0 : i32
    return %arg0, %c0_i32 : i32, i32
  }
  func.func @transform_1(%arg0: i32) -> (i32, i32) {
    %c0_i32 = arith.constant 0 : i32
    %c0_i32_0 = arith.constant 0 : i32
    %c0_i32_1 = arith.constant 0 : i32
    return %c0_i32, %c0_i32_0 : i32, i32
  }
  func.func @transform_2(%arg0: i32) -> (i32, i32) {
    %c0_i32 = arith.constant 0 : i32
    %c0_i32_0 = arith.constant 0 : i32
    %c0_i32_1 = arith.constant 0 : i32
    return %c0_i32, %c0_i32_0 : i32, i32
  }
  func.func @transform_3(%arg0: i32) -> (i32, i32) {
    %c0_i32 = arith.constant 0 : i32
    %c0_i32_0 = arith.constant 0 : i32
    %c0_i32_1 = arith.constant 0 : i32
    return %c0_i32, %c0_i32_0 : i32, i32
  }
  func.func @transform_4(%arg0: i32) -> (i32, i32) {
    %c0_i32 = arith.constant 0 : i32
    %c0_i32_0 = arith.constant 0 : i32
    return %arg0, %c0_i32 : i32, i32
  }
}

</mosaic_0001>

<llo_original>
// kernel: model_cnn_classifier_forward.2
$region0: #{model_cnn_classifier_forward.2}
  #allocation0 [shape = 'u32[]', space=smem, size = 0x4, offset = 0x4, fixed_abs, tag = 'smem constant byte address 0x4 - core index']
  #allocation1 [shape = 'u32[144,128]{1,0:T(1,128)}', space=vmem, size = 0x12000, scoped, tag = 'internal scratch']
  %s0 = inlined_call_operand.vmem [shape: bf16[16,512,27], index: 0, kind: input, shape index: {}]
  %s1 = inlined_call_operand.vmem [shape: bf16[27,10], index: 1, kind: input, shape index: {}]
  %s2 = inlined_call_operand.vmem [shape: f32[1,10], index: 2, kind: input, shape index: {}]
  %s3 = inlined_call_operand.vmem [shape: f32[512,10], index: 3, kind: output, shape index: {}]
  %s4 = sld [smem:[#allocation0]]
  $region86: #{model_cnn_classifier_forward.2} parent=0
    _
  %s6 = ssub.s32 1, %s4
  %s7 = scalar_select 0, %s6, %s4
  $region1: #{model_cnn_classifier_forward.2} parent=0
    #allocation2 [shape = 'u8[1048576]{0}', space=vmem, size = 0x100000, scoped, tag = 'input window, operand 0']
    loop: start=0, step=1, limit=6
    $region2: #{model_cnn_classifier_forward.2} parent=1 // loop_pre_header
      _
    $region3: #{model_cnn_classifier_forward.2} parent=1 // loop_header
      %s9 = sphi 0, %s13
      %p10 = scmp.ge.s32.totalorder %s9, 6
      %s19 = sphi 0, %s21
      %s22 = sphi 0, %s19
      %s23 = sphi 0, %s22
      %s39 = sphi 0, %s23
      %s43 = sphi 0, %s43
      %s45 = sphi 0, %s43
      %s46 = sphi 0, %s45
      %s60 = sphi 0, %s46
      %s64 = sphi 0, %s64
      %s66 = sphi 0, %s64
      %s67 = sphi 0, %s66
      %s81 = sphi 0, %s67
      %s87 = sphi 0, %s89
      %s90 = sphi 0, %s87
      %s91 = sphi 0, %s90
      %s107 = sphi 0, %s91
    $region4: #{model_cnn_classifier_forward.2} parent=1 // loop_header_branch
      %12 = sbr.rel (%p10) target = $region8
    $region5: #{model_cnn_classifier_forward.2} parent=1 // loop_body
      %s14 = ssub.s32 %s9, 1
      %s15 = ssub.s32 %s9, 2
      %s16 = sadd.s32 %s9, 1
      %s17 = ssub.s32 %s9, %s16
      %p18 = scmp.eq.s32.totalorder %s17, 0
      %s20 = sadd.s32 %s19, 1
      %s21 = scalar_select %p18, %s19, %s20
      %p24 = pneg %p18
      %p25 = scmp.eq.s32.totalorder %s9, 3
      %p26 = por %p24, %p25
      %p27 = scmp.ne.s32.totalorder %s19, %s22
      %p28 = scmp.eq.s32.totalorder %s9, 0
      %p29 = por %p27, %p28
      %p30 = scmp.ne.s32.totalorder %s19, %s22
      %p31 = scmp.eq.s32.totalorder %s14, 3
      %p32 = por %p30, %p31
      %p33 = scmp.ne.s32.totalorder %s22, %s23
      %p34 = scmp.eq.s32.totalorder %s14, 0
      %p35 = por %p33, %p34
      %p36 = scmp.ne.s32.totalorder %s22, %s23
      %p37 = scmp.eq.s32.totalorder %s15, 3
      %p38 = por %p36, %p37
      %p40 = scmp.ne.s32.totalorder %s23, %s39
      %p41 = scmp.eq.s32.totalorder %s15, 0
      %p42 = por %p40, %p41
      %s44 = sadd.s32 %s43, 1
      %p47 = scmp.eq.s32.totalorder %s9, 3
      %p48 = scmp.ne.s32.totalorder %s43, %s45
      %p49 = scmp.eq.s32.totalorder %s9, 0
      %p50 = por %p48, %p49
      %p51 = scmp.ne.s32.totalorder %s43, %s45
      %p52 = scmp.eq.s32.totalorder %s14, 3
      %p53 = por %p51, %p52
      %p54 = scmp.ne.s32.totalorder %s45, %s46
      %p55 = scmp.eq.s32.totalorder %s14, 0
      %p56 = por %p54, %p55
      %p57 = scmp.ne.s32.totalorder %s45, %s46
      %p58 = scmp.eq.s32.totalorder %s15, 3
      %p59 = por %p57, %p58
      %p61 = scmp.ne.s32.totalorder %s46, %s60
      %p62 = scmp.eq.s32.totalorder %s15, 0
      %p63 = por %p61, %p62
      %s65 = sadd.s32 %s64, 1
      %p68 = scmp.eq.s32.totalorder %s9, 3
      %p69 = scmp.ne.s32.totalorder %s64, %s66
      %p70 = scmp.eq.s32.totalorder %s9, 0
      %p71 = por %p69, %p70
      %p72 = scmp.ne.s32.totalorder %s64, %s66
      %p73 = scmp.eq.s32.totalorder %s14, 3
      %p74 = por %p72, %p73
      %p75 = scmp.ne.s32.totalorder %s66, %s67
      %p76 = scmp.eq.s32.totalorder %s14, 0
      %p77 = por %p75, %p76
      %p78 = scmp.ne.s32.totalorder %s66, %s67
      %p79 = scmp.eq.s32.totalorder %s15, 3
      %p80 = por %p78, %p79
      %p82 = scmp.ne.s32.totalorder %s67, %s81
      %p83 = scmp.eq.s32.totalorder %s15, 0
      %p84 = por %p82, %p83
      %s85 = ssub.s32 %s9, %s16
      %p86 = scmp.eq.s32.totalorder %s85, 0
      %s88 = sadd.s32 %s87, 1
      %s89 = scalar_select %p86, %s87, %s88
      %p92 = pneg %p86
      %p93 = scmp.eq.s32.totalorder %s9, 3
      %p94 = por %p92, %p93
      %p95 = scmp.ne.s32.totalorder %s87, %s90
      %p96 = scmp.eq.s32.totalorder %s9, 0
      %p97 = por %p95, %p96
      %p98 = scmp.ne.s32.totalorder %s87, %s90
      %p99 = scmp.eq.s32.totalorder %s14, 3
      %p100 = por %p98, %p99
      %p101 = scmp.ne.s32.totalorder %s90, %s91
      %p102 = scmp.eq.s32.totalorder %s14, 0
      %p103 = por %p101, %p102
      %p104 = scmp.ne.s32.totalorder %s90, %s91
      %p105 = scmp.eq.s32.totalorder %s15, 3
      %p106 = por %p104, %p105
      %p108 = scmp.ne.s32.totalorder %s91, %s107
      %p109 = scmp.eq.s32.totalorder %s15, 0
      %p110 = por %p108, %p109
      %p111 = scmp.le.s32.totalorder 1, %s9
      %p112 = scmp.lt.s32.totalorder %s9, 5
      %p113 = pnand %p111, %p112
      %p114 = pneg %p113
      // Predicated region
      $region9: #{model_cnn_classifier_forward.2} parent=5 // pred_check
        _
      $region10: #{model_cnn_classifier_forward.2} parent=5 // pred_check_branch
        %116 = sbr.rel (%p113) target = $region12
      $region11: #{model_cnn_classifier_forward.2} parent=5 // pred_region
        %s117 = ssub.s32 %s9, 1
        // Predicated region
        $region13: #{model_cnn_classifier_forward.2} parent=11 // pred_check
          %p118 = pneg %p56
        $region14: #{model_cnn_classifier_forward.2} parent=11 // pred_check_branch
          %120 = sbr.rel (%p118) target = $region16
        $region15: #{model_cnn_classifier_forward.2} parent=11 // pred_region
          _
        $region16: #{model_cnn_classifier_forward.2} parent=11 // pred_fallthru
          _
        // Predicated region
        $region17: #{model_cnn_classifier_forward.2} parent=11 // pred_check
          %p121 = pneg %p77
        $region18: #{model_cnn_classifier_forward.2} parent=11 // pred_check_branch
          %123 = sbr.rel (%p121) target = $region20
        $region19: #{model_cnn_classifier_forward.2} parent=11 // pred_region
          _
        $region20: #{model_cnn_classifier_forward.2} parent=11 // pred_fallthru
          _
      $region12: #{model_cnn_classifier_forward.2} parent=5 // pred_fallthru
        _
      %p124 = scmp.lt.s32.totalorder %s9, 4
      // Predicated region
      $region21: #{model_cnn_classifier_forward.2} parent=5 // pred_check
        %p125 = pneg %p124
      $region22: #{model_cnn_classifier_forward.2} parent=5 // pred_check_branch
        %127 = sbr.rel (%p125) target = $region24
      $region23: #{model_cnn_classifier_forward.2} parent=5 // pred_region
        // Predicated region
        $region25: #{model_cnn_classifier_forward.2} parent=23 // pred_check
          %p128 = pneg %p29
        $region26: #{model_cnn_classifier_forward.2} parent=23 // pred_check_branch
          %130 = sbr.rel (%p128) target = $region28
        $region27: #{model_cnn_classifier_forward.2} parent=23 // pred_region
          %s131 = sand.u32 %s19, 1
          %s132 = sand.u32 %s19, 1
          %s133 = smul.addr %s132, 1024
          %s134 = scalar_lea.vmem [#allocation2], %s133
          %s135 = smul.u32 16, %s9
          %s136 = smul.addr %s135, 4
          %s137 = scalar_lea.vmem %s0, %s136
          // Predicated region
          $region29: #{model_cnn_classifier_forward.2} parent=27 // pred_check
            _
          $region30: #{model_cnn_classifier_forward.2} parent=27 // pred_check_branch
            %139 = sbr.rel (0) target = $region32
          $region31: #{model_cnn_classifier_forward.2} parent=27 // pred_region
            // Predicated region
            $region33: #{model_cnn_classifier_forward.2} parent=31 // pred_check
              _
            $region34: #{model_cnn_classifier_forward.2} parent=31 // pred_check_branch
              %141 = sbr.rel target = $region36
            $region35: #{model_cnn_classifier_forward.2} parent=31 // pred_region
              // Predicated region
              $region48: #{model_cnn_classifier_forward.2} parent=35 // pred_check
                _
              $region49: #{model_cnn_classifier_forward.2} parent=35 // pred_check_branch
                %666 = sbr.rel (0) target = $region51
              $region50: #{model_cnn_classifier_forward.2} parent=35 // pred_region
                loop: start=0, step=1, limit=1
                $region52: #{model_cnn_classifier_forward.2} parent=50 // loop_pre_header
                  _
                $region53: #{model_cnn_classifier_forward.2} parent=50 // loop_header
                  %s668 = sphi 0, %s672
                  %p669 = scmp.ge.s32.totalorder %s668, 1
                  %s673 = sphi %s137, %s137
                  %s674 = sphi %s134, %s134
                $region54: #{model_cnn_classifier_forward.2} parent=50 // loop_header_branch
                  %671 = sbr.rel (%p669) target = $region58
                $region55: #{model_cnn_classifier_forward.2} parent=50 // loop_body
                  _
                $region56: #{model_cnn_classifier_forward.2} parent=50 // loop_footer
                  %s672 = sadd.s32 1, %s668
                $region57: #{model_cnn_classifier_forward.2} parent=50 // loop_footer_branch
                  %667 = sbr.rel target = $region53
                $region58: #{model_cnn_classifier_forward.2} parent=50 // loop_exit
                  _
                loop: start=0, step=1, limit=1
                $region59: #{model_cnn_classifier_forward.2} parent=50 // loop_pre_header
                  _
                $region60: #{model_cnn_classifier_forward.2} parent=50 // loop_header
                  %s677 = sphi 0, %s681
                  %p678 = scmp.ge.s32.totalorder %s677, 1
                  %s682 = sphi %s137, %s137
                  %s683 = sphi %s134, %s134
                $region61: #{model_cnn_classifier_forward.2} parent=50 // loop_header_branch
                  %680 = sbr.rel (%p678) target = $region65
                $region62: #{model_cnn_classifier_forward.2} parent=50 // loop_body
                  %v684 = vld [vmem:[%s682] sm:$0xf]
                  %685 = vst [vmem:[%s683] sm:$0xf] %v684
                  %v686 = vld [vmem:[%s682 + $0x4] sm:$0xf]
                  %687 = vst [vmem:[%s683 + $0x4] sm:$0xf] %v686
                  %v688 = vld [vmem:[%s682 + $0x8] sm:$0xf]
                  %689 = vst [vmem:[%s683 + $0x8] sm:$0xf] %v688
                  %v690 = vld [vmem:[%s682 + $0xc] sm:$0xf]
                  %691 = vst [vmem:[%s683 + $0xc] sm:$0xf] %v690
                  %v692 = vld [vmem:[%s682 + $0x10] sm:$0xf]
                  %693 = vst [vmem:[%s683 + $0x10] sm:$0xf] %v692
                  %v694 = vld [vmem:[%s682 + $0x14] sm:$0xf]
                  %695 = vst [vmem:[%s683 + $0x14] sm:$0xf] %v694
                  %v696 = vld [vmem:[%s682 + $0x18] sm:$0xf]
                  %697 = vst [vmem:[%s683 + $0x18] sm:$0xf] %v696
                  %v698 = vld [vmem:[%s682 + $0x1c] sm:$0xf]
                  %699 = vst [vmem:[%s683 + $0x1c] sm:$0xf] %v698
                  %v700 = vld [vmem:[%s682 + $0x20] sm:$0xf]
                  %701 = vst [vmem:[%s683 + $0x20] sm:$0xf] %v700
                  %v702 = vld [vmem:[%s682 + $0x24] sm:$0xf]
                  %703 = vst [vmem:[%s683 + $0x24] sm:$0xf] %v702
                  %v704 = vld [vmem:[%s682 + $0x28] sm:$0xf]
                  %705 = vst [vmem:[%s683 + $0x28] sm:$0xf] %v704
                  %v706 = vld [vmem:[%s682 + $0x2c] sm:$0xf]
                  %707 = vst [vmem:[%s683 + $0x2c] sm:$0xf] %v706
                  %v708 = vld [vmem:[%s682 + $0x30] sm:$0xf]
                  %709 = vst [vmem:[%s683 + $0x30] sm:$0xf] %v708
                  %v710 = vld [vmem:[%s682 + $0x34] sm:$0xf]
                  %711 = vst [vmem:[%s683 + $0x34] sm:$0xf] %v710
                  %v712 = vld [vmem:[%s682 + $0x38] sm:$0xf]
                  %713 = vst [vmem:[%s683 + $0x38] sm:$0xf] %v712
                  %v714 = vld [vmem:[%s682 + $0x3c] sm:$0xf]
                  %715 = vst [vmem:[%s683 + $0x3c] sm:$0xf] %v714
                  %v716 = vld [vmem:[%s682 + $0x100] sm:$0xf]
                  %717 = vst [vmem:[%s683 + $0x40] sm:$0xf] %v716
                  %v718 = vld [vmem:[%s682 + $0x104] sm:$0xf]
                  %719 = vst [vmem:[%s683 + $0x44] sm:$0xf] %v718
                  %v720 = vld [vmem:[%s682 + $0x108] sm:$0xf]
                  %721 = vst [vmem:[%s683 + $0x48] sm:$0xf] %v720
                  %v722 = vld [vmem:[%s682 + $0x10c] sm:$0xf]
                  %723 = vst [vmem:[%s683 + $0x4c] sm:$0xf] %v722
                  %v724 = vld [vmem:[%s682 + $0x110] sm:$0xf]
                  %725 = vst [vmem:[%s683 + $0x50] sm:$0xf] %v724
                  %v726 = vld [vmem:[%s682 + $0x114] sm:$0xf]
                  %727 = vst [vmem:[%s683 + $0x54] sm:$0xf] %v726
                  %v728 = vld [vmem:[%s682 + $0x118] sm:$0xf]
                  %729 = vst [vmem:[%s683 + $0x58] sm:$0xf] %v728
                  %v730 = vld [vmem:[%s682 + $0x11c] sm:$0xf]
                  %731 = vst [vmem:[%s683 + $0x5c] sm:$0xf] %v730
                  %v732 = vld [vmem:[%s682 + $0x120] sm:$0xf]
                  %733 = vst [vmem:[%s683 + $0x60] sm:$0xf] %v732
                  %v734 = vld [vmem:[%s682 + $0x124] sm:$0xf]
                  %735 = vst [vmem:[%s683 + $0x64] sm:$0xf] %v734
                  %v736 = vld [vmem:[%s682 + $0x128] sm:$0xf]
                  %737 = vst [vmem:[%s683 + $0x68] sm:$0xf] %v736
                  %v738 = vld [vmem:[%s682 + $0x12c] sm:$0xf]
                  %739 = vst [vmem:[%s683 + $0x6c] sm:$0xf] %v738
                  %v740 = vld [vmem:[%s682 + $0x130] sm:$0xf]
                  %741 = vst [vmem:[%s683 + $0x70] sm:$0xf] %v740
                  %v742 = vld [vmem:[%s682 + $0x134] sm:$0xf]
                  %743 = vst [vmem:[%s683 + $0x74] sm:$0xf] %v742
                  %v744 = vld [vmem:[%s682 + $0x138] sm:$0xf]
                  %745 = vst [vmem:[%s683 + $0x78] sm:$0xf] %v744
                  %v746 = vld [vmem:[%s682 + $0x13c] sm:$0xf]
                  %747 = vst [vmem:[%s683 + $0x7c] sm:$0xf] %v746
                  %v748 = vld [vmem:[%s682 + $0x200] sm:$0xf]
                  %749 = vst [vmem:[%s683 + $0x80] sm:$0xf] %v748
                  %v750 = vld [vmem:[%s682 + $0x204] sm:$0xf]
                  %751 = vst [vmem:[%s683 + $0x84] sm:$0xf] %v750
                  %v752 = vld [vmem:[%s682 + $0x208] sm:$0xf]
                  %753 = vst [vmem:[%s683 + $0x88] sm:$0xf] %v752
                  %v754 = vld [vmem:[%s682 + $0x20c] sm:$0xf]
                  %755 = vst [vmem:[%s683 + $0x8c] sm:$0xf] %v754
                  %v756 = vld [vmem:[%s682 + $0x210] sm:$0xf]
                  %757 = vst [vmem:[%s683 + $0x90] sm:$0xf] %v756
                  %v758 = vld [vmem:[%s682 + $0x214] sm:$0xf]
                  %759 = vst [vmem:[%s683 + $0x94] sm:$0xf] %v758
                  %v760 = vld [vmem:[%s682 + $0x218] sm:$0xf]
                  %761 = vst [vmem:[%s683 + $0x98] sm:$0xf] %v760
                  %v762 = vld [vmem:[%s682 + $0x21c] sm:$0xf]
                  %763 = vst [vmem:[%s683 + $0x9c] sm:$0xf] %v762
                  %v764 = vld [vmem:[%s682 + $0x220] sm:$0xf]
                  %765 = vst [vmem:[%s683 + $0xa0] sm:$0xf] %v764
                  %v766 = vld [vmem:[%s682 + $0x224] sm:$0xf]
                  %767 = vst [vmem:[%s683 + $0xa4] sm:$0xf] %v766
                  %v768 = vld [vmem:[%s682 + $0x228] sm:$0xf]
                  %769 = vst [vmem:[%s683 + $0xa8] sm:$0xf] %v768
                  %v770 = vld [vmem:[%s682 + $0x22c] sm:$0xf]
                  %771 = vst [vmem:[%s683 + $0xac] sm:$0xf] %v770
                  %v772 = vld [vmem:[%s682 + $0x230] sm:$0xf]
                  %773 = vst [vmem:[%s683 + $0xb0] sm:$0xf] %v772
                  %v774 = vld [vmem:[%s682 + $0x234] sm:$0xf]
                  %775 = vst [vmem:[%s683 + $0xb4] sm:$0xf] %v774
                  %v776 = vld [vmem:[%s682 + $0x238] sm:$0xf]
                  %777 = vst [vmem:[%s683 + $0xb8] sm:$0xf] %v776
                  %v778 = vld [vmem:[%s682 + $0x23c] sm:$0xf]
                  %779 = vst [vmem:[%s683 + $0xbc] sm:$0xf] %v778
                  %v780 = vld [vmem:[%s682 + $0x300] sm:$0xf]
                  %781 = vst [vmem:[%s683 + $0xc0] sm:$0xf] %v780
                  %v782 = vld [vmem:[%s682 + $0x304] sm:$0xf]
                  %783 = vst [vmem:[%s683 + $0xc4] sm:$0xf] %v782
                  %v784 = vld [vmem:[%s682 + $0x308] sm:$0xf]
                  %785 = vst [vmem:[%s683 + $0xc8] sm:$0xf] %v784
                  %v786 = vld [vmem:[%s682 + $0x30c] sm:$0xf]
                  %787 = vst [vmem:[%s683 + $0xcc] sm:$0xf] %v786
                  %v788 = vld [vmem:[%s682 + $0x310] sm:$0xf]
                  %789 = vst [vmem:[%s683 + $0xd0] sm:$0xf] %v788
                  %v790 = vld [vmem:[%s682 + $0x314] sm:$0xf]
                  %791 = vst [vmem:[%s683 + $0xd4] sm:$0xf] %v790
                  %v792 = vld [vmem:[%s682 + $0x318] sm:$0xf]
                  %793 = vst [vmem:[%s683 + $0xd8] sm:$0xf] %v792
                  %v794 = vld [vmem:[%s682 + $0x31c] sm:$0xf]
                  %795 = vst [vmem:[%s683 + $0xdc] sm:$0xf] %v794
                  %v796 = vld [vmem:[%s682 + $0x320] sm:$0xf]
                  %797 = vst [vmem:[%s683 + $0xe0] sm:$0xf] %v796
                  %v798 = vld [vmem:[%s682 + $0x324] sm:$0xf]
                  %799 = vst [vmem:[%s683 + $0xe4] sm:$0xf] %v798
                  %v800 = vld [vmem:[%s682 + $0x328] sm:$0xf]
                  %801 = vst [vmem:[%s683 + $0xe8] sm:$0xf] %v800
                  %v802 = vld [vmem:[%s682 + $0x32c] sm:$0xf]
                  %803 = vst [vmem:[%s683 + $0xec] sm:$0xf] %v802
                  %v804 = vld [vmem:[%s682 + $0x330] sm:$0xf]
                  %805 = vst [vmem:[%s683 + $0xf0] sm:$0xf] %v804
                  %v806 = vld [vmem:[%s682 + $0x334] sm:$0xf]
                  %807 = vst [vmem:[%s683 + $0xf4] sm:$0xf] %v806
                  %v808 = vld [vmem:[%s682 + $0x338] sm:$0xf]
                  %809 = vst [vmem:[%s683 + $0xf8] sm:$0xf] %v808
                  %v810 = vld [vmem:[%s682 + $0x33c] sm:$0xf]
                  %811 = vst [vmem:[%s683 + $0xfc] sm:$0xf] %v810
                  %v812 = vld [vmem:[%s682 + $0x400] sm:$0xf]
                  %813 = vst [vmem:[%s683 + $0x100] sm:$0xf] %v812
                  %v814 = vld [vmem:[%s682 + $0x404] sm:$0xf]
                  %815 = vst [vmem:[%s683 + $0x104] sm:$0xf] %v814
                  %v816 = vld [vmem:[%s682 + $0x408] sm:$0xf]
                  %817 = vst [vmem:[%s683 + $0x108] sm:$0xf] %v816
                  %v818 = vld [vmem:[%s682 + $0x40c] sm:$0xf]
                  %819 = vst [vmem:[%s683 + $0x10c] sm:$0xf] %v818
                  %v820 = vld [vmem:[%s682 + $0x410] sm:$0xf]
                  %821 = vst [vmem:[%s683 + $0x110] sm:$0xf] %v820
                  %v822 = vld [vmem:[%s682 + $0x414] sm:$0xf]
                  %823 = vst [vmem:[%s683 + $0x114] sm:$0xf] %v822
                  %v824 = vld [vmem:[%s682 + $0x418] sm:$0xf]
                  %825 = vst [vmem:[%s683 + $0x118] sm:$0xf] %v824
                  %v826 = vld [vmem:[%s682 + $0x41c] sm:$0xf]
                  %827 = vst [vmem:[%s683 + $0x11c] sm:$0xf] %v826
                  %v828 = vld [vmem:[%s682 + $0x420] sm:$0xf]
                  %829 = vst [vmem:[%s683 + $0x120] sm:$0xf] %v828
                  %v830 = vld [vmem:[%s682 + $0x424] sm:$0xf]
                  %831 = vst [vmem:[%s683 + $0x124] sm:$0xf] %v830
                  %v832 = vld [vmem:[%s682 + $0x428] sm:$0xf]
                  %833 = vst [vmem:[%s683 + $0x128] sm:$0xf] %v832
                  %v834 = vld [vmem:[%s682 + $0x42c] sm:$0xf]
                  %835 = vst [vmem:[%s683 + $0x12c] sm:$0xf] %v834
                  %v836 = vld [vmem:[%s682 + $0x430] sm:$0xf]
                  %837 = vst [vmem:[%s683 + $0x130] sm:$0xf] %v836
                  %v838 = vld [vmem:[%s682 + $0x434] sm:$0xf]
                  %839 = vst [vmem:[%s683 + $0x134] sm:$0xf] %v838
                  %v840 = vld [vmem:[%s682 + $0x438] sm:$0xf]
                  %841 = vst [vmem:[%s683 + $0x138] sm:$0xf] %v840
                  %v842 = vld [vmem:[%s682 + $0x43c] sm:$0xf]
                  %843 = vst [vmem:[%s683 + $0x13c] sm:$0xf] %v842
                  %v844 = vld [vmem:[%s682 + $0x500] sm:$0xf]
                  %845 = vst [vmem:[%s683 + $0x140] sm:$0xf] %v844
                  %v846 = vld [vmem:[%s682 + $0x504] sm:$0xf]
                  %847 = vst [vmem:[%s683 + $0x144] sm:$0xf] %v846
                  %v848 = vld [vmem:[%s682 + $0x508] sm:$0xf]
                  %849 = vst [vmem:[%s683 + $0x148] sm:$0xf] %v848
                  %v850 = vld [vmem:[%s682 + $0x50c] sm:$0xf]
                  %851 = vst [vmem:[%s683 + $0x14c] sm:$0xf] %v850
                  %v852 = vld [vmem:[%s682 + $0x510] sm:$0xf]
                  %853 = vst [vmem:[%s683 + $0x150] sm:$0xf] %v852
                  %v854 = vld [vmem:[%s682 + $0x514] sm:$0xf]
                  %855 = vst [vmem:[%s683 + $0x154] sm:$0xf] %v854
                  %v856 = vld [vmem:[%s682 + $0x518] sm:$0xf]
                  %857 = vst [vmem:[%s683 + $0x158] sm:$0xf] %v856
                  %v858 = vld [vmem:[%s682 + $0x51c] sm:$0xf]
                  %859 = vst [vmem:[%s683 + $0x15c] sm:$0xf] %v858
                  %v860 = vld [vmem:[%s682 + $0x520] sm:$0xf]
                  %861 = vst [vmem:[%s683 + $0x160] sm:$0xf] %v860
                  %v862 = vld [vmem:[%s682 + $0x524] sm:$0xf]
                  %863 = vst [vmem:[%s683 + $0x164] sm:$0xf] %v862
                  %v864 = vld [vmem:[%s682 + $0x528] sm:$0xf]
                  %865 = vst [vmem:[%s683 + $0x168] sm:$0xf] %v864
                  %v866 = vld [vmem:[%s682 + $0x52c] sm:$0xf]
                  %867 = vst [vmem:[%s683 + $0x16c] sm:$0xf] %v866
                  %v868 = vld [vmem:[%s682 + $0x530] sm:$0xf]
                  %869 = vst [vmem:[%s683 + $0x170] sm:$0xf] %v868
                  %v870 = vld [vmem:[%s682 + $0x534] sm:$0xf]
                  %871 = vst [vmem:[%s683 + $0x174] sm:$0xf] %v870
                  %v872 = vld [vmem:[%s682 + $0x538] sm:$0xf]
                  %873 = vst [vmem:[%s683 + $0x178] sm:$0xf] %v872
                  %v874 = vld [vmem:[%s682 + $0x53c] sm:$0xf]
                  %875 = vst [vmem:[%s683 + $0x17c] sm:$0xf] %v874
                  %v876 = vld [vmem:[%s682 + $0x600] sm:$0xf]
                  %877 = vst [vmem:[%s683 + $0x180] sm:$0xf] %v876
                  %v878 = vld [vmem:[%s682 + $0x604] sm:$0xf]
                  %879 = vst [vmem:[%s683 + $0x184] sm:$0xf] %v878
                  %v880 = vld [vmem:[%s682 + $0x608] sm:$0xf]
                  %881 = vst [vmem:[%s683 + $0x188] sm:$0xf] %v880
                  %v882 = vld [vmem:[%s682 + $0x60c] sm:$0xf]
                  %883 = vst [vmem:[%s683 + $0x18c] sm:$0xf] %v882
                  %v884 = vld [vmem:[%s682 + $0x610] sm:$0xf]
                  %885 = vst [vmem:[%s683 + $0x190] sm:$0xf] %v884
                  %v886 = vld [vmem:[%s682 + $0x614] sm:$0xf]
                  %887 = vst [vmem:[%s683 + $0x194] sm:$0xf] %v886
                  %v888 = vld [vmem:[%s682 + $0x618] sm:$0xf]
                  %889 = vst [vmem:[%s683 + $0x198] sm:$0xf] %v888
                  %v890 = vld [vmem:[%s682 + $0x61c] sm:$0xf]
                  %891 = vst [vmem:[%s683 + $0x19c] sm:$0xf] %v890
                  %v892 = vld [vmem:[%s682 + $0x620] sm:$0xf]
                  %893 = vst [vmem:[%s683 + $0x1a0] sm:$0xf] %v892
                  %v894 = vld [vmem:[%s682 + $0x624] sm:$0xf]
                  %895 = vst [vmem:[%s683 + $0x1a4] sm:$0xf] %v894
                  %v896 = vld [vmem:[%s682 + $0x628] sm:$0xf]
                  %897 = vst [vmem:[%s683 + $0x1a8] sm:$0xf] %v896
                  %v898 = vld [vmem:[%s682 + $0x62c] sm:$0xf]
                  %899 = vst [vmem:[%s683 + $0x1ac] sm:$0xf] %v898
                  %v900 = vld [vmem:[%s682 + $0x630] sm:$0xf]
                  %901 = vst [vmem:[%s683 + $0x1b0] sm:$0xf] %v900
                  %v902 = vld [vmem:[%s682 + $0x634] sm:$0xf]
                  %903 = vst [vmem:[%s683 + $0x1b4] sm:$0xf] %v902
                  %v904 = vld [vmem:[%s682 + $0x638] sm:$0xf]
                  %905 = vst [vmem:[%s683 + $0x1b8] sm:$0xf] %v904
                  %v906 = vld [vmem:[%s682 + $0x63c] sm:$0xf]
                  %907 = vst [vmem:[%s683 + $0x1bc] sm:$0xf] %v906
                  %v908 = vld [vmem:[%s682 + $0x700] sm:$0xf]
                  %909 = vst [vmem:[%s683 + $0x1c0] sm:$0xf] %v908
                  %v910 = vld [vmem:[%s682 + $0x704] sm:$0xf]
                  %911 = vst [vmem:[%s683 + $0x1c4] sm:$0xf] %v910
                  %v912 = vld [vmem:[%s682 + $0x708] sm:$0xf]
                  %913 = vst [vmem:[%s683 + $0x1c8] sm:$0xf] %v912
                  %v914 = vld [vmem:[%s682 + $0x70c] sm:$0xf]
                  %915 = vst [vmem:[%s683 + $0x1cc] sm:$0xf] %v914
                  %v916 = vld [vmem:[%s682 + $0x710] sm:$0xf]
                  %917 = vst [vmem:[%s683 + $0x1d0] sm:$0xf] %v916
                  %v918 = vld [vmem:[%s682 + $0x714] sm:$0xf]
                  %919 = vst [vmem:[%s683 + $0x1d4] sm:$0xf] %v918
                  %v920 = vld [vmem:[%s682 + $0x718] sm:$0xf]
                  %921 = vst [vmem:[%s683 + $0x1d8] sm:$0xf] %v920
                  %v922 = vld [vmem:[%s682 + $0x71c] sm:$0xf]
                  %923 = vst [vmem:[%s683 + $0x1dc] sm:$0xf] %v922
                  %v924 = vld [vmem:[%s682 + $0x720] sm:$0xf]
                  %925 = vst [vmem:[%s683 + $0x1e0] sm:$0xf] %v924
                  %v926 = vld [vmem:[%s682 + $0x724] sm:$0xf]
                  %927 = vst [vmem:[%s683 + $0x1e4] sm:$0xf] %v926
                  %v928 = vld [vmem:[%s682 + $0x728] sm:$0xf]
                  %929 = vst [vmem:[%s683 + $0x1e8] sm:$0xf] %v928
                  %v930 = vld [vmem:[%s682 + $0x72c] sm:$0xf]
                  %931 = vst [vmem:[%s683 + $0x1ec] sm:$0xf] %v930
                  %v932 = vld [vmem:[%s682 + $0x730] sm:$0xf]
                  %933 = vst [vmem:[%s683 + $0x1f0] sm:$0xf] %v932
                  %v934 = vld [vmem:[%s682 + $0x734] sm:$0xf]
                  %935 = vst [vmem:[%s683 + $0x1f4] sm:$0xf] %v934
                  %v936 = vld [vmem:[%s682 + $0x738] sm:$0xf]
                  %937 = vst [vmem:[%s683 + $0x1f8] sm:$0xf] %v936
                  %v938 = vld [vmem:[%s682 + $0x73c] sm:$0xf]
                  %939 = vst [vmem:[%s683 + $0x1fc] sm:$0xf] %v938
                  %v940 = vld [vmem:[%s682 + $0x800] sm:$0xf]
                  %941 = vst [vmem:[%s683 + $0x200] sm:$0xf] %v940
                  %v942 = vld [vmem:[%s682 + $0x804] sm:$0xf]
                  %943 = vst [vmem:[%s683 + $0x204] sm:$0xf] %v942
                  %v944 = vld [vmem:[%s682 + $0x808] sm:$0xf]
                  %945 = vst [vmem:[%s683 + $0x208] sm:$0xf] %v944
                  %v946 = vld [vmem:[%s682 + $0x80c] sm:$0xf]
                  %947 = vst [vmem:[%s683 + $0x20c] sm:$0xf] %v946
                  %v948 = vld [vmem:[%s682 + $0x810] sm:$0xf]
                  %949 = vst [vmem:[%s683 + $0x210] sm:$0xf] %v948
                  %v950 = vld [vmem:[%s682 + $0x814] sm:$0xf]
                  %951 = vst [vmem:[%s683 + $0x214] sm:$0xf] %v950
                  %v952 = vld [vmem:[%s682 + $0x818] sm:$0xf]
                  %953 = vst [vmem:[%s683 + $0x218] sm:$0xf] %v952
                  %v954 = vld [vmem:[%s682 + $0x81c] sm:$0xf]
                  %955 = vst [vmem:[%s683 + $0x21c] sm:$0xf] %v954
                  %v956 = vld [vmem:[%s682 + $0x820] sm:$0xf]
                  %957 = vst [vmem:[%s683 + $0x220] sm:$0xf] %v956
                  %v958 = vld [vmem:[%s682 + $0x824] sm:$0xf]
                  %959 = vst [vmem:[%s683 + $0x224] sm:$0xf] %v958
                  %v960 = vld [vmem:[%s682 + $0x828] sm:$0xf]
                  %961 = vst [vmem:[%s683 + $0x228] sm:$0xf] %v960
                  %v962 = vld [vmem:[%s682 + $0x82c] sm:$0xf]
                  %963 = vst [vmem:[%s683 + $0x22c] sm:$0xf] %v962
                  %v964 = vld [vmem:[%s682 + $0x830] sm:$0xf]
                  %965 = vst [vmem:[%s683 + $0x230] sm:$0xf] %v964
                  %v966 = vld [vmem:[%s682 + $0x834] sm:$0xf]
                  %967 = vst [vmem:[%s683 + $0x234] sm:$0xf] %v966
                  %v968 = vld [vmem:[%s682 + $0x838] sm:$0xf]
                  %969 = vst [vmem:[%s683 + $0x238] sm:$0xf] %v968
                  %v970 = vld [vmem:[%s682 + $0x83c] sm:$0xf]
                  %971 = vst [vmem:[%s683 + $0x23c] sm:$0xf] %v970
                  %v972 = vld [vmem:[%s682 + $0x900] sm:$0xf]
                  %973 = vst [vmem:[%s683 + $0x240] sm:$0xf] %v972
                  %v974 = vld [vmem:[%s682 + $0x904] sm:$0xf]
                  %975 = vst [vmem:[%s683 + $0x244] sm:$0xf] %v974
                  %v976 = vld [vmem:[%s682 + $0x908] sm:$0xf]
                  %977 = vst [vmem:[%s683 + $0x248] sm:$0xf] %v976
                  %v978 = vld [vmem:[%s682 + $0x90c] sm:$0xf]
                  %979 = vst [vmem:[%s683 + $0x24c] sm:$0xf] %v978
                  %v980 = vld [vmem:[%s682 + $0x910] sm:$0xf]
                  %981 = vst [vmem:[%s683 + $0x250] sm:$0xf] %v980
                  %v982 = vld [vmem:[%s682 + $0x914] sm:$0xf]
                  %983 = vst [vmem:[%s683 + $0x254] sm:$0xf] %v982
                  %v984 = vld [vmem:[%s682 + $0x918] sm:$0xf]
                  %985 = vst [vmem:[%s683 + $0x258] sm:$0xf] %v984
                  %v986 = vld [vmem:[%s682 + $0x91c] sm:$0xf]
                  %987 = vst [vmem:[%s683 + $0x25c] sm:$0xf] %v986
                  %v988 = vld [vmem:[%s682 + $0x920] sm:$0xf]
                  %989 = vst [vmem:[%s683 + $0x260] sm:$0xf] %v988
                  %v990 = vld [vmem:[%s682 + $0x924] sm:$0xf]
                  %991 = vst [vmem:[%s683 + $0x264] sm:$0xf] %v990
                  %v992 = vld [vmem:[%s682 + $0x928] sm:$0xf]
                  %993 = vst [vmem:[%s683 + $0x268] sm:$0xf] %v992
                  %v994 = vld [vmem:[%s682 + $0x92c] sm:$0xf]
                  %995 = vst [vmem:[%s683 + $0x26c] sm:$0xf] %v994
                  %v996 = vld [vmem:[%s682 + $0x930] sm:$0xf]
                  %997 = vst [vmem:[%s683 + $0x270] sm:$0xf] %v996
                  %v998 = vld [vmem:[%s682 + $0x934] sm:$0xf]
                  %999 = vst [vmem:[%s683 + $0x274] sm:$0xf] %v998
                  %v1000 = vld [vmem:[%s682 + $0x938] sm:$0xf]
                  %1001 = vst [vmem:[%s683 + $0x278] sm:$0xf] %v1000
                  %v1002 = vld [vmem:[%s682 + $0x93c] sm:$0xf]
                  %1003 = vst [vmem:[%s683 + $0x27c] sm:$0xf] %v1002
                  %v1004 = vld [vmem:[%s682 + $0xa00] sm:$0xf]
                  %1005 = vst [vmem:[%s683 + $0x280] sm:$0xf] %v1004
                  %v1006 = vld [vmem:[%s682 + $0xa04] sm:$0xf]
                  %1007 = vst [vmem:[%s683 + $0x284] sm:$0xf] %v1006
                  %v1008 = vld [vmem:[%s682 + $0xa08] sm:$0xf]
                  %1009 = vst [vmem:[%s683 + $0x288] sm:$0xf] %v1008
                  %v1010 = vld [vmem:[%s682 + $0xa0c] sm:$0xf]
                  %1011 = vst [vmem:[%s683 + $0x28c] sm:$0xf] %v1010
                  %v1012 = vld [vmem:[%s682 + $0xa10] sm:$0xf]
                  %1013 = vst [vmem:[%s683 + $0x290] sm:$0xf] %v1012
                  %v1014 = vld [vmem:[%s682 + $0xa14] sm:$0xf]
                  %1015 = vst [vmem:[%s683 + $0x294] sm:$0xf] %v1014
                  %v1016 = vld [vmem:[%s682 + $0xa18] sm:$0xf]
                  %1017 = vst [vmem:[%s683 + $0x298] sm:$0xf] %v1016
                  %v1018 = vld [vmem:[%s682 + $0xa1c] sm:$0xf]
                  %1019 = vst [vmem:[%s683 + $0x29c] sm:$0xf] %v1018
                  %v1020 = vld [vmem:[%s682 + $0xa20] sm:$0xf]
                  %1021 = vst [vmem:[%s683 + $0x2a0] sm:$0xf] %v1020
                  %v1022 = vld [vmem:[%s682 + $0xa24] sm:$0xf]
                  %1023 = vst [vmem:[%s683 + $0x2a4] sm:$0xf] %v1022
                  %v1024 = vld [vmem:[%s682 + $0xa28] sm:$0xf]
                  %1025 = vst [vmem:[%s683 + $0x2a8] sm:$0xf] %v1024
                  %v1026 = vld [vmem:[%s682 + $0xa2c] sm:$0xf]
                  %1027 = vst [vmem:[%s683 + $0x2ac] sm:$0xf] %v1026
                  %v1028 = vld [vmem:[%s682 + $0xa30] sm:$0xf]
                  %1029 = vst [vmem:[%s683 + $0x2b0] sm:$0xf] %v1028
                  %v1030 = vld [vmem:[%s682 + $0xa34] sm:$0xf]
                  %1031 = vst [vmem:[%s683 + $0x2b4] sm:$0xf] %v1030
                  %v1032 = vld [vmem:[%s682 + $0xa38] sm:$0xf]
                  %1033 = vst [vmem:[%s683 + $0x2b8] sm:$0xf] %v1032
                  %v1034 = vld [vmem:[%s682 + $0xa3c] sm:$0xf]
                  %1035 = vst [vmem:[%s683 + $0x2bc] sm:$0xf] %v1034
                  %v1036 = vld [vmem:[%s682 + $0xb00] sm:$0xf]
                  %1037 = vst [vmem:[%s683 + $0x2c0] sm:$0xf] %v1036
                  %v1038 = vld [vmem:[%s682 + $0xb04] sm:$0xf]
                  %1039 = vst [vmem:[%s683 + $0x2c4] sm:$0xf] %v1038
                  %v1040 = vld [vmem:[%s682 + $0xb08] sm:$0xf]
                  %1041 = vst [vmem:[%s683 + $0x2c8] sm:$0xf] %v1040
                  %v1042 = vld [vmem:[%s682 + $0xb0c] sm:$0xf]
                  %1043 = vst [vmem:[%s683 + $0x2cc] sm:$0xf] %v1042
                  %v1044 = vld [vmem:[%s682 + $0xb10] sm:$0xf]
                  %1045 = vst [vmem:[%s683 + $0x2d0] sm:$0xf] %v1044
                  %v1046 = vld [vmem:[%s682 + $0xb14] sm:$0xf]
                  %1047 = vst [vmem:[%s683 + $0x2d4] sm:$0xf] %v1046
                  %v1048 = vld [vmem:[%s682 + $0xb18] sm:$0xf]
                  %1049 = vst [vmem:[%s683 + $0x2d8] sm:$0xf] %v1048
                  %v1050 = vld [vmem:[%s682 + $0xb1c] sm:$0xf]
                  %1051 = vst [vmem:[%s683 + $0x2dc] sm:$0xf] %v1050
                  %v1052 = vld [vmem:[%s682 + $0xb20] sm:$0xf]
                  %1053 = vst [vmem:[%s683 + $0x2e0] sm:$0xf] %v1052
                  %v1054 = vld [vmem:[%s682 + $0xb24] sm:$0xf]
                  %1055 = vst [vmem:[%s683 + $0x2e4] sm:$0xf] %v1054
                  %v1056 = vld [vmem:[%s682 + $0xb28] sm:$0xf]
                  %1057 = vst [vmem:[%s683 + $0x2e8] sm:$0xf] %v1056
                  %v1058 = vld [vmem:[%s682 + $0xb2c] sm:$0xf]
                  %1059 = vst [vmem:[%s683 + $0x2ec] sm:$0xf] %v1058
                  %v1060 = vld [vmem:[%s682 + $0xb30] sm:$0xf]
                  %1061 = vst [vmem:[%s683 + $0x2f0] sm:$0xf] %v1060
                  %v1062 = vld [vmem:[%s682 + $0xb34] sm:$0xf]
                  %1063 = vst [vmem:[%s683 + $0x2f4] sm:$0xf] %v1062
                  %v1064 = vld [vmem:[%s682 + $0xb38] sm:$0xf]
                  %1065 = vst [vmem:[%s683 + $0x2f8] sm:$0xf] %v1064
                  %v1066 = vld [vmem:[%s682 + $0xb3c] sm:$0xf]
                  %1067 = vst [vmem:[%s683 + $0x2fc] sm:$0xf] %v1066
                  %v1068 = vld [vmem:[%s682 + $0xc00] sm:$0xf]
                  %1069 = vst [vmem:[%s683 + $0x300] sm:$0xf] %v1068
                  %v1070 = vld [vmem:[%s682 + $0xc04] sm:$0xf]
                  %1071 = vst [vmem:[%s683 + $0x304] sm:$0xf] %v1070
                  %v1072 = vld [vmem:[%s682 + $0xc08] sm:$0xf]
                  %1073 = vst [vmem:[%s683 + $0x308] sm:$0xf] %v1072
                  %v1074 = vld [vmem:[%s682 + $0xc0c] sm:$0xf]
                  %1075 = vst [vmem:[%s683 + $0x30c] sm:$0xf] %v1074
                  %v1076 = vld [vmem:[%s682 + $0xc10] sm:$0xf]
                  %1077 = vst [vmem:[%s683 + $0x310] sm:$0xf] %v1076
                  %v1078 = vld [vmem:[%s682 + $0xc14] sm:$0xf]
                  %1079 = vst [vmem:[%s683 + $0x314] sm:$0xf] %v1078
                  %v1080 = vld [vmem:[%s682 + $0xc18] sm:$0xf]
                  %1081 = vst [vmem:[%s683 + $0x318] sm:$0xf] %v1080
                  %v1082 = vld [vmem:[%s682 + $0xc1c] sm:$0xf]
                  %1083 = vst [vmem:[%s683 + $0x31c] sm:$0xf] %v1082
                  %v1084 = vld [vmem:[%s682 + $0xc20] sm:$0xf]
                  %1085 = vst [vmem:[%s683 + $0x320] sm:$0xf] %v1084
                  %v1086 = vld [vmem:[%s682 + $0xc24] sm:$0xf]
                  %1087 = vst [vmem:[%s683 + $0x324] sm:$0xf] %v1086
                  %v1088 = vld [vmem:[%s682 + $0xc28] sm:$0xf]
                  %1089 = vst [vmem:[%s683 + $0x328] sm:$0xf] %v1088
                  %v1090 = vld [vmem:[%s682 + $0xc2c] sm:$0xf]
                  %1091 = vst [vmem:[%s683 + $0x32c] sm:$0xf] %v1090
                  %v1092 = vld [vmem:[%s682 + $0xc30] sm:$0xf]
                  %1093 = vst [vmem:[%s683 + $0x330] sm:$0xf] %v1092
                  %v1094 = vld [vmem:[%s682 + $0xc34] sm:$0xf]
                  %1095 = vst [vmem:[%s683 + $0x334] sm:$0xf] %v1094
                  %v1096 = vld [vmem:[%s682 + $0xc38] sm:$0xf]
                  %1097 = vst [vmem:[%s683 + $0x338] sm:$0xf] %v1096
                  %v1098 = vld [vmem:[%s682 + $0xc3c] sm:$0xf]
                  %1099 = vst [vmem:[%s683 + $0x33c] sm:$0xf] %v1098
                  %v1100 = vld [vmem:[%s682 + $0xd00] sm:$0xf]
                  %1101 = vst [vmem:[%s683 + $0x340] sm:$0xf] %v1100
                  %v1102 = vld [vmem:[%s682 + $0xd04] sm:$0xf]
                  %1103 = vst [vmem:[%s683 + $0x344] sm:$0xf] %v1102
                  %v1104 = vld [vmem:[%s682 + $0xd08] sm:$0xf]
                  %1105 = vst [vmem:[%s683 + $0x348] sm:$0xf] %v1104
                  %v1106 = vld [vmem:[%s682 + $0xd0c] sm:$0xf]
                  %1107 = vst [vmem:[%s683 + $0x34c] sm:$0xf] %v1106
                  %v1108 = vld [vmem:[%s682 + $0xd10] sm:$0xf]
                  %1109 = vst [vmem:[%s683 + $0x350] sm:$0xf] %v1108
                  %v1110 = vld [vmem:[%s682 + $0xd14] sm:$0xf]
                  %1111 = vst [vmem:[%s683 + $0x354] sm:$0xf] %v1110
                  %v1112 = vld [vmem:[%s682 + $0xd18] sm:$0xf]
                  %1113 = vst [vmem:[%s683 + $0x358] sm:$0xf] %v1112
                  %v1114 = vld [vmem:[%s682 + $0xd1c] sm:$0xf]
                  %1115 = vst [vmem:[%s683 + $0x35c] sm:$0xf] %v1114
                  %v1116 = vld [vmem:[%s682 + $0xd20] sm:$0xf]
                  %1117 = vst [vmem:[%s683 + $0x360] sm:$0xf] %v1116
                  %v1118 = vld [vmem:[%s682 + $0xd24] sm:$0xf]
                  %1119 = vst [vmem:[%s683 + $0x364] sm:$0xf] %v1118
                  %v1120 = vld [vmem:[%s682 + $0xd28] sm:$0xf]
                  %1121 = vst [vmem:[%s683 + $0x368] sm:$0xf] %v1120
                  %v1122 = vld [vmem:[%s682 + $0xd2c] sm:$0xf]
                  %1123 = vst [vmem:[%s683 + $0x36c] sm:$0xf] %v1122
                  %v1124 = vld [vmem:[%s682 + $0xd30] sm:$0xf]
                  %1125 = vst [vmem:[%s683 + $0x370] sm:$0xf] %v1124
                  %v1126 = vld [vmem:[%s682 + $0xd34] sm:$0xf]
                  %1127 = vst [vmem:[%s683 + $0x374] sm:$0xf] %v1126
                  %v1128 = vld [vmem:[%s682 + $0xd38] sm:$0xf]
                  %1129 = vst [vmem:[%s683 + $0x378] sm:$0xf] %v1128
                  %v1130 = vld [vmem:[%s682 + $0xd3c] sm:$0xf]
                  %1131 = vst [vmem:[%s683 + $0x37c] sm:$0xf] %v1130
                  %v1132 = vld [vmem:[%s682 + $0xe00] sm:$0xf]
                  %1133 = vst [vmem:[%s683 + $0x380] sm:$0xf] %v1132
                  %v1134 = vld [vmem:[%s682 + $0xe04] sm:$0xf]
                  %1135 = vst [vmem:[%s683 + $0x384] sm:$0xf] %v1134
                  %v1136 = vld [vmem:[%s682 + $0xe08] sm:$0xf]
                  %1137 = vst [vmem:[%s683 + $0x388] sm:$0xf] %v1136
                  %v1138 = vld [vmem:[%s682 + $0xe0c] sm:$0xf]
                  %1139 = vst [vmem:[%s683 + $0x38c] sm:$0xf] %v1138
                  %v1140 = vld [vmem:[%s682 + $0xe10] sm:$0xf]
                  %1141 = vst [vmem:[%s683 + $0x390] sm:$0xf] %v1140
                  %v1142 = vld [vmem:[%s682 + $0xe14] sm:$0xf]
                  %1143 = vst [vmem:[%s683 + $0x394] sm:$0xf] %v1142
                  %v1144 = vld [vmem:[%s682 + $0xe18] sm:$0xf]
                  %1145 = vst [vmem:[%s683 + $0x398] sm:$0xf] %v1144
                  %v1146 = vld [vmem:[%s682 + $0xe1c] sm:$0xf]
                  %1147 = vst [vmem:[%s683 + $0x39c] sm:$0xf] %v1146
                  %v1148 = vld [vmem:[%s682 + $0xe20] sm:$0xf]
                  %1149 = vst [vmem:[%s683 + $0x3a0] sm:$0xf] %v1148
                  %v1150 = vld [vmem:[%s682 + $0xe24] sm:$0xf]
                  %1151 = vst [vmem:[%s683 + $0x3a4] sm:$0xf] %v1150
                  %v1152 = vld [vmem:[%s682 + $0xe28] sm:$0xf]
                  %1153 = vst [vmem:[%s683 + $0x3a8] sm:$0xf] %v1152
                  %v1154 = vld [vmem:[%s682 + $0xe2c] sm:$0xf]
                  %1155 = vst [vmem:[%s683 + $0x3ac] sm:$0xf] %v1154
                  %v1156 = vld [vmem:[%s682 + $0xe30] sm:$0xf]
                  %1157 = vst [vmem:[%s683 + $0x3b0] sm:$0xf] %v1156
                  %v1158 = vld [vmem:[%s682 + $0xe34] sm:$0xf]
                  %1159 = vst [vmem:[%s683 + $0x3b4] sm:$0xf] %v1158
                  %v1160 = vld [vmem:[%s682 + $0xe38] sm:$0xf]
                  %1161 = vst [vmem:[%s683 + $0x3b8] sm:$0xf] %v1160
                  %v1162 = vld [vmem:[%s682 + $0xe3c] sm:$0xf]
                  %1163 = vst [vmem:[%s683 + $0x3bc] sm:$0xf] %v1162
                  %v1164 = vld [vmem:[%s682 + $0xf00] sm:$0xf]
                  %1165 = vst [vmem:[%s683 + $0x3c0] sm:$0xf] %v1164
                  %v1166 = vld [vmem:[%s682 + $0xf04] sm:$0xf]
                  %1167 = vst [vmem:[%s683 + $0x3c4] sm:$0xf] %v1166
                  %v1168 = vld [vmem:[%s682 + $0xf08] sm:$0xf]
                  %1169 = vst [vmem:[%s683 + $0x3c8] sm:$0xf] %v1168
                  %v1170 = vld [vmem:[%s682 + $0xf0c] sm:$0xf]
                  %1171 = vst [vmem:[%s683 + $0x3cc] sm:$0xf] %v1170
                  %v1172 = vld [vmem:[%s682 + $0xf10] sm:$0xf]
                  %1173 = vst [vmem:[%s683 + $0x3d0] sm:$0xf] %v1172
                  %v1174 = vld [vmem:[%s682 + $0xf14] sm:$0xf]
                  %1175 = vst [vmem:[%s683 + $0x3d4] sm:$0xf] %v1174
                  %v1176 = vld [vmem:[%s682 + $0xf18] sm:$0xf]
                  %1177 = vst [vmem:[%s683 + $0x3d8] sm:$0xf] %v1176
                  %v1178 = vld [vmem:[%s682 + $0xf1c] sm:$0xf]
                  %1179 = vst [vmem:[%s683 + $0x3dc] sm:$0xf] %v1178
                  %v1180 = vld [vmem:[%s682 + $0xf20] sm:$0xf]
                  %1181 = vst [vmem:[%s683 + $0x3e0] sm:$0xf] %v1180
                  %v1182 = vld [vmem:[%s682 + $0xf24] sm:$0xf]
                  %1183 = vst [vmem:[%s683 + $0x3e4] sm:$0xf] %v1182
                  %v1184 = vld [vmem:[%s682 + $0xf28] sm:$0xf]
                  %1185 = vst [vmem:[%s683 + $0x3e8] sm:$0xf] %v1184
                  %v1186 = vld [vmem:[%s682 + $0xf2c] sm:$0xf]
                  %1187 = vst [vmem:[%s683 + $0x3ec] sm:$0xf] %v1186
                  %v1188 = vld [vmem:[%s682 + $0xf30] sm:$0xf]
                  %1189 = vst [vmem:[%s683 + $0x3f0] sm:$0xf] %v1188
                  %v1190 = vld [vmem:[%s682 + $0xf34] sm:$0xf]
                  %1191 = vst [vmem:[%s683 + $0x3f4] sm:$0xf] %v1190
                  %v1192 = vld [vmem:[%s682 + $0xf38] sm:$0xf]
                  %1193 = vst [vmem:[%s683 + $0x3f8] sm:$0xf] %v1192
                  %v1194 = vld [vmem:[%s682 + $0xf3c] sm:$0xf]
                  %1195 = vst [vmem:[%s683 + $0x3fc] sm:$0xf] %v1194
                $region63: #{model_cnn_classifier_forward.2} parent=50 // loop_footer
                  %s681 = sadd.s32 1, %s677
                $region64: #{model_cnn_classifier_forward.2} parent=50 // loop_footer_branch
                  %676 = sbr.rel target = $region60
                $region65: #{model_cnn_classifier_forward.2} parent=50 // loop_exit
                  _
              $region51: #{model_cnn_classifier_forward.2} parent=35 // pred_fallthru
                _
            $region36: #{model_cnn_classifier_forward.2} parent=31 // pred_fallthru
              _
            // Predicated region
            $region37: #{model_cnn_classifier_forward.2} parent=31 // pred_check
              _
            $region38: #{model_cnn_classifier_forward.2} parent=31 // pred_check_branch
              %143 = sbr.rel (0) target = $region40
            $region39: #{model_cnn_classifier_forward.2} parent=31 // pred_region
              loop: start=0, step=1, limit=1
              $region41: #{model_cnn_classifier_forward.2} parent=39 // loop_pre_header
                _
              $region42: #{model_cnn_classifier_forward.2} parent=39 // loop_header
                %s146 = sphi 0, %s150
                %p147 = scmp.ge.s32.totalorder %s146, 1
                %s151 = sphi %s137, %s137
                %s152 = sphi %s134, %s134
              $region43: #{model_cnn_classifier_forward.2} parent=39 // loop_header_branch
                %149 = sbr.rel (%p147) target = $region47
              $region44: #{model_cnn_classifier_forward.2} parent=39 // loop_body
                %v153 = vld [vmem:[%s151] sm:$0xf]
                %154 = vst [vmem:[%s152] sm:$0xf] %v153
                %v155 = vld [vmem:[%s151 + $0x4] sm:$0xf]
                %156 = vst [vmem:[%s152 + $0x4] sm:$0xf] %v155
                %v157 = vld [vmem:[%s151 + $0x8] sm:$0xf]
                %158 = vst [vmem:[%s152 + $0x8] sm:$0xf] %v157
                %v159 = vld [vmem:[%s151 + $0xc] sm:$0xf]
                %160 = vst [vmem:[%s152 + $0xc] sm:$0xf] %v159
                %v161 = vld [vmem:[%s151 + $0x10] sm:$0xf]
                %162 = vst [vmem:[%s152 + $0x10] sm:$0xf] %v161
                %v163 = vld [vmem:[%s151 + $0x14] sm:$0xf]
                %164 = vst [vmem:[%s152 + $0x14] sm:$0xf] %v163
                %v165 = vld [vmem:[%s151 + $0x18] sm:$0xf]
                %166 = vst [vmem:[%s152 + $0x18] sm:$0xf] %v165
                %v167 = vld [vmem:[%s151 + $0x1c] sm:$0xf]
                %168 = vst [vmem:[%s152 + $0x1c] sm:$0xf] %v167
                %v169 = vld [vmem:[%s151 + $0x20] sm:$0xf]
                %170 = vst [vmem:[%s152 + $0x20] sm:$0xf] %v169
                %v171 = vld [vmem:[%s151 + $0x24] sm:$0xf]
                %172 = vst [vmem:[%s152 + $0x24] sm:$0xf] %v171
                %v173 = vld [vmem:[%s151 + $0x28] sm:$0xf]
                %174 = vst [vmem:[%s152 + $0x28] sm:$0xf] %v173
                %v175 = vld [vmem:[%s151 + $0x2c] sm:$0xf]
                %176 = vst [vmem:[%s152 + $0x2c] sm:$0xf] %v175
                %v177 = vld [vmem:[%s151 + $0x30] sm:$0xf]
                %178 = vst [vmem:[%s152 + $0x30] sm:$0xf] %v177
                %v179 = vld [vmem:[%s151 + $0x34] sm:$0xf]
                %180 = vst [vmem:[%s152 + $0x34] sm:$0xf] %v179
                %v181 = vld [vmem:[%s151 + $0x38] sm:$0xf]
                %182 = vst [vmem:[%s152 + $0x38] sm:$0xf] %v181
                %v183 = vld [vmem:[%s151 + $0x3c] sm:$0xf]
                %184 = vst [vmem:[%s152 + $0x3c] sm:$0xf] %v183
                %v185 = vld [vmem:[%s151 + $0x100] sm:$0xf]
                %186 = vst [vmem:[%s152 + $0x40] sm:$0xf] %v185
                %v187 = vld [vmem:[%s151 + $0x104] sm:$0xf]
                %188 = vst [vmem:[%s152 + $0x44] sm:$0xf] %v187
                %v189 = vld [vmem:[%s151 + $0x108] sm:$0xf]
                %190 = vst [vmem:[%s152 + $0x48] sm:$0xf] %v189
                %v191 = vld [vmem:[%s151 + $0x10c] sm:$0xf]
                %192 = vst [vmem:[%s152 + $0x4c] sm:$0xf] %v191
                %v193 = vld [vmem:[%s151 + $0x110] sm:$0xf]
                %194 = vst [vmem:[%s152 + $0x50] sm:$0xf] %v193
                %v195 = vld [vmem:[%s151 + $0x114] sm:$0xf]
                %196 = vst [vmem:[%s152 + $0x54] sm:$0xf] %v195
                %v197 = vld [vmem:[%s151 + $0x118] sm:$0xf]
                %198 = vst [vmem:[%s152 + $0x58] sm:$0xf] %v197
                %v199 = vld [vmem:[%s151 + $0x11c] sm:$0xf]
                %200 = vst [vmem:[%s152 + $0x5c] sm:$0xf] %v199
                %v201 = vld [vmem:[%s151 + $0x120] sm:$0xf]
                %202 = vst [vmem:[%s152 + $0x60] sm:$0xf] %v201
                %v203 = vld [vmem:[%s151 + $0x124] sm:$0xf]
                %204 = vst [vmem:[%s152 + $0x64] sm:$0xf] %v203
                %v205 = vld [vmem:[%s151 + $0x128] sm:$0xf]
                %206 = vst [vmem:[%s152 + $0x68] sm:$0xf] %v205
                %v207 = vld [vmem:[%s151 + $0x12c] sm:$0xf]
                %208 = vst [vmem:[%s152 + $0x6c] sm:$0xf] %v207
                %v209 = vld [vmem:[%s151 + $0x130] sm:$0xf]
                %210 = vst [vmem:[%s152 + $0x70] sm:$0xf] %v209
                %v211 = vld [vmem:[%s151 + $0x134] sm:$0xf]
                %212 = vst [vmem:[%s152 + $0x74] sm:$0xf] %v211
                %v213 = vld [vmem:[%s151 + $0x138] sm:$0xf]
                %214 = vst [vmem:[%s152 + $0x78] sm:$0xf] %v213
                %v215 = vld [vmem:[%s151 + $0x13c] sm:$0xf]
                %216 = vst [vmem:[%s152 + $0x7c] sm:$0xf] %v215
                %v217 = vld [vmem:[%s151 + $0x200] sm:$0xf]
                %218 = vst [vmem:[%s152 + $0x80] sm:$0xf] %v217
                %v219 = vld [vmem:[%s151 + $0x204] sm:$0xf]
                %220 = vst [vmem:[%s152 + $0x84] sm:$0xf] %v219
                %v221 = vld [vmem:[%s151 + $0x208] sm:$0xf]
                %222 = vst [vmem:[%s152 + $0x88] sm:$0xf] %v221
                %v223 = vld [vmem:[%s151 + $0x20c] sm:$0xf]
                %224 = vst [vmem:[%s152 + $0x8c] sm:$0xf] %v223
                %v225 = vld [vmem:[%s151 + $0x210] sm:$0xf]
                %226 = vst [vmem:[%s152 + $0x90] sm:$0xf] %v225
                %v227 = vld [vmem:[%s151 + $0x214] sm:$0xf]
                %228 = vst [vmem:[%s152 + $0x94] sm:$0xf] %v227
                %v229 = vld [vmem:[%s151 + $0x218] sm:$0xf]
                %230 = vst [vmem:[%s152 + $0x98] sm:$0xf] %v229
                %v231 = vld [vmem:[%s151 + $0x21c] sm:$0xf]
                %232 = vst [vmem:[%s152 + $0x9c] sm:$0xf] %v231
                %v233 = vld [vmem:[%s151 + $0x220] sm:$0xf]
                %234 = vst [vmem:[%s152 + $0xa0] sm:$0xf] %v233
                %v235 = vld [vmem:[%s151 + $0x224] sm:$0xf]
                %236 = vst [vmem:[%s152 + $0xa4] sm:$0xf] %v235
                %v237 = vld [vmem:[%s151 + $0x228] sm:$0xf]
                %238 = vst [vmem:[%s152 + $0xa8] sm:$0xf] %v237
                %v239 = vld [vmem:[%s151 + $0x22c] sm:$0xf]
                %240 = vst [vmem:[%s152 + $0xac] sm:$0xf] %v239
                %v241 = vld [vmem:[%s151 + $0x230] sm:$0xf]
                %242 = vst [vmem:[%s152 + $0xb0] sm:$0xf] %v241
                %v243 = vld [vmem:[%s151 + $0x234] sm:$0xf]
                %244 = vst [vmem:[%s152 + $0xb4] sm:$0xf] %v243
                %v245 = vld [vmem:[%s151 + $0x238] sm:$0xf]
                %246 = vst [vmem:[%s152 + $0xb8] sm:$0xf] %v245
                %v247 = vld [vmem:[%s151 + $0x23c] sm:$0xf]
                %248 = vst [vmem:[%s152 + $0xbc] sm:$0xf] %v247
                %v249 = vld [vmem:[%s151 + $0x300] sm:$0xf]
                %250 = vst [vmem:[%s152 + $0xc0] sm:$0xf] %v249
                %v251 = vld [vmem:[%s151 + $0x304] sm:$0xf]
                %252 = vst [vmem:[%s152 + $0xc4] sm:$0xf] %v251
                %v253 = vld [vmem:[%s151 + $0x308] sm:$0xf]
                %254 = vst [vmem:[%s152 + $0xc8] sm:$0xf] %v253
                %v255 = vld [vmem:[%s151 + $0x30c] sm:$0xf]
                %256 = vst [vmem:[%s152 + $0xcc] sm:$0xf] %v255
                %v257 = vld [vmem:[%s151 + $0x310] sm:$0xf]
                %258 = vst [vmem:[%s152 + $0xd0] sm:$0xf] %v257
                %v259 = vld [vmem:[%s151 + $0x314] sm:$0xf]
                %260 = vst [vmem:[%s152 + $0xd4] sm:$0xf] %v259
                %v261 = vld [vmem:[%s151 + $0x318] sm:$0xf]
                %262 = vst [vmem:[%s152 + $0xd8] sm:$0xf] %v261
                %v263 = vld [vmem:[%s151 + $0x31c] sm:$0xf]
                %264 = vst [vmem:[%s152 + $0xdc] sm:$0xf] %v263
                %v265 = vld [vmem:[%s151 + $0x320] sm:$0xf]
                %266 = vst [vmem:[%s152 + $0xe0] sm:$0xf] %v265
                %v267 = vld [vmem:[%s151 + $0x324] sm:$0xf]
                %268 = vst [vmem:[%s152 + $0xe4] sm:$0xf] %v267
                %v269 = vld [vmem:[%s151 + $0x328] sm:$0xf]
                %270 = vst [vmem:[%s152 + $0xe8] sm:$0xf] %v269
                %v271 = vld [vmem:[%s151 + $0x32c] sm:$0xf]
                %272 = vst [vmem:[%s152 + $0xec] sm:$0xf] %v271
                %v273 = vld [vmem:[%s151 + $0x330] sm:$0xf]
                %274 = vst [vmem:[%s152 + $0xf0] sm:$0xf] %v273
                %v275 = vld [vmem:[%s151 + $0x334] sm:$0xf]
                %276 = vst [vmem:[%s152 + $0xf4] sm:$0xf] %v275
                %v277 = vld [vmem:[%s151 + $0x338] sm:$0xf]
                %278 = vst [vmem:[%s152 + $0xf8] sm:$0xf] %v277
                %v279 = vld [vmem:[%s151 + $0x33c] sm:$0xf]
                %280 = vst [vmem:[%s152 + $0xfc] sm:$0xf] %v279
                %v281 = vld [vmem:[%s151 + $0x400] sm:$0xf]
                %282 = vst [vmem:[%s152 + $0x100] sm:$0xf] %v281
                %v283 = vld [vmem:[%s151 + $0x404] sm:$0xf]
                %284 = vst [vmem:[%s152 + $0x104] sm:$0xf] %v283
                %v285 = vld [vmem:[%s151 + $0x408] sm:$0xf]
                %286 = vst [vmem:[%s152 + $0x108] sm:$0xf] %v285
                %v287 = vld [vmem:[%s151 + $0x40c] sm:$0xf]
                %288 = vst [vmem:[%s152 + $0x10c] sm:$0xf] %v287
                %v289 = vld [vmem:[%s151 + $0x410] sm:$0xf]
                %290 = vst [vmem:[%s152 + $0x110] sm:$0xf] %v289
                %v291 = vld [vmem:[%s151 + $0x414] sm:$0xf]
                %292 = vst [vmem:[%s152 + $0x114] sm:$0xf] %v291
                %v293 = vld [vmem:[%s151 + $0x418] sm:$0xf]
                %294 = vst [vmem:[%s152 + $0x118] sm:$0xf] %v293
                %v295 = vld [vmem:[%s151 + $0x41c] sm:$0xf]
                %296 = vst [vmem:[%s152 + $0x11c] sm:$0xf] %v295
                %v297 = vld [vmem:[%s151 + $0x420] sm:$0xf]
                %298 = vst [vmem:[%s152 + $0x120] sm:$0xf] %v297
                %v299 = vld [vmem:[%s151 + $0x424] sm:$0xf]
                %300 = vst [vmem:[%s152 + $0x124] sm:$0xf] %v299
                %v301 = vld [vmem:[%s151 + $0x428] sm:$0xf]
                %302 = vst [vmem:[%s152 + $0x128] sm:$0xf] %v301
                %v303 = vld [vmem:[%s151 + $0x42c] sm:$0xf]
                %304 = vst [vmem:[%s152 + $0x12c] sm:$0xf] %v303
                %v305 = vld [vmem:[%s151 + $0x430] sm:$0xf]
                %306 = vst [vmem:[%s152 + $0x130] sm:$0xf] %v305
                %v307 = vld [vmem:[%s151 + $0x434] sm:$0xf]
                %308 = vst [vmem:[%s152 + $0x134] sm:$0xf] %v307
                %v309 = vld [vmem:[%s151 + $0x438] sm:$0xf]
                %310 = vst [vmem:[%s152 + $0x138] sm:$0xf] %v309
                %v311 = vld [vmem:[%s151 + $0x43c] sm:$0xf]
                %312 = vst [vmem:[%s152 + $0x13c] sm:$0xf] %v311
                %v313 = vld [vmem:[%s151 + $0x500] sm:$0xf]
                %314 = vst [vmem:[%s152 + $0x140] sm:$0xf] %v313
                %v315 = vld [vmem:[%s151 + $0x504] sm:$0xf]
                %316 = vst [vmem:[%s152 + $0x144] sm:$0xf] %v315
                %v317 = vld [vmem:[%s151 + $0x508] sm:$0xf]
                %318 = vst [vmem:[%s152 + $0x148] sm:$0xf] %v317
                %v319 = vld [vmem:[%s151 + $0x50c] sm:$0xf]
                %320 = vst [vmem:[%s152 + $0x14c] sm:$0xf] %v319
                %v321 = vld [vmem:[%s151 + $0x510] sm:$0xf]
                %322 = vst [vmem:[%s152 + $0x150] sm:$0xf] %v321
                %v323 = vld [vmem:[%s151 + $0x514] sm:$0xf]
                %324 = vst [vmem:[%s152 + $0x154] sm:$0xf] %v323
                %v325 = vld [vmem:[%s151 + $0x518] sm:$0xf]
                %326 = vst [vmem:[%s152 + $0x158] sm:$0xf] %v325
                %v327 = vld [vmem:[%s151 + $0x51c] sm:$0xf]
                %328 = vst [vmem:[%s152 + $0x15c] sm:$0xf] %v327
                %v329 = vld [vmem:[%s151 + $0x520] sm:$0xf]
                %330 = vst [vmem:[%s152 + $0x160] sm:$0xf] %v329
                %v331 = vld [vmem:[%s151 + $0x524] sm:$0xf]
                %332 = vst [vmem:[%s152 + $0x164] sm:$0xf] %v331
                %v333 = vld [vmem:[%s151 + $0x528] sm:$0xf]
                %334 = vst [vmem:[%s152 + $0x168] sm:$0xf] %v333
                %v335 = vld [vmem:[%s151 + $0x52c] sm:$0xf]
                %336 = vst [vmem:[%s152 + $0x16c] sm:$0xf] %v335
                %v337 = vld [vmem:[%s151 + $0x530] sm:$0xf]
                %338 = vst [vmem:[%s152 + $0x170] sm:$0xf] %v337
                %v339 = vld [vmem:[%s151 + $0x534] sm:$0xf]
                %340 = vst [vmem:[%s152 + $0x174] sm:$0xf] %v339
                %v341 = vld [vmem:[%s151 + $0x538] sm:$0xf]
                %342 = vst [vmem:[%s152 + $0x178] sm:$0xf] %v341
                %v343 = vld [vmem:[%s151 + $0x53c] sm:$0xf]
                %344 = vst [vmem:[%s152 + $0x17c] sm:$0xf] %v343
                %v345 = vld [vmem:[%s151 + $0x600] sm:$0xf]
                %346 = vst [vmem:[%s152 + $0x180] sm:$0xf] %v345
                %v347 = vld [vmem:[%s151 + $0x604] sm:$0xf]
                %348 = vst [vmem:[%s152 + $0x184] sm:$0xf] %v347
                %v349 = vld [vmem:[%s151 + $0x608] sm:$0xf]
                %350 = vst [vmem:[%s152 + $0x188] sm:$0xf] %v349
                %v351 = vld [vmem:[%s151 + $0x60c] sm:$0xf]
                %352 = vst [vmem:[%s152 + $0x18c] sm:$0xf] %v351
                %v353 = vld [vmem:[%s151 + $0x610] sm:$0xf]
                %354 = vst [vmem:[%s152 + $0x190] sm:$0xf] %v353
                %v355 = vld [vmem:[%s151 + $0x614] sm:$0xf]
                %356 = vst [vmem:[%s152 + $0x194] sm:$0xf] %v355
                %v357 = vld [vmem:[%s151 + $0x618] sm:$0xf]
                %358 = vst [vmem:[%s152 + $0x198] sm:$0xf] %v357
                %v359 = vld [vmem:[%s151 + $0x61c] sm:$0xf]
                %360 = vst [vmem:[%s152 + $0x19c] sm:$0xf] %v359
                %v361 = vld [vmem:[%s151 + $0x620] sm:$0xf]
                %362 = vst [vmem:[%s152 + $0x1a0] sm:$0xf] %v361
                %v363 = vld [vmem:[%s151 + $0x624] sm:$0xf]
                %364 = vst [vmem:[%s152 + $0x1a4] sm:$0xf] %v363
                %v365 = vld [vmem:[%s151 + $0x628] sm:$0xf]
                %366 = vst [vmem:[%s152 + $0x1a8] sm:$0xf] %v365
                %v367 = vld [vmem:[%s151 + $0x62c] sm:$0xf]
                %368 = vst [vmem:[%s152 + $0x1ac] sm:$0xf] %v367
                %v369 = vld [vmem:[%s151 + $0x630] sm:$0xf]
                %370 = vst [vmem:[%s152 + $0x1b0] sm:$0xf] %v369
                %v371 = vld [vmem:[%s151 + $0x634] sm:$0xf]
                %372 = vst [vmem:[%s152 + $0x1b4] sm:$0xf] %v371
                %v373 = vld [vmem:[%s151 + $0x638] sm:$0xf]
                %374 = vst [vmem:[%s152 + $0x1b8] sm:$0xf] %v373
                %v375 = vld [vmem:[%s151 + $0x63c] sm:$0xf]
                %376 = vst [vmem:[%s152 + $0x1bc] sm:$0xf] %v375
                %v377 = vld [vmem:[%s151 + $0x700] sm:$0xf]
                %378 = vst [vmem:[%s152 + $0x1c0] sm:$0xf] %v377
                %v379 = vld [vmem:[%s151 + $0x704] sm:$0xf]
                %380 = vst [vmem:[%s152 + $0x1c4] sm:$0xf] %v379
                %v381 = vld [vmem:[%s151 + $0x708] sm:$0xf]
                %382 = vst [vmem:[%s152 + $0x1c8] sm:$0xf] %v381
                %v383 = vld [vmem:[%s151 + $0x70c] sm:$0xf]
                %384 = vst [vmem:[%s152 + $0x1cc] sm:$0xf] %v383
                %v385 = vld [vmem:[%s151 + $0x710] sm:$0xf]
                %386 = vst [vmem:[%s152 + $0x1d0] sm:$0xf] %v385
                %v387 = vld [vmem:[%s151 + $0x714] sm:$0xf]
                %388 = vst [vmem:[%s152 + $0x1d4] sm:$0xf] %v387
                %v389 = vld [vmem:[%s151 + $0x718] sm:$0xf]
                %390 = vst [vmem:[%s152 + $0x1d8] sm:$0xf] %v389
                %v391 = vld [vmem:[%s151 + $0x71c] sm:$0xf]
                %392 = vst [vmem:[%s152 + $0x1dc] sm:$0xf] %v391
                %v393 = vld [vmem:[%s151 + $0x720] sm:$0xf]
                %394 = vst [vmem:[%s152 + $0x1e0] sm:$0xf] %v393
                %v395 = vld [vmem:[%s151 + $0x724] sm:$0xf]
                %396 = vst [vmem:[%s152 + $0x1e4] sm:$0xf] %v395
                %v397 = vld [vmem:[%s151 + $0x728] sm:$0xf]
                %398 = vst [vmem:[%s152 + $0x1e8] sm:$0xf] %v397
                %v399 = vld [vmem:[%s151 + $0x72c] sm:$0xf]
                %400 = vst [vmem:[%s152 + $0x1ec] sm:$0xf] %v399
                %v401 = vld [vmem:[%s151 + $0x730] sm:$0xf]
                %402 = vst [vmem:[%s152 + $0x1f0] sm:$0xf] %v401
                %v403 = vld [vmem:[%s151 + $0x734] sm:$0xf]
                %404 = vst [vmem:[%s152 + $0x1f4] sm:$0xf] %v403
                %v405 = vld [vmem:[%s151 + $0x738] sm:$0xf]
                %406 = vst [vmem:[%s152 + $0x1f8] sm:$0xf] %v405
                %v407 = vld [vmem:[%s151 + $0x73c] sm:$0xf]
                %408 = vst [vmem:[%s152 + $0x1fc] sm:$0xf] %v407
                %v409 = vld [vmem:[%s151 + $0x800] sm:$0xf]
                %410 = vst [vmem:[%s152 + $0x200] sm:$0xf] %v409
                %v411 = vld [vmem:[%s151 + $0x804] sm:$0xf]
                %412 = vst [vmem:[%s152 + $0x204] sm:$0xf] %v411
                %v413 = vld [vmem:[%s151 + $0x808] sm:$0xf]
                %414 = vst [vmem:[%s152 + $0x208] sm:$0xf] %v413
                %v415 = vld [vmem:[%s151 + $0x80c] sm:$0xf]
                %416 = vst [vmem:[%s152 + $0x20c] sm:$0xf] %v415
                %v417 = vld [vmem:[%s151 + $0x810] sm:$0xf]
                %418 = vst [vmem:[%s152 + $0x210] sm:$0xf] %v417
                %v419 = vld [vmem:[%s151 + $0x814] sm:$0xf]
                %420 = vst [vmem:[%s152 + $0x214] sm:$0xf] %v419
                %v421 = vld [vmem:[%s151 + $0x818] sm:$0xf]
                %422 = vst [vmem:[%s152 + $0x218] sm:$0xf] %v421
                %v423 = vld [vmem:[%s151 + $0x81c] sm:$0xf]
                %424 = vst [vmem:[%s152 + $0x21c] sm:$0xf] %v423
                %v425 = vld [vmem:[%s151 + $0x820] sm:$0xf]
                %426 = vst [vmem:[%s152 + $0x220] sm:$0xf] %v425
                %v427 = vld [vmem:[%s151 + $0x824] sm:$0xf]
                %428 = vst [vmem:[%s152 + $0x224] sm:$0xf] %v427
                %v429 = vld [vmem:[%s151 + $0x828] sm:$0xf]
                %430 = vst [vmem:[%s152 + $0x228] sm:$0xf] %v429
                %v431 = vld [vmem:[%s151 + $0x82c] sm:$0xf]
                %432 = vst [vmem:[%s152 + $0x22c] sm:$0xf] %v431
                %v433 = vld [vmem:[%s151 + $0x830] sm:$0xf]
                %434 = vst [vmem:[%s152 + $0x230] sm:$0xf] %v433
                %v435 = vld [vmem:[%s151 + $0x834] sm:$0xf]
                %436 = vst [vmem:[%s152 + $0x234] sm:$0xf] %v435
                %v437 = vld [vmem:[%s151 + $0x838] sm:$0xf]
                %438 = vst [vmem:[%s152 + $0x238] sm:$0xf] %v437
                %v439 = vld [vmem:[%s151 + $0x83c] sm:$0xf]
                %440 = vst [vmem:[%s152 + $0x23c] sm:$0xf] %v439
                %v441 = vld [vmem:[%s151 + $0x900] sm:$0xf]
                %442 = vst [vmem:[%s152 + $0x240] sm:$0xf] %v441
                %v443 = vld [vmem:[%s151 + $0x904] sm:$0xf]
                %444 = vst [vmem:[%s152 + $0x244] sm:$0xf] %v443
                %v445 = vld [vmem:[%s151 + $0x908] sm:$0xf]
                %446 = vst [vmem:[%s152 + $0x248] sm:$0xf] %v445
                %v447 = vld [vmem:[%s151 + $0x90c] sm:$0xf]
                %448 = vst [vmem:[%s152 + $0x24c] sm:$0xf] %v447
                %v449 = vld [vmem:[%s151 + $0x910] sm:$0xf]
                %450 = vst [vmem:[%s152 + $0x250] sm:$0xf] %v449
                %v451 = vld [vmem:[%s151 + $0x914] sm:$0xf]
                %452 = vst [vmem:[%s152 + $0x254] sm:$0xf] %v451
                %v453 = vld [vmem:[%s151 + $0x918] sm:$0xf]
                %454 = vst [vmem:[%s152 + $0x258] sm:$0xf] %v453
                %v455 = vld [vmem:[%s151 + $0x91c] sm:$0xf]
                %456 = vst [vmem:[%s152 + $0x25c] sm:$0xf] %v455
                %v457 = vld [vmem:[%s151 + $0x920] sm:$0xf]
                %458 = vst [vmem:[%s152 + $0x260] sm:$0xf] %v457
                %v459 = vld [vmem:[%s151 + $0x924] sm:$0xf]
                %460 = vst [vmem:[%s152 + $0x264] sm:$0xf] %v459
                %v461 = vld [vmem:[%s151 + $0x928] sm:$0xf]
                %462 = vst [vmem:[%s152 + $0x268] sm:$0xf] %v461
                %v463 = vld [vmem:[%s151 + $0x92c] sm:$0xf]
                %464 = vst [vmem:[%s152 + $0x26c] sm:$0xf] %v463
                %v465 = vld [vmem:[%s151 + $0x930] sm:$0xf]
                %466 = vst [vmem:[%s152 + $0x270] sm:$0xf] %v465
                %v467 = vld [vmem:[%s151 + $0x934] sm:$0xf]
                %468 = vst [vmem:[%s152 + $0x274] sm:$0xf] %v467
                %v469 = vld [vmem:[%s151 + $0x938] sm:$0xf]
                %470 = vst [vmem:[%s152 + $0x278] sm:$0xf] %v469
                %v471 = vld [vmem:[%s151 + $0x93c] sm:$0xf]
                %472 = vst [vmem:[%s152 + $0x27c] sm:$0xf] %v471
                %v473 = vld [vmem:[%s151 + $0xa00] sm:$0xf]
                %474 = vst [vmem:[%s152 + $0x280] sm:$0xf] %v473
                %v475 = vld [vmem:[%s151 + $0xa04] sm:$0xf]
                %476 = vst [vmem:[%s152 + $0x284] sm:$0xf] %v475
                %v477 = vld [vmem:[%s151 + $0xa08] sm:$0xf]
                %478 = vst [vmem:[%s152 + $0x288] sm:$0xf] %v477
                %v479 = vld [vmem:[%s151 + $0xa0c] sm:$0xf]
                %480 = vst [vmem:[%s152 + $0x28c] sm:$0xf] %v479
                %v481 = vld [vmem:[%s151 + $0xa10] sm:$0xf]
                %482 = vst [vmem:[%s152 + $0x290] sm:$0xf] %v481
                %v483 = vld [vmem:[%s151 + $0xa14] sm:$0xf]
                %484 = vst [vmem:[%s152 + $0x294] sm:$0xf] %v483
                %v485 = vld [vmem:[%s151 + $0xa18] sm:$0xf]
                %486 = vst [vmem:[%s152 + $0x298] sm:$0xf] %v485
                %v487 = vld [vmem:[%s151 + $0xa1c] sm:$0xf]
                %488 = vst [vmem:[%s152 + $0x29c] sm:$0xf] %v487
                %v489 = vld [vmem:[%s151 + $0xa20] sm:$0xf]
                %490 = vst [vmem:[%s152 + $0x2a0] sm:$0xf] %v489
                %v491 = vld [vmem:[%s151 + $0xa24] sm:$0xf]
                %492 = vst [vmem:[%s152 + $0x2a4] sm:$0xf] %v491
                %v493 = vld [vmem:[%s151 + $0xa28] sm:$0xf]
                %494 = vst [vmem:[%s152 + $0x2a8] sm:$0xf] %v493
                %v495 = vld [vmem:[%s151 + $0xa2c] sm:$0xf]
                %496 = vst [vmem:[%s152 + $0x2ac] sm:$0xf] %v495
                %v497 = vld [vmem:[%s151 + $0xa30] sm:$0xf]
                %498 = vst [vmem:[%s152 + $0x2b0] sm:$0xf] %v497
                %v499 = vld [vmem:[%s151 + $0xa34] sm:$0xf]
                %500 = vst [vmem:[%s152 + $0x2b4] sm:$0xf] %v499
                %v501 = vld [vmem:[%s151 + $0xa38] sm:$0xf]
                %502 = vst [vmem:[%s152 + $0x2b8] sm:$0xf] %v501
                %v503 = vld [vmem:[%s151 + $0xa3c] sm:$0xf]
                %504 = vst [vmem:[%s152 + $0x2bc] sm:$0xf] %v503
                %v505 = vld [vmem:[%s151 + $0xb00] sm:$0xf]
                %506 = vst [vmem:[%s152 + $0x2c0] sm:$0xf] %v505
                %v507 = vld [vmem:[%s151 + $0xb04] sm:$0xf]
                %508 = vst [vmem:[%s152 + $0x2c4] sm:$0xf] %v507
                %v509 = vld [vmem:[%s151 + $0xb08] sm:$0xf]
                %510 = vst [vmem:[%s152 + $0x2c8] sm:$0xf] %v509
                %v511 = vld [vmem:[%s151 + $0xb0c] sm:$0xf]
                %512 = vst [vmem:[%s152 + $0x2cc] sm:$0xf] %v511
                %v513 = vld [vmem:[%s151 + $0xb10] sm:$0xf]
                %514 = vst [vmem:[%s152 + $0x2d0] sm:$0xf] %v513
                %v515 = vld [vmem:[%s151 + $0xb14] sm:$0xf]
                %516 = vst [vmem:[%s152 + $0x2d4] sm:$0xf] %v515
                %v517 = vld [vmem:[%s151 + $0xb18] sm:$0xf]
                %518 = vst [vmem:[%s152 + $0x2d8] sm:$0xf] %v517
                %v519 = vld [vmem:[%s151 + $0xb1c] sm:$0xf]
                %520 = vst [vmem:[%s152 + $0x2dc] sm:$0xf] %v519
                %v521 = vld [vmem:[%s151 + $0xb20] sm:$0xf]
                %522 = vst [vmem:[%s152 + $0x2e0] sm:$0xf] %v521
                %v523 = vld [vmem:[%s151 + $0xb24] sm:$0xf]
                %524 = vst [vmem:[%s152 + $0x2e4] sm:$0xf] %v523
                %v525 = vld [vmem:[%s151 + $0xb28] sm:$0xf]
                %526 = vst [vmem:[%s152 + $0x2e8] sm:$0xf] %v525
                %v527 = vld [vmem:[%s151 + $0xb2c] sm:$0xf]
                %528 = vst [vmem:[%s152 + $0x2ec] sm:$0xf] %v527
                %v529 = vld [vmem:[%s151 + $0xb30] sm:$0xf]
                %530 = vst [vmem:[%s152 + $0x2f0] sm:$0xf] %v529
                %v531 = vld [vmem:[%s151 + $0xb34] sm:$0xf]
                %532 = vst [vmem:[%s152 + $0x2f4] sm:$0xf] %v531
                %v533 = vld [vmem:[%s151 + $0xb38] sm:$0xf]
                %534 = vst [vmem:[%s152 + $0x2f8] sm:$0xf] %v533
                %v535 = vld [vmem:[%s151 + $0xb3c] sm:$0xf]
                %536 = vst [vmem:[%s152 + $0x2fc] sm:$0xf] %v535
                %v537 = vld [vmem:[%s151 + $0xc00] sm:$0xf]
                %538 = vst [vmem:[%s152 + $0x300] sm:$0xf] %v537
                %v539 = vld [vmem:[%s151 + $0xc04] sm:$0xf]
                %540 = vst [vmem:[%s152 + $0x304] sm:$0xf] %v539
                %v541 = vld [vmem:[%s151 + $0xc08] sm:$0xf]
                %542 = vst [vmem:[%s152 + $0x308] sm:$0xf] %v541
                %v543 = vld [vmem:[%s151 + $0xc0c] sm:$0xf]
                %544 = vst [vmem:[%s152 + $0x30c] sm:$0xf] %v543
                %v545 = vld [vmem:[%s151 + $0xc10] sm:$0xf]
                %546 = vst [vmem:[%s152 + $0x310] sm:$0xf] %v545
                %v547 = vld [vmem:[%s151 + $0xc14] sm:$0xf]
                %548 = vst [vmem:[%s152 + $0x314] sm:$0xf] %v547
                %v549 = vld [vmem:[%s151 + $0xc18] sm:$0xf]
                %550 = vst [vmem:[%s152 + $0x318] sm:$0xf] %v549
                %v551 = vld [vmem:[%s151 + $0xc1c] sm:$0xf]
                %552 = vst [vmem:[%s152 + $0x31c] sm:$0xf] %v551
                %v553 = vld [vmem:[%s151 + $0xc20] sm:$0xf]
                %554 = vst [vmem:[%s152 + $0x320] sm:$0xf] %v553
                %v555 = vld [vmem:[%s151 + $0xc24] sm:$0xf]
                %556 = vst [vmem:[%s152 + $0x324] sm:$0xf] %v555
                %v557 = vld [vmem:[%s151 + $0xc28] sm:$0xf]
                %558 = vst [vmem:[%s152 + $0x328] sm:$0xf] %v557
                %v559 = vld [vmem:[%s151 + $0xc2c] sm:$0xf]
                %560 = vst [vmem:[%s152 + $0x32c] sm:$0xf] %v559
                %v561 = vld [vmem:[%s151 + $0xc30] sm:$0xf]
                %562 = vst [vmem:[%s152 + $0x330] sm:$0xf] %v561
                %v563 = vld [vmem:[%s151 + $0xc34] sm:$0xf]
                %564 = vst [vmem:[%s152 + $0x334] sm:$0xf] %v563
                %v565 = vld [vmem:[%s151 + $0xc38] sm:$0xf]
                %566 = vst [vmem:[%s152 + $0x338] sm:$0xf] %v565
                %v567 = vld [vmem:[%s151 + $0xc3c] sm:$0xf]
                %568 = vst [vmem:[%s152 + $0x33c] sm:$0xf] %v567
                %v569 = vld [vmem:[%s151 + $0xd00] sm:$0xf]
                %570 = vst [vmem:[%s152 + $0x340] sm:$0xf] %v569
                %v571 = vld [vmem:[%s151 + $0xd04] sm:$0xf]
                %572 = vst [vmem:[%s152 + $0x344] sm:$0xf] %v571
                %v573 = vld [vmem:[%s151 + $0xd08] sm:$0xf]
                %574 = vst [vmem:[%s152 + $0x348] sm:$0xf] %v573
                %v575 = vld [vmem:[%s151 + $0xd0c] sm:$0xf]
                %576 = vst [vmem:[%s152 + $0x34c] sm:$0xf] %v575
                %v577 = vld [vmem:[%s151 + $0xd10] sm:$0xf]
                %578 = vst [vmem:[%s152 + $0x350] sm:$0xf] %v577
                %v579 = vld [vmem:[%s151 + $0xd14] sm:$0xf]
                %580 = vst [vmem:[%s152 + $0x354] sm:$0xf] %v579
                %v581 = vld [vmem:[%s151 + $0xd18] sm:$0xf]
                %582 = vst [vmem:[%s152 + $0x358] sm:$0xf] %v581
                %v583 = vld [vmem:[%s151 + $0xd1c] sm:$0xf]
                %584 = vst [vmem:[%s152 + $0x35c] sm:$0xf] %v583
                %v585 = vld [vmem:[%s151 + $0xd20] sm:$0xf]
                %586 = vst [vmem:[%s152 + $0x360] sm:$0xf] %v585
                %v587 = vld [vmem:[%s151 + $0xd24] sm:$0xf]
                %588 = vst [vmem:[%s152 + $0x364] sm:$0xf] %v587
                %v589 = vld [vmem:[%s151 + $0xd28] sm:$0xf]
                %590 = vst [vmem:[%s152 + $0x368] sm:$0xf] %v589
                %v591 = vld [vmem:[%s151 + $0xd2c] sm:$0xf]
                %592 = vst [vmem:[%s152 + $0x36c] sm:$0xf] %v591
                %v593 = vld [vmem:[%s151 + $0xd30] sm:$0xf]
                %594 = vst [vmem:[%s152 + $0x370] sm:$0xf] %v593
                %v595 = vld [vmem:[%s151 + $0xd34] sm:$0xf]
                %596 = vst [vmem:[%s152 + $0x374] sm:$0xf] %v595
                %v597 = vld [vmem:[%s151 + $0xd38] sm:$0xf]
                %598 = vst [vmem:[%s152 + $0x378] sm:$0xf] %v597
                %v599 = vld [vmem:[%s151 + $0xd3c] sm:$0xf]
                %600 = vst [vmem:[%s152 + $0x37c] sm:$0xf] %v599
                %v601 = vld [vmem:[%s151 + $0xe00] sm:$0xf]
                %602 = vst [vmem:[%s152 + $0x380] sm:$0xf] %v601
                %v603 = vld [vmem:[%s151 + $0xe04] sm:$0xf]
                %604 = vst [vmem:[%s152 + $0x384] sm:$0xf] %v603
                %v605 = vld [vmem:[%s151 + $0xe08] sm:$0xf]
                %606 = vst [vmem:[%s152 + $0x388] sm:$0xf] %v605
                %v607 = vld [vmem:[%s151 + $0xe0c] sm:$0xf]
                %608 = vst [vmem:[%s152 + $0x38c] sm:$0xf] %v607
                %v609 = vld [vmem:[%s151 + $0xe10] sm:$0xf]
                %610 = vst [vmem:[%s152 + $0x390] sm:$0xf] %v609
                %v611 = vld [vmem:[%s151 + $0xe14] sm:$0xf]
                %612 = vst [vmem:[%s152 + $0x394] sm:$0xf] %v611
                %v613 = vld [vmem:[%s151 + $0xe18] sm:$0xf]
                %614 = vst [vmem:[%s152 + $0x398] sm:$0xf] %v613
                %v615 = vld [vmem:[%s151 + $0xe1c] sm:$0xf]
                %616 = vst [vmem:[%s152 + $0x39c] sm:$0xf] %v615
                %v617 = vld [vmem:[%s151 + $0xe20] sm:$0xf]
                %618 = vst [vmem:[%s152 + $0x3a0] sm:$0xf] %v617
                %v619 = vld [vmem:[%s151 + $0xe24] sm:$0xf]
                %620 = vst [vmem:[%s152 + $0x3a4] sm:$0xf] %v619
                %v621 = vld [vmem:[%s151 + $0xe28] sm:$0xf]
                %622 = vst [vmem:[%s152 + $0x3a8] sm:$0xf] %v621
                %v623 = vld [vmem:[%s151 + $0xe2c] sm:$0xf]
                %624 = vst [vmem:[%s152 + $0x3ac] sm:$0xf] %v623
                %v625 = vld [vmem:[%s151 + $0xe30] sm:$0xf]
                %626 = vst [vmem:[%s152 + $0x3b0] sm:$0xf] %v625
                %v627 = vld [vmem:[%s151 + $0xe34] sm:$0xf]
                %628 = vst [vmem:[%s152 + $0x3b4] sm:$0xf] %v627
                %v629 = vld [vmem:[%s151 + $0xe38] sm:$0xf]
                %630 = vst [vmem:[%s152 + $0x3b8] sm:$0xf] %v629
                %v631 = vld [vmem:[%s151 + $0xe3c] sm:$0xf]
                %632 = vst [vmem:[%s152 + $0x3bc] sm:$0xf] %v631
                %v633 = vld [vmem:[%s151 + $0xf00] sm:$0xf]
                %634 = vst [vmem:[%s152 + $0x3c0] sm:$0xf] %v633
                %v635 = vld [vmem:[%s151 + $0xf04] sm:$0xf]
                %636 = vst [vmem:[%s152 + $0x3c4] sm:$0xf] %v635
                %v637 = vld [vmem:[%s151 + $0xf08] sm:$0xf]
                %638 = vst [vmem:[%s152 + $0x3c8] sm:$0xf] %v637
                %v639 = vld [vmem:[%s151 + $0xf0c] sm:$0xf]
                %640 = vst [vmem:[%s152 + $0x3cc] sm:$0xf] %v639
                %v641 = vld [vmem:[%s151 + $0xf10] sm:$0xf]
                %642 = vst [vmem:[%s152 + $0x3d0] sm:$0xf] %v641
                %v643 = vld [vmem:[%s151 + $0xf14] sm:$0xf]
                %644 = vst [vmem:[%s152 + $0x3d4] sm:$0xf] %v643
                %v645 = vld [vmem:[%s151 + $0xf18] sm:$0xf]
                %646 = vst [vmem:[%s152 + $0x3d8] sm:$0xf] %v645
                %v647 = vld [vmem:[%s151 + $0xf1c] sm:$0xf]
                %648 = vst [vmem:[%s152 + $0x3dc] sm:$0xf] %v647
                %v649 = vld [vmem:[%s151 + $0xf20] sm:$0xf]
                %650 = vst [vmem:[%s152 + $0x3e0] sm:$0xf] %v649
                %v651 = vld [vmem:[%s151 + $0xf24] sm:$0xf]
                %652 = vst [vmem:[%s152 + $0x3e4] sm:$0xf] %v651
                %v653 = vld [vmem:[%s151 + $0xf28] sm:$0xf]
                %654 = vst [vmem:[%s152 + $0x3e8] sm:$0xf] %v653
                %v655 = vld [vmem:[%s151 + $0xf2c] sm:$0xf]
                %656 = vst [vmem:[%s152 + $0x3ec] sm:$0xf] %v655
                %v657 = vld [vmem:[%s151 + $0xf30] sm:$0xf]
                %658 = vst [vmem:[%s152 + $0x3f0] sm:$0xf] %v657
                %v659 = vld [vmem:[%s151 + $0xf34] sm:$0xf]
                %660 = vst [vmem:[%s152 + $0x3f4] sm:$0xf] %v659
                %v661 = vld [vmem:[%s151 + $0xf38] sm:$0xf]
                %662 = vst [vmem:[%s152 + $0x3f8] sm:$0xf] %v661
                %v663 = vld [vmem:[%s151 + $0xf3c] sm:$0xf]
                %664 = vst [vmem:[%s152 + $0x3fc] sm:$0xf] %v663
              $region45: #{model_cnn_classifier_forward.2} parent=39 // loop_footer
                %s150 = sadd.s32 1, %s146
              $region46: #{model_cnn_classifier_forward.2} parent=39 // loop_footer_branch
                %145 = sbr.rel target = $region42
              $region47: #{model_cnn_classifier_forward.2} parent=39 // loop_exit
                _
            $region40: #{model_cnn_classifier_forward.2} parent=31 // pred_fallthru
              _
          $region32: #{model_cnn_classifier_forward.2} parent=27 // pred_fallthru
            _
          %1196 = vnop
        $region28: #{model_cnn_classifier_forward.2} parent=23 // pred_fallthru
          _
      $region24: #{model_cnn_classifier_forward.2} parent=5 // pred_fallthru
        _
      %p1197 = scmp.le.s32.totalorder 1, %s9
      %p1198 = scmp.lt.s32.totalorder %s9, 5
      %p1199 = pnand %p1197, %p1198
      %p1200 = pneg %p1199
      // Predicated region
      $region66: #{model_cnn_classifier_forward.2} parent=5 // pred_check
        _
      $region67: #{model_cnn_classifier_forward.2} parent=5 // pred_check_branch
        %1202 = sbr.rel (%p1199) target = $region69
      $region68: #{model_cnn_classifier_forward.2} parent=5 // pred_region
        %s1203 = ssub.s32 %s9, 1
        %s1204 = sand.u32 %s22, 1
        %s1205 = sand.u32 %s22, 1
        %s1206 = smul.addr %s1205, 1024
        %s1207 = scalar_lea.vmem [#allocation2], %s1206
        // Predicated region
        $region70: #{model_cnn_classifier_forward.2} parent=68 // pred_check
          %p1208 = pneg %p35
        $region71: #{model_cnn_classifier_forward.2} parent=68 // pred_check_branch
          %1210 = sbr.rel (%p1208) target = $region73
        $region72: #{model_cnn_classifier_forward.2} parent=68 // pred_region
          _
        $region73: #{model_cnn_classifier_forward.2} parent=68 // pred_fallthru
          _
        %s1211 = sand.u32 %s22, 1
        %s1212 = sand.u32 %s22, 1
        %s1213 = smul.addr %s1212, 1024
        %s1214 = scalar_lea.vmem [#allocation2], %s1213
        %p1215 = pneg %p35
        %p1216 = pneg %p32
        %p1217 = pneg %p56
        %p1218 = pneg %p53
        %p1219 = pneg %p77
        %p1220 = pneg %p74
        %p1221 = pneg %p103
        %p1222 = pneg %p100
        %s1223 = smul.u32 16, %s14
        %p1224 = scmp.lt.s32.totalorder %s1223, 63
        %s1225 = scalar_select %p1224, %s1223, 63
        %s1226 = smul.addr %s1225, 8
        %s1227 = scalar_lea.vmem %s3, %s1226
        %s1228 = smul.u32 16, %s14
        %s1229 = smul.u32 16, %s14
        %p1230 = scmp.lt.s32.totalorder %s1229, 63
        %s1231 = scalar_select %p1230, %s1229, 63
        %s1232 = smul.addr %s1231, 8
        %s1233 = scalar_lea.vmem %s3, %s1232
        %s1234 = smul.u32 16, %s14
        %v1236 = vld [vmem:[%s1207] sm:$0xf]
        %v1237 = vld [vmem:[%s1207 + $0x4] sm:$0xf]
        %v1238 = vld [vmem:[%s1207 + $0x8] sm:$0xf]
        %v1239 = vld [vmem:[%s1207 + $0xc] sm:$0xf]
        %v1240 = vld [vmem:[%s1207 + $0x10] sm:$0xf]
        %v1241 = vld [vmem:[%s1207 + $0x14] sm:$0xf]
        %v1242 = vld [vmem:[%s1207 + $0x18] sm:$0xf]
        %v1243 = vld [vmem:[%s1207 + $0x1c] sm:$0xf]
        %v1244 = vld [vmem:[%s1207 + $0x20] sm:$0xf]
        %v1245 = vld [vmem:[%s1207 + $0x24] sm:$0xf]
        %v1246 = vld [vmem:[%s1207 + $0x28] sm:$0xf]
        %v1247 = vld [vmem:[%s1207 + $0x2c] sm:$0xf]
        %v1248 = vld [vmem:[%s1207 + $0x30] sm:$0xf]
        %v1249 = vld [vmem:[%s1207 + $0x34] sm:$0xf]
        %v1250 = vld [vmem:[%s1207 + $0x38] sm:$0xf]
        %v1251 = vld [vmem:[%s1207 + $0x3c] sm:$0xf]
        %v1252 = vld [vmem:[%s1207 + $0x40] sm:$0xf]
        %v1253 = vld [vmem:[%s1207 + $0x44] sm:$0xf]
        %v1254 = vld [vmem:[%s1207 + $0x48] sm:$0xf]
        %v1255 = vld [vmem:[%s1207 + $0x4c] sm:$0xf]
        %v1256 = vld [vmem:[%s1207 + $0x50] sm:$0xf]
        %v1257 = vld [vmem:[%s1207 + $0x54] sm:$0xf]
        %v1258 = vld [vmem:[%s1207 + $0x58] sm:$0xf]
        %v1259 = vld [vmem:[%s1207 + $0x5c] sm:$0xf]
        %v1260 = vld [vmem:[%s1207 + $0x60] sm:$0xf]
        %v1261 = vld [vmem:[%s1207 + $0x64] sm:$0xf]
        %v1262 = vld [vmem:[%s1207 + $0x68] sm:$0xf]
        %v1263 = vld [vmem:[%s1207 + $0x6c] sm:$0xf]
        %v1264 = vld [vmem:[%s1207 + $0x70] sm:$0xf]
        %v1265 = vld [vmem:[%s1207 + $0x74] sm:$0xf]
        %v1266 = vld [vmem:[%s1207 + $0x78] sm:$0xf]
        %v1267 = vld [vmem:[%s1207 + $0x7c] sm:$0xf]
        %v1268 = vld [vmem:[%s1207 + $0x80] sm:$0xf]
        %v1269 = vld [vmem:[%s1207 + $0x84] sm:$0xf]
        %v1270 = vld [vmem:[%s1207 + $0x88] sm:$0xf]
        %v1271 = vld [vmem:[%s1207 + $0x8c] sm:$0xf]
        %v1272 = vld [vmem:[%s1207 + $0x90] sm:$0xf]
        %v1273 = vld [vmem:[%s1207 + $0x94] sm:$0xf]
        %v1274 = vld [vmem:[%s1207 + $0x98] sm:$0xf]
        %v1275 = vld [vmem:[%s1207 + $0x9c] sm:$0xf]
        %v1276 = vld [vmem:[%s1207 + $0xa0] sm:$0xf]
        %v1277 = vld [vmem:[%s1207 + $0xa4] sm:$0xf]
        %v1278 = vld [vmem:[%s1207 + $0xa8] sm:$0xf]
        %v1279 = vld [vmem:[%s1207 + $0xac] sm:$0xf]
        %v1280 = vld [vmem:[%s1207 + $0xb0] sm:$0xf]
        %v1281 = vld [vmem:[%s1207 + $0xb4] sm:$0xf]
        %v1282 = vld [vmem:[%s1207 + $0xb8] sm:$0xf]
        %v1283 = vld [vmem:[%s1207 + $0xbc] sm:$0xf]
        %v1284 = vld [vmem:[%s1207 + $0xc0] sm:$0xf]
        %v1285 = vld [vmem:[%s1207 + $0xc4] sm:$0xf]
        %v1286 = vld [vmem:[%s1207 + $0xc8] sm:$0xf]
        %v1287 = vld [vmem:[%s1207 + $0xcc] sm:$0xf]
        %v1288 = vld [vmem:[%s1207 + $0xd0] sm:$0xf]
        %v1289 = vld [vmem:[%s1207 + $0xd4] sm:$0xf]
        %v1290 = vld [vmem:[%s1207 + $0xd8] sm:$0xf]
        %v1291 = vld [vmem:[%s1207 + $0xdc] sm:$0xf]
        %v1292 = vld [vmem:[%s1207 + $0xe0] sm:$0xf]
        %v1293 = vld [vmem:[%s1207 + $0xe4] sm:$0xf]
        %v1294 = vld [vmem:[%s1207 + $0xe8] sm:$0xf]
        %v1295 = vld [vmem:[%s1207 + $0xec] sm:$0xf]
        %v1296 = vld [vmem:[%s1207 + $0xf0] sm:$0xf]
        %v1297 = vld [vmem:[%s1207 + $0xf4] sm:$0xf]
        %v1298 = vld [vmem:[%s1207 + $0xf8] sm:$0xf]
        %v1299 = vld [vmem:[%s1207 + $0xfc] sm:$0xf]
        %v1300 = vld [vmem:[%s1207 + $0x100] sm:$0xf]
        %v1301 = vld [vmem:[%s1207 + $0x104] sm:$0xf]
        %v1302 = vld [vmem:[%s1207 + $0x108] sm:$0xf]
        %v1303 = vld [vmem:[%s1207 + $0x10c] sm:$0xf]
        %v1304 = vld [vmem:[%s1207 + $0x110] sm:$0xf]
        %v1305 = vld [vmem:[%s1207 + $0x114] sm:$0xf]
        %v1306 = vld [vmem:[%s1207 + $0x118] sm:$0xf]
        %v1307 = vld [vmem:[%s1207 + $0x11c] sm:$0xf]
        %v1308 = vld [vmem:[%s1207 + $0x120] sm:$0xf]
        %v1309 = vld [vmem:[%s1207 + $0x124] sm:$0xf]
        %v1310 = vld [vmem:[%s1207 + $0x128] sm:$0xf]
        %v1311 = vld [vmem:[%s1207 + $0x12c] sm:$0xf]
        %v1312 = vld [vmem:[%s1207 + $0x130] sm:$0xf]
        %v1313 = vld [vmem:[%s1207 + $0x134] sm:$0xf]
        %v1314 = vld [vmem:[%s1207 + $0x138] sm:$0xf]
        %v1315 = vld [vmem:[%s1207 + $0x13c] sm:$0xf]
        %v1316 = vld [vmem:[%s1207 + $0x140] sm:$0xf]
        %v1317 = vld [vmem:[%s1207 + $0x144] sm:$0xf]
        %v1318 = vld [vmem:[%s1207 + $0x148] sm:$0xf]
        %v1319 = vld [vmem:[%s1207 + $0x14c] sm:$0xf]
        %v1320 = vld [vmem:[%s1207 + $0x150] sm:$0xf]
        %v1321 = vld [vmem:[%s1207 + $0x154] sm:$0xf]
        %v1322 = vld [vmem:[%s1207 + $0x158] sm:$0xf]
        %v1323 = vld [vmem:[%s1207 + $0x15c] sm:$0xf]
        %v1324 = vld [vmem:[%s1207 + $0x160] sm:$0xf]
        %v1325 = vld [vmem:[%s1207 + $0x164] sm:$0xf]
        %v1326 = vld [vmem:[%s1207 + $0x168] sm:$0xf]
        %v1327 = vld [vmem:[%s1207 + $0x16c] sm:$0xf]
        %v1328 = vld [vmem:[%s1207 + $0x170] sm:$0xf]
        %v1329 = vld [vmem:[%s1207 + $0x174] sm:$0xf]
        %v1330 = vld [vmem:[%s1207 + $0x178] sm:$0xf]
        %v1331 = vld [vmem:[%s1207 + $0x17c] sm:$0xf]
        %v1332 = vld [vmem:[%s1207 + $0x180] sm:$0xf]
        %v1333 = vld [vmem:[%s1207 + $0x184] sm:$0xf]
        %v1334 = vld [vmem:[%s1207 + $0x188] sm:$0xf]
        %v1335 = vld [vmem:[%s1207 + $0x18c] sm:$0xf]
        %v1336 = vld [vmem:[%s1207 + $0x190] sm:$0xf]
        %v1337 = vld [vmem:[%s1207 + $0x194] sm:$0xf]
        %v1338 = vld [vmem:[%s1207 + $0x198] sm:$0xf]
        %v1339 = vld [vmem:[%s1207 + $0x19c] sm:$0xf]
        %v1340 = vld [vmem:[%s1207 + $0x1a0] sm:$0xf]
        %v1341 = vld [vmem:[%s1207 + $0x1a4] sm:$0xf]
        %v1342 = vld [vmem:[%s1207 + $0x1a8] sm:$0xf]
        %v1343 = vld [vmem:[%s1207 + $0x1ac] sm:$0xf]
        %v1344 = vld [vmem:[%s1207 + $0x1b0] sm:$0xf]
        %v1345 = vld [vmem:[%s1207 + $0x1b4] sm:$0xf]
        %v1346 = vld [vmem:[%s1207 + $0x1b8] sm:$0xf]
        %v1347 = vld [vmem:[%s1207 + $0x1bc] sm:$0xf]
        %v1348 = vld [vmem:[%s1207 + $0x1c0] sm:$0xf]
        %v1349 = vld [vmem:[%s1207 + $0x1c4] sm:$0xf]
        %v1350 = vld [vmem:[%s1207 + $0x1c8] sm:$0xf]
        %v1351 = vld [vmem:[%s1207 + $0x1cc] sm:$0xf]
        %v1352 = vld [vmem:[%s1207 + $0x1d0] sm:$0xf]
        %v1353 = vld [vmem:[%s1207 + $0x1d4] sm:$0xf]
        %v1354 = vld [vmem:[%s1207 + $0x1d8] sm:$0xf]
        %v1355 = vld [vmem:[%s1207 + $0x1dc] sm:$0xf]
        %v1356 = vld [vmem:[%s1207 + $0x1e0] sm:$0xf]
        %v1357 = vld [vmem:[%s1207 + $0x1e4] sm:$0xf]
        %v1358 = vld [vmem:[%s1207 + $0x1e8] sm:$0xf]
        %v1359 = vld [vmem:[%s1207 + $0x1ec] sm:$0xf]
        %v1360 = vld [vmem:[%s1207 + $0x1f0] sm:$0xf]
        %v1361 = vld [vmem:[%s1207 + $0x1f4] sm:$0xf]
        %v1362 = vld [vmem:[%s1207 + $0x1f8] sm:$0xf]
        %v1363 = vld [vmem:[%s1207 + $0x1fc] sm:$0xf]
        %v1364 = vld [vmem:[%s1207 + $0x200] sm:$0xf]
        %v1365 = vld [vmem:[%s1207 + $0x204] sm:$0xf]
        %v1366 = vld [vmem:[%s1207 + $0x208] sm:$0xf]
        %v1367 = vld [vmem:[%s1207 + $0x20c] sm:$0xf]
        %v1368 = vld [vmem:[%s1207 + $0x210] sm:$0xf]
        %v1369 = vld [vmem:[%s1207 + $0x214] sm:$0xf]
        %v1370 = vld [vmem:[%s1207 + $0x218] sm:$0xf]
        %v1371 = vld [vmem:[%s1207 + $0x21c] sm:$0xf]
        %v1372 = vld [vmem:[%s1207 + $0x220] sm:$0xf]
        %v1373 = vld [vmem:[%s1207 + $0x224] sm:$0xf]
        %v1374 = vld [vmem:[%s1207 + $0x228] sm:$0xf]
        %v1375 = vld [vmem:[%s1207 + $0x22c] sm:$0xf]
        %v1376 = vld [vmem:[%s1207 + $0x230] sm:$0xf]
        %v1377 = vld [vmem:[%s1207 + $0x234] sm:$0xf]
        %v1378 = vld [vmem:[%s1207 + $0x238] sm:$0xf]
        %v1379 = vld [vmem:[%s1207 + $0x23c] sm:$0xf]
        %v1380 = vld [vmem:[%s1207 + $0x240] sm:$0xf]
        %v1381 = vld [vmem:[%s1207 + $0x244] sm:$0xf]
        %v1382 = vld [vmem:[%s1207 + $0x248] sm:$0xf]
        %v1383 = vld [vmem:[%s1207 + $0x24c] sm:$0xf]
        %v1384 = vld [vmem:[%s1207 + $0x250] sm:$0xf]
        %v1385 = vld [vmem:[%s1207 + $0x254] sm:$0xf]
        %v1386 = vld [vmem:[%s1207 + $0x258] sm:$0xf]
        %v1387 = vld [vmem:[%s1207 + $0x25c] sm:$0xf]
        %v1388 = vld [vmem:[%s1207 + $0x260] sm:$0xf]
        %v1389 = vld [vmem:[%s1207 + $0x264] sm:$0xf]
        %v1390 = vld [vmem:[%s1207 + $0x268] sm:$0xf]
        %v1391 = vld [vmem:[%s1207 + $0x26c] sm:$0xf]
        %v1392 = vld [vmem:[%s1207 + $0x270] sm:$0xf]
        %v1393 = vld [vmem:[%s1207 + $0x274] sm:$0xf]
        %v1394 = vld [vmem:[%s1207 + $0x278] sm:$0xf]
        %v1395 = vld [vmem:[%s1207 + $0x27c] sm:$0xf]
        %v1396 = vld [vmem:[%s1207 + $0x280] sm:$0xf]
        %v1397 = vld [vmem:[%s1207 + $0x284] sm:$0xf]
        %v1398 = vld [vmem:[%s1207 + $0x288] sm:$0xf]
        %v1399 = vld [vmem:[%s1207 + $0x28c] sm:$0xf]
        %v1400 = vld [vmem:[%s1207 + $0x290] sm:$0xf]
        %v1401 = vld [vmem:[%s1207 + $0x294] sm:$0xf]
        %v1402 = vld [vmem:[%s1207 + $0x298] sm:$0xf]
        %v1403 = vld [vmem:[%s1207 + $0x29c] sm:$0xf]
        %v1404 = vld [vmem:[%s1207 + $0x2a0] sm:$0xf]
        %v1405 = vld [vmem:[%s1207 + $0x2a4] sm:$0xf]
        %v1406 = vld [vmem:[%s1207 + $0x2a8] sm:$0xf]
        %v1407 = vld [vmem:[%s1207 + $0x2ac] sm:$0xf]
        %v1408 = vld [vmem:[%s1207 + $0x2b0] sm:$0xf]
        %v1409 = vld [vmem:[%s1207 + $0x2b4] sm:$0xf]
        %v1410 = vld [vmem:[%s1207 + $0x2b8] sm:$0xf]
        %v1411 = vld [vmem:[%s1207 + $0x2bc] sm:$0xf]
        %v1412 = vld [vmem:[%s1207 + $0x2c0] sm:$0xf]
        %v1413 = vld [vmem:[%s1207 + $0x2c4] sm:$0xf]
        %v1414 = vld [vmem:[%s1207 + $0x2c8] sm:$0xf]
        %v1415 = vld [vmem:[%s1207 + $0x2cc] sm:$0xf]
        %v1416 = vld [vmem:[%s1207 + $0x2d0] sm:$0xf]
        %v1417 = vld [vmem:[%s1207 + $0x2d4] sm:$0xf]
        %v1418 = vld [vmem:[%s1207 + $0x2d8] sm:$0xf]
        %v1419 = vld [vmem:[%s1207 + $0x2dc] sm:$0xf]
        %v1420 = vld [vmem:[%s1207 + $0x2e0] sm:$0xf]
        %v1421 = vld [vmem:[%s1207 + $0x2e4] sm:$0xf]
        %v1422 = vld [vmem:[%s1207 + $0x2e8] sm:$0xf]
        %v1423 = vld [vmem:[%s1207 + $0x2ec] sm:$0xf]
        %v1424 = vld [vmem:[%s1207 + $0x2f0] sm:$0xf]
        %v1425 = vld [vmem:[%s1207 + $0x2f4] sm:$0xf]
        %v1426 = vld [vmem:[%s1207 + $0x2f8] sm:$0xf]
        %v1427 = vld [vmem:[%s1207 + $0x2fc] sm:$0xf]
        %v1428 = vld [vmem:[%s1207 + $0x300] sm:$0xf]
        %v1429 = vld [vmem:[%s1207 + $0x304] sm:$0xf]
        %v1430 = vld [vmem:[%s1207 + $0x308] sm:$0xf]
        %v1431 = vld [vmem:[%s1207 + $0x30c] sm:$0xf]
        %v1432 = vld [vmem:[%s1207 + $0x310] sm:$0xf]
        %v1433 = vld [vmem:[%s1207 + $0x314] sm:$0xf]
        %v1434 = vld [vmem:[%s1207 + $0x318] sm:$0xf]
        %v1435 = vld [vmem:[%s1207 + $0x31c] sm:$0xf]
        %v1436 = vld [vmem:[%s1207 + $0x320] sm:$0xf]
        %v1437 = vld [vmem:[%s1207 + $0x324] sm:$0xf]
        %v1438 = vld [vmem:[%s1207 + $0x328] sm:$0xf]
        %v1439 = vld [vmem:[%s1207 + $0x32c] sm:$0xf]
        %v1440 = vld [vmem:[%s1207 + $0x330] sm:$0xf]
        %v1441 = vld [vmem:[%s1207 + $0x334] sm:$0xf]
        %v1442 = vld [vmem:[%s1207 + $0x338] sm:$0xf]
        %v1443 = vld [vmem:[%s1207 + $0x33c] sm:$0xf]
        %v1444 = vld [vmem:[%s1207 + $0x340] sm:$0xf]
        %v1445 = vld [vmem:[%s1207 + $0x344] sm:$0xf]
        %v1446 = vld [vmem:[%s1207 + $0x348] sm:$0xf]
        %v1447 = vld [vmem:[%s1207 + $0x34c] sm:$0xf]
        %v1448 = vld [vmem:[%s1207 + $0x350] sm:$0xf]
        %v1449 = vld [vmem:[%s1207 + $0x354] sm:$0xf]
        %v1450 = vld [vmem:[%s1207 + $0x358] sm:$0xf]
        %v1451 = vld [vmem:[%s1207 + $0x35c] sm:$0xf]
        %v1452 = vld [vmem:[%s1207 + $0x360] sm:$0xf]
        %v1453 = vld [vmem:[%s1207 + $0x364] sm:$0xf]
        %v1454 = vld [vmem:[%s1207 + $0x368] sm:$0xf]
        %v1455 = vld [vmem:[%s1207 + $0x36c] sm:$0xf]
        %v1456 = vld [vmem:[%s1207 + $0x370] sm:$0xf]
        %v1457 = vld [vmem:[%s1207 + $0x374] sm:$0xf]
        %v1458 = vld [vmem:[%s1207 + $0x378] sm:$0xf]
        %v1459 = vld [vmem:[%s1207 + $0x37c] sm:$0xf]
        %v1460 = vld [vmem:[%s1207 + $0x380] sm:$0xf]
        %v1461 = vld [vmem:[%s1207 + $0x384] sm:$0xf]
        %v1462 = vld [vmem:[%s1207 + $0x388] sm:$0xf]
        %v1463 = vld [vmem:[%s1207 + $0x38c] sm:$0xf]
        %v1464 = vld [vmem:[%s1207 + $0x390] sm:$0xf]
        %v1465 = vld [vmem:[%s1207 + $0x394] sm:$0xf]
        %v1466 = vld [vmem:[%s1207 + $0x398] sm:$0xf]
        %v1467 = vld [vmem:[%s1207 + $0x39c] sm:$0xf]
        %v1468 = vld [vmem:[%s1207 + $0x3a0] sm:$0xf]
        %v1469 = vld [vmem:[%s1207 + $0x3a4] sm:$0xf]
        %v1470 = vld [vmem:[%s1207 + $0x3a8] sm:$0xf]
        %v1471 = vld [vmem:[%s1207 + $0x3ac] sm:$0xf]
        %v1472 = vld [vmem:[%s1207 + $0x3b0] sm:$0xf]
        %v1473 = vld [vmem:[%s1207 + $0x3b4] sm:$0xf]
        %v1474 = vld [vmem:[%s1207 + $0x3b8] sm:$0xf]
        %v1475 = vld [vmem:[%s1207 + $0x3bc] sm:$0xf]
        %v1476 = vld [vmem:[%s1207 + $0x3c0] sm:$0xf]
        %v1477 = vld [vmem:[%s1207 + $0x3c4] sm:$0xf]
        %v1478 = vld [vmem:[%s1207 + $0x3c8] sm:$0xf]
        %v1479 = vld [vmem:[%s1207 + $0x3cc] sm:$0xf]
        %v1480 = vld [vmem:[%s1207 + $0x3d0] sm:$0xf]
        %v1481 = vld [vmem:[%s1207 + $0x3d4] sm:$0xf]
        %v1482 = vld [vmem:[%s1207 + $0x3d8] sm:$0xf]
        %v1483 = vld [vmem:[%s1207 + $0x3dc] sm:$0xf]
        %v1484 = vld [vmem:[%s1207 + $0x3e0] sm:$0xf]
        %v1485 = vld [vmem:[%s1207 + $0x3e4] sm:$0xf]
        %v1486 = vld [vmem:[%s1207 + $0x3e8] sm:$0xf]
        %v1487 = vld [vmem:[%s1207 + $0x3ec] sm:$0xf]
        %v1488 = vld [vmem:[%s1207 + $0x3f0] sm:$0xf]
        %v1489 = vld [vmem:[%s1207 + $0x3f4] sm:$0xf]
        %v1490 = vld [vmem:[%s1207 + $0x3f8] sm:$0xf]
        %v1491 = vld [vmem:[%s1207 + $0x3fc] sm:$0xf]
        %v1492 = vld [vmem:[%s1] sm:$0xf]
        %v1493 = vld [vmem:[%s1 + $0x4] sm:$0xf]
        %v1494 = vld [vmem:[%s1 + $0x8] sm:$0xf]
        %v1495 = vld [vmem:[%s1 + $0xc] sm:$0x3]
        %v1752 = vunpack.c.l.b16 %v1236
        %v1753 = vunpack.c.l.b16 %v1237
        %v1754 = vunpack.c.l.b16 %v1238
        %v1755 = vunpack.c.l.b16 %v1239
        %v1756 = vunpack.c.l.b16 %v1240
        %v1757 = vunpack.c.l.b16 %v1241
        %v1758 = vunpack.c.l.b16 %v1242
        %v1759 = vunpack.c.l.b16 %v1243
        %v1760 = vunpack.c.l.b16 %v1244
        %v1761 = vunpack.c.l.b16 %v1245
        %v1762 = vunpack.c.l.b16 %v1246
        %v1763 = vunpack.c.l.b16 %v1247
        %v1764 = vunpack.c.l.b16 %v1248
        %v1765 = vunpack.c.l.b16 %v1249
        %v1766 = vunpack.c.l.b16 %v1250
        %v1767 = vunpack.c.l.b16 %v1251
        %v1768 = vunpack.c.l.b16 %v1252
        %v1769 = vunpack.c.l.b16 %v1253
        %v1770 = vunpack.c.l.b16 %v1254
        %v1771 = vunpack.c.l.b16 %v1255
        %v1772 = vunpack.c.l.b16 %v1256
        %v1773 = vunpack.c.l.b16 %v1257
        %v1774 = vunpack.c.l.b16 %v1258
        %v1775 = vunpack.c.l.b16 %v1259
        %v1776 = vunpack.c.l.b16 %v1260
        %v1777 = vunpack.c.l.b16 %v1261
        %v1778 = vunpack.c.l.b16 %v1262
        %v1779 = vunpack.c.l.b16 %v1263
        %v1780 = vunpack.c.l.b16 %v1264
        %v1781 = vunpack.c.l.b16 %v1265
        %v1782 = vunpack.c.l.b16 %v1266
        %v1783 = vunpack.c.l.b16 %v1267
        %v1784 = vunpack.c.l.b16 %v1268
        %v1785 = vunpack.c.l.b16 %v1269
        %v1786 = vunpack.c.l.b16 %v1270
        %v1787 = vunpack.c.l.b16 %v1271
        %v1788 = vunpack.c.l.b16 %v1272
        %v1789 = vunpack.c.l.b16 %v1273
        %v1790 = vunpack.c.l.b16 %v1274
        %v1791 = vunpack.c.l.b16 %v1275
        %v1792 = vunpack.c.l.b16 %v1276
        %v1793 = vunpack.c.l.b16 %v1277
        %v1794 = vunpack.c.l.b16 %v1278
        %v1795 = vunpack.c.l.b16 %v1279
        %v1796 = vunpack.c.l.b16 %v1280
        %v1797 = vunpack.c.l.b16 %v1281
        %v1798 = vunpack.c.l.b16 %v1282
        %v1799 = vunpack.c.l.b16 %v1283
        %v1800 = vunpack.c.l.b16 %v1284
        %v1801 = vunpack.c.l.b16 %v1285
        %v1802 = vunpack.c.l.b16 %v1286
        %v1803 = vunpack.c.l.b16 %v1287
        %v1804 = vunpack.c.l.b16 %v1288
        %v1805 = vunpack.c.l.b16 %v1289
        %v1806 = vunpack.c.l.b16 %v1290
        %v1807 = vunpack.c.l.b16 %v1291
        %v1808 = vunpack.c.l.b16 %v1292
        %v1809 = vunpack.c.l.b16 %v1293
        %v1810 = vunpack.c.l.b16 %v1294
        %v1811 = vunpack.c.l.b16 %v1295
        %v1812 = vunpack.c.l.b16 %v1296
        %v1813 = vunpack.c.l.b16 %v1297
        %v1814 = vunpack.c.l.b16 %v1298
        %v1815 = vunpack.c.l.b16 %v1299
        %v1816 = vunpack.c.l.b16 %v1300
        %v1817 = vunpack.c.l.b16 %v1301
        %v1818 = vunpack.c.l.b16 %v1302
        %v1819 = vunpack.c.l.b16 %v1303
        %v1820 = vunpack.c.l.b16 %v1304
        %v1821 = vunpack.c.l.b16 %v1305
        %v1822 = vunpack.c.l.b16 %v1306
        %v1823 = vunpack.c.l.b16 %v1307
        %v1824 = vunpack.c.l.b16 %v1308
        %v1825 = vunpack.c.l.b16 %v1309
        %v1826 = vunpack.c.l.b16 %v1310
        %v1827 = vunpack.c.l.b16 %v1311
        %v1828 = vunpack.c.l.b16 %v1312
        %v1829 = vunpack.c.l.b16 %v1313
        %v1830 = vunpack.c.l.b16 %v1314
        %v1831 = vunpack.c.l.b16 %v1315
        %v1832 = vunpack.c.l.b16 %v1316
        %v1833 = vunpack.c.l.b16 %v1317
        %v1834 = vunpack.c.l.b16 %v1318
        %v1835 = vunpack.c.l.b16 %v1319
        %v1836 = vunpack.c.l.b16 %v1320
        %v1837 = vunpack.c.l.b16 %v1321
        %v1838 = vunpack.c.l.b16 %v1322
        %v1839 = vunpack.c.l.b16 %v1323
        %v1840 = vunpack.c.l.b16 %v1324
        %v1841 = vunpack.c.l.b16 %v1325
        %v1842 = vunpack.c.l.b16 %v1326
        %v1843 = vunpack.c.l.b16 %v1327
        %v1844 = vunpack.c.l.b16 %v1328
        %v1845 = vunpack.c.l.b16 %v1329
        %v1846 = vunpack.c.l.b16 %v1330
        %v1847 = vunpack.c.l.b16 %v1331
        %v1848 = vunpack.c.l.b16 %v1332
        %v1849 = vunpack.c.l.b16 %v1333
        %v1850 = vunpack.c.l.b16 %v1334
        %v1851 = vunpack.c.l.b16 %v1335
        %v1852 = vunpack.c.l.b16 %v1336
        %v1853 = vunpack.c.l.b16 %v1337
        %v1854 = vunpack.c.l.b16 %v1338
        %v1855 = vunpack.c.l.b16 %v1339
        %v1856 = vunpack.c.l.b16 %v1340
        %v1857 = vunpack.c.l.b16 %v1341
        %v1858 = vunpack.c.l.b16 %v1342
        %v1859 = vunpack.c.l.b16 %v1343
        %v1860 = vunpack.c.l.b16 %v1344
        %v1861 = vunpack.c.l.b16 %v1345
        %v1862 = vunpack.c.l.b16 %v1346
        %v1863 = vunpack.c.l.b16 %v1347
        %v1864 = vunpack.c.l.b16 %v1348
        %v1865 = vunpack.c.l.b16 %v1349
        %v1866 = vunpack.c.l.b16 %v1350
        %v1867 = vunpack.c.l.b16 %v1351
        %v1868 = vunpack.c.l.b16 %v1352
        %v1869 = vunpack.c.l.b16 %v1353
        %v1870 = vunpack.c.l.b16 %v1354
        %v1871 = vunpack.c.l.b16 %v1355
        %v1872 = vunpack.c.l.b16 %v1356
        %v1873 = vunpack.c.l.b16 %v1357
        %v1874 = vunpack.c.l.b16 %v1358
        %v1875 = vunpack.c.l.b16 %v1359
        %v1876 = vunpack.c.l.b16 %v1360
        %v1877 = vunpack.c.l.b16 %v1361
        %v1878 = vunpack.c.l.b16 %v1362
        %v1879 = vunpack.c.l.b16 %v1363
        %v1880 = vunpack.c.l.b16 %v1364
        %v1881 = vunpack.c.l.b16 %v1365
        %v1882 = vunpack.c.l.b16 %v1366
        %v1883 = vunpack.c.l.b16 %v1367
        %v1884 = vunpack.c.l.b16 %v1368
        %v1885 = vunpack.c.l.b16 %v1369
        %v1886 = vunpack.c.l.b16 %v1370
        %v1887 = vunpack.c.l.b16 %v1371
        %v1888 = vunpack.c.l.b16 %v1372
        %v1889 = vunpack.c.l.b16 %v1373
        %v1890 = vunpack.c.l.b16 %v1374
        %v1891 = vunpack.c.l.b16 %v1375
        %v1892 = vunpack.c.l.b16 %v1376
        %v1893 = vunpack.c.l.b16 %v1377
        %v1894 = vunpack.c.l.b16 %v1378
        %v1895 = vunpack.c.l.b16 %v1379
        %v1896 = vunpack.c.l.b16 %v1380
        %v1897 = vunpack.c.l.b16 %v1381
        %v1898 = vunpack.c.l.b16 %v1382
        %v1899 = vunpack.c.l.b16 %v1383
        %v1900 = vunpack.c.l.b16 %v1384
        %v1901 = vunpack.c.l.b16 %v1385
        %v1902 = vunpack.c.l.b16 %v1386
        %v1903 = vunpack.c.l.b16 %v1387
        %v1904 = vunpack.c.l.b16 %v1388
        %v1905 = vunpack.c.l.b16 %v1389
        %v1906 = vunpack.c.l.b16 %v1390
        %v1907 = vunpack.c.l.b16 %v1391
        %v1908 = vunpack.c.l.b16 %v1392
        %v1909 = vunpack.c.l.b16 %v1393
        %v1910 = vunpack.c.l.b16 %v1394
        %v1911 = vunpack.c.l.b16 %v1395
        %v1912 = vunpack.c.l.b16 %v1396
        %v1913 = vunpack.c.l.b16 %v1397
        %v1914 = vunpack.c.l.b16 %v1398
        %v1915 = vunpack.c.l.b16 %v1399
        %v1916 = vunpack.c.l.b16 %v1400
        %v1917 = vunpack.c.l.b16 %v1401
        %v1918 = vunpack.c.l.b16 %v1402
        %v1919 = vunpack.c.l.b16 %v1403
        %v1920 = vunpack.c.l.b16 %v1404
        %v1921 = vunpack.c.l.b16 %v1405
        %v1922 = vunpack.c.l.b16 %v1406
        %v1923 = vunpack.c.l.b16 %v1407
        %v1924 = vunpack.c.l.b16 %v1408
        %v1925 = vunpack.c.l.b16 %v1409
        %v1926 = vunpack.c.l.b16 %v1410
        %v1927 = vunpack.c.l.b16 %v1411
        %v1928 = vunpack.c.l.b16 %v1412
        %v1929 = vunpack.c.l.b16 %v1413
        %v1930 = vunpack.c.l.b16 %v1414
        %v1931 = vunpack.c.l.b16 %v1415
        %v1932 = vunpack.c.l.b16 %v1416
        %v1933 = vunpack.c.l.b16 %v1417
        %v1934 = vunpack.c.l.b16 %v1418
        %v1935 = vunpack.c.l.b16 %v1419
        %v1936 = vunpack.c.l.b16 %v1420
        %v1937 = vunpack.c.l.b16 %v1421
        %v1938 = vunpack.c.l.b16 %v1422
        %v1939 = vunpack.c.l.b16 %v1423
        %v1940 = vunpack.c.l.b16 %v1424
        %v1941 = vunpack.c.l.b16 %v1425
        %v1942 = vunpack.c.l.b16 %v1426
        %v1943 = vunpack.c.l.b16 %v1427
        %v1944 = vunpack.c.l.b16 %v1428
        %v1945 = vunpack.c.l.b16 %v1429
        %v1946 = vunpack.c.l.b16 %v1430
        %v1947 = vunpack.c.l.b16 %v1431
        %v1948 = vunpack.c.l.b16 %v1432
        %v1949 = vunpack.c.l.b16 %v1433
        %v1950 = vunpack.c.l.b16 %v1434
        %v1951 = vunpack.c.l.b16 %v1435
        %v1952 = vunpack.c.l.b16 %v1436
        %v1953 = vunpack.c.l.b16 %v1437
        %v1954 = vunpack.c.l.b16 %v1438
        %v1955 = vunpack.c.l.b16 %v1439
        %v1956 = vunpack.c.l.b16 %v1440
        %v1957 = vunpack.c.l.b16 %v1441
        %v1958 = vunpack.c.l.b16 %v1442
        %v1959 = vunpack.c.l.b16 %v1443
        %v1960 = vunpack.c.l.b16 %v1444
        %v1961 = vunpack.c.l.b16 %v1445
        %v1962 = vunpack.c.l.b16 %v1446
        %v1963 = vunpack.c.l.b16 %v1447
        %v1964 = vunpack.c.l.b16 %v1448
        %v1965 = vunpack.c.l.b16 %v1449
        %v1966 = vunpack.c.l.b16 %v1450
        %v1967 = vunpack.c.l.b16 %v1451
        %v1968 = vunpack.c.l.b16 %v1452
        %v1969 = vunpack.c.l.b16 %v1453
        %v1970 = vunpack.c.l.b16 %v1454
        %v1971 = vunpack.c.l.b16 %v1455
        %v1972 = vunpack.c.l.b16 %v1456
        %v1973 = vunpack.c.l.b16 %v1457
        %v1974 = vunpack.c.l.b16 %v1458
        %v1975 = vunpack.c.l.b16 %v1459
        %v1976 = vunpack.c.l.b16 %v1460
        %v1977 = vunpack.c.l.b16 %v1461
        %v1978 = vunpack.c.l.b16 %v1462
        %v1979 = vunpack.c.l.b16 %v1463
        %v1980 = vunpack.c.l.b16 %v1464
        %v1981 = vunpack.c.l.b16 %v1465
        %v1982 = vunpack.c.l.b16 %v1466
        %v1983 = vunpack.c.l.b16 %v1467
        %v1984 = vunpack.c.l.b16 %v1468
        %v1985 = vunpack.c.l.b16 %v1469
        %v1986 = vunpack.c.l.b16 %v1470
        %v1987 = vunpack.c.l.b16 %v1471
        %v1988 = vunpack.c.l.b16 %v1472
        %v1989 = vunpack.c.l.b16 %v1473
        %v1990 = vunpack.c.l.b16 %v1474
        %v1991 = vunpack.c.l.b16 %v1475
        %v1992 = vunpack.c.l.b16 %v1476
        %v1993 = vunpack.c.l.b16 %v1477
        %v1994 = vunpack.c.l.b16 %v1478
        %v1995 = vunpack.c.l.b16 %v1479
        %v1996 = vunpack.c.l.b16 %v1480
        %v1997 = vunpack.c.l.b16 %v1481
        %v1998 = vunpack.c.l.b16 %v1482
        %v1999 = vunpack.c.l.b16 %v1483
        %v2000 = vunpack.c.l.b16 %v1484
        %v2001 = vunpack.c.l.b16 %v1485
        %v2002 = vunpack.c.l.b16 %v1486
        %v2003 = vunpack.c.l.b16 %v1487
        %v2004 = vunpack.c.l.b16 %v1488
        %v2005 = vunpack.c.l.b16 %v1489
        %v2006 = vunpack.c.l.b16 %v1490
        %v2007 = vunpack.c.l.b16 %v1491
        %v2008 = vpack.c.b16 %v1753, %v1752
        %v2009 = vpack.c.b16 %v1755, %v1754
        %v2010 = vpack.c.b16 %v1757, %v1756
        %v2011 = vpack.c.b16 %v1759, %v1758
        %v2012 = vpack.c.b16 %v1761, %v1760
        %v2013 = vpack.c.b16 %v1763, %v1762
        %v2014 = vpack.c.b16 %v1765, %v1764
        %v2015 = vpack.c.b16 %v1767, %v1766
        %v2016 = vpack.c.b16 %v1769, %v1768
        %v2017 = vpack.c.b16 %v1771, %v1770
        %v2018 = vpack.c.b16 %v1773, %v1772
        %v2019 = vpack.c.b16 %v1775, %v1774
        %v2020 = vpack.c.b16 %v1777, %v1776
        %v2021 = vpack.c.b16 %v1779, %v1778
        %v2022 = vpack.c.b16 %v1781, %v1780
        %v2023 = vpack.c.b16 %v1783, %v1782
        %v2024 = vpack.c.b16 %v1785, %v1784
        %v2025 = vpack.c.b16 %v1787, %v1786
        %v2026 = vpack.c.b16 %v1789, %v1788
        %v2027 = vpack.c.b16 %v1791, %v1790
        %v2028 = vpack.c.b16 %v1793, %v1792
        %v2029 = vpack.c.b16 %v1795, %v1794
        %v2030 = vpack.c.b16 %v1797, %v1796
        %v2031 = vpack.c.b16 %v1799, %v1798
        %v2032 = vpack.c.b16 %v1801, %v1800
        %v2033 = vpack.c.b16 %v1803, %v1802
        %v2034 = vpack.c.b16 %v1805, %v1804
        %v2035 = vpack.c.b16 %v1807, %v1806
        %v2036 = vpack.c.b16 %v1809, %v1808
        %v2037 = vpack.c.b16 %v1811, %v1810
        %v2038 = vpack.c.b16 %v1813, %v1812
        %v2039 = vpack.c.b16 %v1815, %v1814
        %v2040 = vpack.c.b16 %v1817, %v1816
        %v2041 = vpack.c.b16 %v1819, %v1818
        %v2042 = vpack.c.b16 %v1821, %v1820
        %v2043 = vpack.c.b16 %v1823, %v1822
        %v2044 = vpack.c.b16 %v1825, %v1824
        %v2045 = vpack.c.b16 %v1827, %v1826
        %v2046 = vpack.c.b16 %v1829, %v1828
        %v2047 = vpack.c.b16 %v1831, %v1830
        %v2048 = vpack.c.b16 %v1833, %v1832
        %v2049 = vpack.c.b16 %v1835, %v1834
        %v2050 = vpack.c.b16 %v1837, %v1836
        %v2051 = vpack.c.b16 %v1839, %v1838
        %v2052 = vpack.c.b16 %v1841, %v1840
        %v2053 = vpack.c.b16 %v1843, %v1842
        %v2054 = vpack.c.b16 %v1845, %v1844
        %v2055 = vpack.c.b16 %v1847, %v1846
        %v2056 = vpack.c.b16 %v1849, %v1848
        %v2057 = vpack.c.b16 %v1851, %v1850
        %v2058 = vpack.c.b16 %v1853, %v1852
        %v2059 = vpack.c.b16 %v1855, %v1854
        %v2060 = vpack.c.b16 %v1857, %v1856
        %v2061 = vpack.c.b16 %v1859, %v1858
        %v2062 = vpack.c.b16 %v1861, %v1860
        %v2063 = vpack.c.b16 %v1863, %v1862
        %v2064 = vpack.c.b16 %v1865, %v1864
        %v2065 = vpack.c.b16 %v1867, %v1866
        %v2066 = vpack.c.b16 %v1869, %v1868
        %v2067 = vpack.c.b16 %v1871, %v1870
        %v2068 = vpack.c.b16 %v1873, %v1872
        %v2069 = vpack.c.b16 %v1875, %v1874
        %v2070 = vpack.c.b16 %v1877, %v1876
        %v2071 = vpack.c.b16 %v1879, %v1878
        %v2072 = vpack.c.b16 %v1881, %v1880
        %v2073 = vpack.c.b16 %v1883, %v1882
        %v2074 = vpack.c.b16 %v1885, %v1884
        %v2075 = vpack.c.b16 %v1887, %v1886
        %v2076 = vpack.c.b16 %v1889, %v1888
        %v2077 = vpack.c.b16 %v1891, %v1890
        %v2078 = vpack.c.b16 %v1893, %v1892
        %v2079 = vpack.c.b16 %v1895, %v1894
        %v2080 = vpack.c.b16 %v1897, %v1896
        %v2081 = vpack.c.b16 %v1899, %v1898
        %v2082 = vpack.c.b16 %v1901, %v1900
        %v2083 = vpack.c.b16 %v1903, %v1902
        %v2084 = vpack.c.b16 %v1905, %v1904
        %v2085 = vpack.c.b16 %v1907, %v1906
        %v2086 = vpack.c.b16 %v1909, %v1908
        %v2087 = vpack.c.b16 %v1911, %v1910
        %v2088 = vpack.c.b16 %v1913, %v1912
        %v2089 = vpack.c.b16 %v1915, %v1914
        %v2090 = vpack.c.b16 %v1917, %v1916
        %v2091 = vpack.c.b16 %v1919, %v1918
        %v2092 = vpack.c.b16 %v1921, %v1920
        %v2093 = vpack.c.b16 %v1923, %v1922
        %v2094 = vpack.c.b16 %v1925, %v1924
        %v2095 = vpack.c.b16 %v1927, %v1926
        %v2096 = vpack.c.b16 %v1929, %v1928
        %v2097 = vpack.c.b16 %v1931, %v1930
        %v2098 = vpack.c.b16 %v1933, %v1932
        %v2099 = vpack.c.b16 %v1935, %v1934
        %v2100 = vpack.c.b16 %v1937, %v1936
        %v2101 = vpack.c.b16 %v1939, %v1938
        %v2102 = vpack.c.b16 %v1941, %v1940
        %v2103 = vpack.c.b16 %v1943, %v1942
        %v2104 = vpack.c.b16 %v1945, %v1944
        %v2105 = vpack.c.b16 %v1947, %v1946
        %v2106 = vpack.c.b16 %v1949, %v1948
        %v2107 = vpack.c.b16 %v1951, %v1950
        %v2108 = vpack.c.b16 %v1953, %v1952
        %v2109 = vpack.c.b16 %v1955, %v1954
        %v2110 = vpack.c.b16 %v1957, %v1956
        %v2111 = vpack.c.b16 %v1959, %v1958
        %v2112 = vpack.c.b16 %v1961, %v1960
        %v2113 = vpack.c.b16 %v1963, %v1962
        %v2114 = vpack.c.b16 %v1965, %v1964
        %v2115 = vpack.c.b16 %v1967, %v1966
        %v2116 = vpack.c.b16 %v1969, %v1968
        %v2117 = vpack.c.b16 %v1971, %v1970
        %v2118 = vpack.c.b16 %v1973, %v1972
        %v2119 = vpack.c.b16 %v1975, %v1974
        %v2120 = vpack.c.b16 %v1977, %v1976
        %v2121 = vpack.c.b16 %v1979, %v1978
        %v2122 = vpack.c.b16 %v1981, %v1980
        %v2123 = vpack.c.b16 %v1983, %v1982
        %v2124 = vpack.c.b16 %v1985, %v1984
        %v2125 = vpack.c.b16 %v1987, %v1986
        %v2126 = vpack.c.b16 %v1989, %v1988
        %v2127 = vpack.c.b16 %v1991, %v1990
        %v2128 = vpack.c.b16 %v1993, %v1992
        %v2129 = vpack.c.b16 %v1995, %v1994
        %v2130 = vpack.c.b16 %v1997, %v1996
        %v2131 = vpack.c.b16 %v1999, %v1998
        %v2132 = vpack.c.b16 %v2001, %v2000
        %v2133 = vpack.c.b16 %v2003, %v2002
        %v2134 = vpack.c.b16 %v2005, %v2004
        %v2135 = vpack.c.b16 %v2007, %v2006
        %v2140 = vunpack.c.l.b16 %v1492
        %v2141 = vunpack.c.l.b16 %v1493
        %v2142 = vunpack.c.l.b16 %v1494
        %v2143 = vunpack.c.l.b16 %v1495
        %v2144 = vpack.c.b16 %v2141, %v2140
        %v2145 = vpack.c.b16 %v2143, %v2142
        %vm2147 = vcmask 220160
        %v2149 = vsel %vm2147, %v2008, 0
        %v2152 = vsel %vm2147, %v2009, 0
        %v2155 = vsel %vm2147, %v2010, 0
        %v2158 = vsel %vm2147, %v2011, 0
        %v2161 = vsel %vm2147, %v2012, 0
        %v2164 = vsel %vm2147, %v2013, 0
        %v2167 = vsel %vm2147, %v2014, 0
        %v2170 = vsel %vm2147, %v2015, 0
        %v2173 = vsel %vm2147, %v2016, 0
        %v2176 = vsel %vm2147, %v2017, 0
        %v2179 = vsel %vm2147, %v2018, 0
        %v2182 = vsel %vm2147, %v2019, 0
        %v2185 = vsel %vm2147, %v2020, 0
        %v2188 = vsel %vm2147, %v2021, 0
        %v2191 = vsel %vm2147, %v2022, 0
        %v2194 = vsel %vm2147, %v2023, 0
        %v2197 = vsel %vm2147, %v2024, 0
        %v2200 = vsel %vm2147, %v2025, 0
        %v2203 = vsel %vm2147, %v2026, 0
        %v2206 = vsel %vm2147, %v2027, 0
        %v2209 = vsel %vm2147, %v2028, 0
        %v2212 = vsel %vm2147, %v2029, 0
        %v2215 = vsel %vm2147, %v2030, 0
        %v2218 = vsel %vm2147, %v2031, 0
        %v2221 = vsel %vm2147, %v2032, 0
        %v2224 = vsel %vm2147, %v2033, 0
        %v2227 = vsel %vm2147, %v2034, 0
        %v2230 = vsel %vm2147, %v2035, 0
        %v2233 = vsel %vm2147, %v2036, 0
        %v2236 = vsel %vm2147, %v2037, 0
        %v2239 = vsel %vm2147, %v2038, 0
        %v2242 = vsel %vm2147, %v2039, 0
        %v2245 = vsel %vm2147, %v2040, 0
        %v2248 = vsel %vm2147, %v2041, 0
        %v2251 = vsel %vm2147, %v2042, 0
        %v2254 = vsel %vm2147, %v2043, 0
        %v2257 = vsel %vm2147, %v2044, 0
        %v2260 = vsel %vm2147, %v2045, 0
        %v2263 = vsel %vm2147, %v2046, 0
        %v2266 = vsel %vm2147, %v2047, 0
        %v2269 = vsel %vm2147, %v2048, 0
        %v2272 = vsel %vm2147, %v2049, 0
        %v2275 = vsel %vm2147, %v2050, 0
        %v2278 = vsel %vm2147, %v2051, 0
        %v2281 = vsel %vm2147, %v2052, 0
        %v2284 = vsel %vm2147, %v2053, 0
        %v2287 = vsel %vm2147, %v2054, 0
        %v2290 = vsel %vm2147, %v2055, 0
        %v2293 = vsel %vm2147, %v2056, 0
        %v2296 = vsel %vm2147, %v2057, 0
        %v2299 = vsel %vm2147, %v2058, 0
        %v2302 = vsel %vm2147, %v2059, 0
        %v2305 = vsel %vm2147, %v2060, 0
        %v2308 = vsel %vm2147, %v2061, 0
        %v2311 = vsel %vm2147, %v2062, 0
        %v2314 = vsel %vm2147, %v2063, 0
        %v2317 = vsel %vm2147, %v2064, 0
        %v2320 = vsel %vm2147, %v2065, 0
        %v2323 = vsel %vm2147, %v2066, 0
        %v2326 = vsel %vm2147, %v2067, 0
        %v2329 = vsel %vm2147, %v2068, 0
        %v2332 = vsel %vm2147, %v2069, 0
        %v2335 = vsel %vm2147, %v2070, 0
        %v2338 = vsel %vm2147, %v2071, 0
        %v2341 = vsel %vm2147, %v2072, 0
        %v2344 = vsel %vm2147, %v2073, 0
        %v2347 = vsel %vm2147, %v2074, 0
        %v2350 = vsel %vm2147, %v2075, 0
        %v2353 = vsel %vm2147, %v2076, 0
        %v2356 = vsel %vm2147, %v2077, 0
        %v2359 = vsel %vm2147, %v2078, 0
        %v2362 = vsel %vm2147, %v2079, 0
        %v2365 = vsel %vm2147, %v2080, 0
        %v2368 = vsel %vm2147, %v2081, 0
        %v2371 = vsel %vm2147, %v2082, 0
        %v2374 = vsel %vm2147, %v2083, 0
        %v2377 = vsel %vm2147, %v2084, 0
        %v2380 = vsel %vm2147, %v2085, 0
        %v2383 = vsel %vm2147, %v2086, 0
        %v2386 = vsel %vm2147, %v2087, 0
        %v2389 = vsel %vm2147, %v2088, 0
        %v2392 = vsel %vm2147, %v2089, 0
        %v2395 = vsel %vm2147, %v2090, 0
        %v2398 = vsel %vm2147, %v2091, 0
        %v2401 = vsel %vm2147, %v2092, 0
        %v2404 = vsel %vm2147, %v2093, 0
        %v2407 = vsel %vm2147, %v2094, 0
        %v2410 = vsel %vm2147, %v2095, 0
        %v2413 = vsel %vm2147, %v2096, 0
        %v2416 = vsel %vm2147, %v2097, 0
        %v2419 = vsel %vm2147, %v2098, 0
        %v2422 = vsel %vm2147, %v2099, 0
        %v2425 = vsel %vm2147, %v2100, 0
        %v2428 = vsel %vm2147, %v2101, 0
        %v2431 = vsel %vm2147, %v2102, 0
        %v2434 = vsel %vm2147, %v2103, 0
        %v2437 = vsel %vm2147, %v2104, 0
        %v2440 = vsel %vm2147, %v2105, 0
        %v2443 = vsel %vm2147, %v2106, 0
        %v2446 = vsel %vm2147, %v2107, 0
        %v2449 = vsel %vm2147, %v2108, 0
        %v2452 = vsel %vm2147, %v2109, 0
        %v2455 = vsel %vm2147, %v2110, 0
        %v2458 = vsel %vm2147, %v2111, 0
        %v2461 = vsel %vm2147, %v2112, 0
        %v2464 = vsel %vm2147, %v2113, 0
        %v2467 = vsel %vm2147, %v2114, 0
        %v2470 = vsel %vm2147, %v2115, 0
        %v2473 = vsel %vm2147, %v2116, 0
        %v2476 = vsel %vm2147, %v2117, 0
        %v2479 = vsel %vm2147, %v2118, 0
        %v2482 = vsel %vm2147, %v2119, 0
        %v2485 = vsel %vm2147, %v2120, 0
        %v2488 = vsel %vm2147, %v2121, 0
        %v2491 = vsel %vm2147, %v2122, 0
        %v2494 = vsel %vm2147, %v2123, 0
        %v2497 = vsel %vm2147, %v2124, 0
        %v2500 = vsel %vm2147, %v2125, 0
        %v2503 = vsel %vm2147, %v2126, 0
        %v2506 = vsel %vm2147, %v2127, 0
        %v2509 = vsel %vm2147, %v2128, 0
        %v2512 = vsel %vm2147, %v2129, 0
        %v2515 = vsel %vm2147, %v2130, 0
        %v2518 = vsel %vm2147, %v2131, 0
        %v2521 = vsel %vm2147, %v2132, 0
        %v2524 = vsel %vm2147, %v2133, 0
        %v2527 = vsel %vm2147, %v2134, 0
        %v2530 = vsel %vm2147, %v2135, 0
        %vm2532 = vcmask 1044480
        %vm2533 = vcmask 1045504
        %v2534 = vsel %vm2532, 4294967295, 65535
        %v2535 = vsel %vm2533, %v2534, 0
        %v2537 = vand.u32 %v2145, %v2535
        %2539 = vmatprep.subr.bf16.mxu0 0
        %2540 = vmatpush1.bf16.msra.mxu0 %v2144
        %2541 = vmatprep.subr.bf16.mxu0 0
        %2542 = vmatpush1.bf16.msra.mxu0 %v2537
        %2543 = vmatprep.subr.bf16.mxu0 0
        %2544 = vmatpush1.bf16.msra.mxu0 0
        %2545 = vmatprep.subr.bf16.mxu0 0
        %2546 = vmatpush1.bf16.msra.mxu0 0
        %2547 = vmatprep.subr.bf16.mxu0 0
        %2548 = vmatpush1.bf16.msra.mxu0 0
        %2549 = vmatprep.subr.bf16.mxu0 0
        %2550 = vmatpush1.bf16.msra.mxu0 0
        %2551 = vmatprep.subr.bf16.mxu0 0
        %2552 = vmatpush1.bf16.msra.mxu0 0
        %2553 = vmatprep.subr.bf16.mxu0 0
        %2554 = vmatpush1.bf16.msra.mxu0 0
        %2555 = vmatprep.subr.bf16.mxu0 0
        %2556 = vmatpush1.bf16.msra.mxu0 0
        %2557 = vmatprep.subr.bf16.mxu0 0
        %2558 = vmatpush1.bf16.msra.mxu0 0
        %2559 = vmatprep.subr.bf16.mxu0 0
        %2560 = vmatpush1.bf16.msra.mxu0 0
        %2561 = vmatprep.subr.bf16.mxu0 0
        %2562 = vmatpush1.bf16.msra.mxu0 0
        %2563 = vmatprep.subr.bf16.mxu0 0
        %2564 = vmatpush1.bf16.msra.mxu0 0
        %2565 = vmatprep.subr.bf16.mxu0 0
        %2566 = vmatpush1.bf16.msra.mxu0 0
        %2567 = vmatprep.subr.bf16.mxu0 0
        %2568 = vmatpush1.bf16.msra.mxu0 0
        %2569 = vmatprep.subr.bf16.mxu0 0
        %2570 = vmatpush1.bf16.msra.mxu0 0
        %2571 = vmatprep.mubr.bf16.mxu0 0
        %2572 = vmatmul.mubr.bf16.gmra.mrb[0].mxu0 %v2149
        %v2573 = vpop.f32.mrb[0].mxu0
        %v2574 = vadd.f32 0.0, %v2573
        %v2575 = vpop.f32.mrb[0].mxu0
        %v2576 = vpop.f32.mrb[0].mxu0
        %v2577 = vadd.f32 0.0, %v2576
        %v2578 = vpop.f32.mrb[0].mxu0
        %2579 = vmatprep.mubr.bf16.mxu0 0
        %2580 = vmatmul.mubr.bf16.gmra.mrb[0].mxu0 %v2152
        %v2581 = vpop.f32.mrb[0].mxu0
        %v2582 = vadd.f32 0.0, %v2581
        %v2583 = vpop.f32.mrb[0].mxu0
        %v2584 = vpop.f32.mrb[0].mxu0
        %v2585 = vadd.f32 0.0, %v2584
        %v2586 = vpop.f32.mrb[0].mxu0
        %2587 = vmatprep.mubr.bf16.mxu0 0
        %2588 = vmatmul.mubr.bf16.gmra.mrb[0].mxu0 %v2155
        %v2589 = vpop.f32.mrb[0].mxu0
        %v2590 = vadd.f32 0.0, %v2589
        %v2591 = vpop.f32.mrb[0].mxu0
        %v2592 = vpop.f32.mrb[0].mxu0
        %v2593 = vadd.f32 0.0, %v2592
        %v2594 = vpop.f32.mrb[0].mxu0
        %2595 = vmatprep.mubr.bf16.mxu0 0
        %2596 = vmatmul.mubr.bf16.gmra.mrb[0].mxu0 %v2158
        %v2597 = vpop.f32.mrb[0].mxu0
        %v2598 = vadd.f32 0.0, %v2597
        %v2599 = vpop.f32.mrb[0].mxu0
        %v2600 = vpop.f32.mrb[0].mxu0
        %v2601 = vadd.f32 0.0, %v2600
        %v2602 = vpop.f32.mrb[0].mxu0
        %2603 = vmatprep.mubr.bf16.mxu0 0
        %2604 = vmatmul.mubr.bf16.gmra.mrb[0].mxu0 %v2161
        %v2605 = vpop.f32.mrb[0].mxu0
        %v2606 = vadd.f32 0.0, %v2605
        %v2607 = vpop.f32.mrb[0].mxu0
        %v2608 = vpop.f32.mrb[0].mxu0
        %v2609 = vadd.f32 0.0, %v2608
        %v2610 = vpop.f32.mrb[0].mxu0
        %2611 = vmatprep.mubr.bf16.mxu0 0
        %2612 = vmatmul.mubr.bf16.gmra.mrb[0].mxu0 %v2164
        %v2613 = vpop.f32.mrb[0].mxu0
        %v2614 = vadd.f32 0.0, %v2613
        %v2615 = vpop.f32.mrb[0].mxu0
        %v2616 = vpop.f32.mrb[0].mxu0
        %v2617 = vadd.f32 0.0, %v2616
        %v2618 = vpop.f32.mrb[0].mxu0
        %2619 = vmatprep.mubr.bf16.mxu0 0
        %2620 = vmatmul.mubr.bf16.gmra.mrb[0].mxu0 %v2167
        %v2621 = vpop.f32.mrb[0].mxu0
        %v2622 = vadd.f32 0.0, %v2621
        %v2623 = vpop.f32.mrb[0].mxu0
        %v2624 = vpop.f32.mrb[0].mxu0
        %v2625 = vadd.f32 0.0, %v2624
        %v2626 = vpop.f32.mrb[0].mxu0
        %2627 = vmatprep.mubr.bf16.mxu0 0
        %2628 = vmatmul.mubr.bf16.gmra.mrb[0].mxu0 %v2170
        %v2629 = vpop.f32.mrb[0].mxu0
        %v2630 = vadd.f32 0.0, %v2629
        %v2631 = vpop.f32.mrb[0].mxu0
        %v2632 = vpop.f32.mrb[0].mxu0
        %v2633 = vadd.f32 0.0, %v2632
        %v2634 = vpop.f32.mrb[0].mxu0
        %2635 = vmatprep.mubr.bf16.mxu0 0
        %2636 = vmatmul.mubr.bf16.gmra.mrb[0].mxu0 %v2173
        %v2637 = vpop.f32.mrb[0].mxu0
        %v2638 = vadd.f32 0.0, %v2637
        %v2639 = vpop.f32.mrb[0].mxu0
        %v2640 = vpop.f32.mrb[0].mxu0
        %v2641 = vadd.f32 0.0, %v2640
        %v2642 = vpop.f32.mrb[0].mxu0
        %2643 = vmatprep.mubr.bf16.mxu0 0
        %2644 = vmatmul.mubr.bf16.gmra.mrb[0].mxu0 %v2176
        %v2645 = vpop.f32.mrb[0].mxu0
        %v2646 = vadd.f32 0.0, %v2645
        %v2647 = vpop.f32.mrb[0].mxu0
        %v2648 = vpop.f32.mrb[0].mxu0
        %v2649 = vadd.f32 0.0, %v2648
        %v2650 = vpop.f32.mrb[0].mxu0
        %2651 = vmatprep.mubr.bf16.mxu0 0
        %2652 = vmatmul.mubr.bf16.gmra.mrb[0].mxu0 %v2179
        %v2653 = vpop.f32.mrb[0].mxu0
        %v2654 = vadd.f32 0.0, %v2653
        %v2655 = vpop.f32.mrb[0].mxu0
        %v2656 = vpop.f32.mrb[0].mxu0
        %v2657 = vadd.f32 0.0, %v2656
        %v2658 = vpop.f32.mrb[0].mxu0
        %2659 = vmatprep.mubr.bf16.mxu0 0
        %2660 = vmatmul.mubr.bf16.gmra.mrb[0].mxu0 %v2182
        %v2661 = vpop.f32.mrb[0].mxu0
        %v2662 = vadd.f32 0.0, %v2661
        %v2663 = vpop.f32.mrb[0].mxu0
        %v2664 = vpop.f32.mrb[0].mxu0
        %v2665 = vadd.f32 0.0, %v2664
        %v2666 = vpop.f32.mrb[0].mxu0
        %2667 = vmatprep.mubr.bf16.mxu0 0
        %2668 = vmatmul.mubr.bf16.gmra.mrb[0].mxu0 %v2185
        %v2669 = vpop.f32.mrb[0].mxu0
        %v2670 = vadd.f32 0.0, %v2669
        %v2671 = vpop.f32.mrb[0].mxu0
        %v2672 = vpop.f32.mrb[0].mxu0
        %v2673 = vadd.f32 0.0, %v2672
        %v2674 = vpop.f32.mrb[0].mxu0
        %2675 = vmatprep.mubr.bf16.mxu0 0
        %2676 = vmatmul.mubr.bf16.gmra.mrb[0].mxu0 %v2188
        %v2677 = vpop.f32.mrb[0].mxu0
        %v2678 = vadd.f32 0.0, %v2677
        %v2679 = vpop.f32.mrb[0].mxu0
        %v2680 = vpop.f32.mrb[0].mxu0
        %v2681 = vadd.f32 0.0, %v2680
        %v2682 = vpop.f32.mrb[0].mxu0
        %2683 = vmatprep.mubr.bf16.mxu0 0
        %2684 = vmatmul.mubr.bf16.gmra.mrb[0].mxu0 %v2191
        %v2685 = vpop.f32.mrb[0].mxu0
        %v2686 = vadd.f32 0.0, %v2685
        %v2687 = vpop.f32.mrb[0].mxu0
        %v2688 = vpop.f32.mrb[0].mxu0
        %v2689 = vadd.f32 0.0, %v2688
        %v2690 = vpop.f32.mrb[0].mxu0
        %2691 = vmatprep.mubr.bf16.mxu0 0
        %2692 = vmatmul.mubr.bf16.gmra.mrb[0].mxu0 %v2194
        %v2693 = vpop.f32.mrb[0].mxu0
        %v2694 = vadd.f32 0.0, %v2693
        %v2695 = vpop.f32.mrb[0].mxu0
        %v2696 = vpop.f32.mrb[0].mxu0
        %v2697 = vadd.f32 0.0, %v2696
        %v2698 = vpop.f32.mrb[0].mxu0
        %2699 = vmatprep.mubr.bf16.mxu0 0
        %2700 = vmatmul.mubr.bf16.gmra.mrb[0].mxu0 %v2197
        %v2701 = vpop.f32.mrb[0].mxu0
        %v2702 = vadd.f32 0.0, %v2701
        %v2703 = vpop.f32.mrb[0].mxu0
        %v2704 = vpop.f32.mrb[0].mxu0
        %v2705 = vadd.f32 0.0, %v2704
        %v2706 = vpop.f32.mrb[0].mxu0
        %2707 = vmatprep.mubr.bf16.mxu0 0
        %2708 = vmatmul.mubr.bf16.gmra.mrb[0].mxu0 %v2200
        %v2709 = vpop.f32.mrb[0].mxu0
        %v2710 = vadd.f32 0.0, %v2709
        %v2711 = vpop.f32.mrb[0].mxu0
        %v2712 = vpop.f32.mrb[0].mxu0
        %v2713 = vadd.f32 0.0, %v2712
        %v2714 = vpop.f32.mrb[0].mxu0
        %2715 = vmatprep.mubr.bf16.mxu0 0
        %2716 = vmatmul.mubr.bf16.gmra.mrb[0].mxu0 %v2203
        %v2717 = vpop.f32.mrb[0].mxu0
        %v2718 = vadd.f32 0.0, %v2717
        %v2719 = vpop.f32.mrb[0].mxu0
        %v2720 = vpop.f32.mrb[0].mxu0
        %v2721 = vadd.f32 0.0, %v2720
        %v2722 = vpop.f32.mrb[0].mxu0
        %2723 = vmatprep.mubr.bf16.mxu0 0
        %2724 = vmatmul.mubr.bf16.gmra.mrb[0].mxu0 %v2206
        %v2725 = vpop.f32.mrb[0].mxu0
        %v2726 = vadd.f32 0.0, %v2725
        %v2727 = vpop.f32.mrb[0].mxu0
        %v2728 = vpop.f32.mrb[0].mxu0
        %v2729 = vadd.f32 0.0, %v2728
        %v2730 = vpop.f32.mrb[0].mxu0
        %2731 = vmatprep.mubr.bf16.mxu0 0
        %2732 = vmatmul.mubr.bf16.gmra.mrb[0].mxu0 %v2209
        %v2733 = vpop.f32.mrb[0].mxu0
        %v2734 = vadd.f32 0.0, %v2733
        %v2735 = vpop.f32.mrb[0].mxu0
        %v2736 = vpop.f32.mrb[0].mxu0
        %v2737 = vadd.f32 0.0, %v2736
        %v2738 = vpop.f32.mrb[0].mxu0
        %2739 = vmatprep.mubr.bf16.mxu0 0
        %2740 = vmatmul.mubr.bf16.gmra.mrb[0].mxu0 %v2212
        %v2741 = vpop.f32.mrb[0].mxu0
        %v2742 = vadd.f32 0.0, %v2741
        %v2743 = vpop.f32.mrb[0].mxu0
        %v2744 = vpop.f32.mrb[0].mxu0
        %v2745 = vadd.f32 0.0, %v2744
        %v2746 = vpop.f32.mrb[0].mxu0
        %2747 = vmatprep.mubr.bf16.mxu0 0
        %2748 = vmatmul.mubr.bf16.gmra.mrb[0].mxu0 %v2215
        %v2749 = vpop.f32.mrb[0].mxu0
        %v2750 = vadd.f32 0.0, %v2749
        %v2751 = vpop.f32.mrb[0].mxu0
        %v2752 = vpop.f32.mrb[0].mxu0
        %v2753 = vadd.f32 0.0, %v2752
        %v2754 = vpop.f32.mrb[0].mxu0
        %2755 = vmatprep.mubr.bf16.mxu0 0
        %2756 = vmatmul.mubr.bf16.gmra.mrb[0].mxu0 %v2218
        %v2757 = vpop.f32.mrb[0].mxu0
        %v2758 = vadd.f32 0.0, %v2757
        %v2759 = vpop.f32.mrb[0].mxu0
        %v2760 = vpop.f32.mrb[0].mxu0
        %v2761 = vadd.f32 0.0, %v2760
        %v2762 = vpop.f32.mrb[0].mxu0
        %2763 = vmatprep.mubr.bf16.mxu0 0
        %2764 = vmatmul.mubr.bf16.gmra.mrb[0].mxu0 %v2221
        %v2765 = vpop.f32.mrb[0].mxu0
        %v2766 = vadd.f32 0.0, %v2765
        %v2767 = vpop.f32.mrb[0].mxu0
        %v2768 = vpop.f32.mrb[0].mxu0
        %v2769 = vadd.f32 0.0, %v2768
        %v2770 = vpop.f32.mrb[0].mxu0
        %2771 = vmatprep.mubr.bf16.mxu0 0
        %2772 = vmatmul.mubr.bf16.gmra.mrb[0].mxu0 %v2224
        %v2773 = vpop.f32.mrb[0].mxu0
        %v2774 = vadd.f32 0.0, %v2773
        %v2775 = vpop.f32.mrb[0].mxu0
        %v2776 = vpop.f32.mrb[0].mxu0
        %v2777 = vadd.f32 0.0, %v2776
        %v2778 = vpop.f32.mrb[0].mxu0
        %2779 = vmatprep.mubr.bf16.mxu0 0
        %2780 = vmatmul.mubr.bf16.gmra.mrb[0].mxu0 %v2227
        %v2781 = vpop.f32.mrb[0].mxu0
        %v2782 = vadd.f32 0.0, %v2781
        %v2783 = vpop.f32.mrb[0].mxu0
        %v2784 = vpop.f32.mrb[0].mxu0
        %v2785 = vadd.f32 0.0, %v2784
        %v2786 = vpop.f32.mrb[0].mxu0
        %2787 = vmatprep.mubr.bf16.mxu0 0
        %2788 = vmatmul.mubr.bf16.gmra.mrb[0].mxu0 %v2230
        %v2789 = vpop.f32.mrb[0].mxu0
        %v2790 = vadd.f32 0.0, %v2789
        %v2791 = vpop.f32.mrb[0].mxu0
        %v2792 = vpop.f32.mrb[0].mxu0
        %v2793 = vadd.f32 0.0, %v2792
        %v2794 = vpop.f32.mrb[0].mxu0
        %2795 = vmatprep.mubr.bf16.mxu0 0
        %2796 = vmatmul.mubr.bf16.gmra.mrb[0].mxu0 %v2233
        %v2797 = vpop.f32.mrb[0].mxu0
        %v2798 = vadd.f32 0.0, %v2797
        %v2799 = vpop.f32.mrb[0].mxu0
        %v2800 = vpop.f32.mrb[0].mxu0
        %v2801 = vadd.f32 0.0, %v2800
        %v2802 = vpop.f32.mrb[0].mxu0
        %2803 = vmatprep.mubr.bf16.mxu0 0
        %2804 = vmatmul.mubr.bf16.gmra.mrb[0].mxu0 %v2236
        %v2805 = vpop.f32.mrb[0].mxu0
        %v2806 = vadd.f32 0.0, %v2805
        %v2807 = vpop.f32.mrb[0].mxu0
        %v2808 = vpop.f32.mrb[0].mxu0
        %v2809 = vadd.f32 0.0, %v2808
        %v2810 = vpop.f32.mrb[0].mxu0
        %2811 = vmatprep.mubr.bf16.mxu0 0
        %2812 = vmatmul.mubr.bf16.gmra.mrb[0].mxu0 %v2239
        %v2813 = vpop.f32.mrb[0].mxu0
        %v2814 = vadd.f32 0.0, %v2813
        %v2815 = vpop.f32.mrb[0].mxu0
        %v2816 = vpop.f32.mrb[0].mxu0
        %v2817 = vadd.f32 0.0, %v2816
        %v2818 = vpop.f32.mrb[0].mxu0
        %2819 = vmatprep.mubr.bf16.mxu0 0
        %2820 = vmatmul.mubr.bf16.gmra.mrb[0].mxu0 %v2242
        %v2821 = vpop.f32.mrb[0].mxu0
        %v2822 = vadd.f32 0.0, %v2821
        %v2823 = vpop.f32.mrb[0].mxu0
        %v2824 = vpop.f32.mrb[0].mxu0
        %v2825 = vadd.f32 0.0, %v2824
        %v2826 = vpop.f32.mrb[0].mxu0
        %2827 = vmatprep.mubr.bf16.mxu0 0
        %2828 = vmatmul.mubr.bf16.gmra.mrb[0].mxu0 %v2245
        %v2829 = vpop.f32.mrb[0].mxu0
        %v2830 = vadd.f32 0.0, %v2829
        %v2831 = vpop.f32.mrb[0].mxu0
        %v2832 = vpop.f32.mrb[0].mxu0
        %v2833 = vadd.f32 0.0, %v2832
        %v2834 = vpop.f32.mrb[0].mxu0
        %2835 = vmatprep.mubr.bf16.mxu0 0
        %2836 = vmatmul.mubr.bf16.gmra.mrb[0].mxu0 %v2248
        %v2837 = vpop.f32.mrb[0].mxu0
        %v2838 = vadd.f32 0.0, %v2837
        %v2839 = vpop.f32.mrb[0].mxu0
        %v2840 = vpop.f32.mrb[0].mxu0
        %v2841 = vadd.f32 0.0, %v2840
        %v2842 = vpop.f32.mrb[0].mxu0
        %2843 = vmatprep.mubr.bf16.mxu0 0
        %2844 = vmatmul.mubr.bf16.gmra.mrb[0].mxu0 %v2251
        %v2845 = vpop.f32.mrb[0].mxu0
        %v2846 = vadd.f32 0.0, %v2845
        %v2847 = vpop.f32.mrb[0].mxu0
        %v2848 = vpop.f32.mrb[0].mxu0
        %v2849 = vadd.f32 0.0, %v2848
        %v2850 = vpop.f32.mrb[0].mxu0
        %2851 = vmatprep.mubr.bf16.mxu0 0
        %2852 = vmatmul.mubr.bf16.gmra.mrb[0].mxu0 %v2254
        %v2853 = vpop.f32.mrb[0].mxu0
        %v2854 = vadd.f32 0.0, %v2853
        %v2855 = vpop.f32.mrb[0].mxu0
        %v2856 = vpop.f32.mrb[0].mxu0
        %v2857 = vadd.f32 0.0, %v2856
        %v2858 = vpop.f32.mrb[0].mxu0
        %2859 = vmatprep.mubr.bf16.mxu0 0
        %2860 = vmatmul.mubr.bf16.gmra.mrb[0].mxu0 %v2257
        %v2861 = vpop.f32.mrb[0].mxu0
        %v2862 = vadd.f32 0.0, %v2861
        %v2863 = vpop.f32.mrb[0].mxu0
        %v2864 = vpop.f32.mrb[0].mxu0
        %v2865 = vadd.f32 0.0, %v2864
        %v2866 = vpop.f32.mrb[0].mxu0
        %2867 = vmatprep.mubr.bf16.mxu0 0
        %2868 = vmatmul.mubr.bf16.gmra.mrb[0].mxu0 %v2260
        %v2869 = vpop.f32.mrb[0].mxu0
        %v2870 = vadd.f32 0.0, %v2869
        %v2871 = vpop.f32.mrb[0].mxu0
        %v2872 = vpop.f32.mrb[0].mxu0
        %v2873 = vadd.f32 0.0, %v2872
        %v2874 = vpop.f32.mrb[0].mxu0
        %2875 = vmatprep.mubr.bf16.mxu0 0
        %2876 = vmatmul.mubr.bf16.gmra.mrb[0].mxu0 %v2263
        %v2877 = vpop.f32.mrb[0].mxu0
        %v2878 = vadd.f32 0.0, %v2877
        %v2879 = vpop.f32.mrb[0].mxu0
        %v2880 = vpop.f32.mrb[0].mxu0
        %v2881 = vadd.f32 0.0, %v2880
        %v2882 = vpop.f32.mrb[0].mxu0
        %2883 = vmatprep.mubr.bf16.mxu0 0
        %2884 = vmatmul.mubr.bf16.gmra.mrb[0].mxu0 %v2266
        %v2885 = vpop.f32.mrb[0].mxu0
        %v2886 = vadd.f32 0.0, %v2885
        %v2887 = vpop.f32.mrb[0].mxu0
        %v2888 = vpop.f32.mrb[0].mxu0
        %v2889 = vadd.f32 0.0, %v2888
        %v2890 = vpop.f32.mrb[0].mxu0
        %2891 = vmatprep.mubr.bf16.mxu0 0
        %2892 = vmatmul.mubr.bf16.gmra.mrb[0].mxu0 %v2269
        %v2893 = vpop.f32.mrb[0].mxu0
        %v2894 = vadd.f32 0.0, %v2893
        %v2895 = vpop.f32.mrb[0].mxu0
        %v2896 = vpop.f32.mrb[0].mxu0
        %v2897 = vadd.f32 0.0, %v2896
        %v2898 = vpop.f32.mrb[0].mxu0
        %2899 = vmatprep.mubr.bf16.mxu0 0
        %2900 = vmatmul.mubr.bf16.gmra.mrb[0].mxu0 %v2272
        %v2901 = vpop.f32.mrb[0].mxu0
        %v2902 = vadd.f32 0.0, %v2901
        %v2903 = vpop.f32.mrb[0].mxu0
        %v2904 = vpop.f32.mrb[0].mxu0
        %v2905 = vadd.f32 0.0, %v2904
        %v2906 = vpop.f32.mrb[0].mxu0
        %2907 = vmatprep.mubr.bf16.mxu0 0
        %2908 = vmatmul.mubr.bf16.gmra.mrb[0].mxu0 %v2275
        %v2909 = vpop.f32.mrb[0].mxu0
        %v2910 = vadd.f32 0.0, %v2909
        %v2911 = vpop.f32.mrb[0].mxu0
        %v2912 = vpop.f32.mrb[0].mxu0
        %v2913 = vadd.f32 0.0, %v2912
        %v2914 = vpop.f32.mrb[0].mxu0
        %2915 = vmatprep.mubr.bf16.mxu0 0
        %2916 = vmatmul.mubr.bf16.gmra.mrb[0].mxu0 %v2278
        %v2917 = vpop.f32.mrb[0].mxu0
        %v2918 = vadd.f32 0.0, %v2917
        %v2919 = vpop.f32.mrb[0].mxu0
        %v2920 = vpop.f32.mrb[0].mxu0
        %v2921 = vadd.f32 0.0, %v2920
        %v2922 = vpop.f32.mrb[0].mxu0
        %2923 = vmatprep.mubr.bf16.mxu0 0
        %2924 = vmatmul.mubr.bf16.gmra.mrb[0].mxu0 %v2281
        %v2925 = vpop.f32.mrb[0].mxu0
        %v2926 = vadd.f32 0.0, %v2925
        %v2927 = vpop.f32.mrb[0].mxu0
        %v2928 = vpop.f32.mrb[0].mxu0
        %v2929 = vadd.f32 0.0, %v2928
        %v2930 = vpop.f32.mrb[0].mxu0
        %2931 = vmatprep.mubr.bf16.mxu0 0
        %2932 = vmatmul.mubr.bf16.gmra.mrb[0].mxu0 %v2284
        %v2933 = vpop.f32.mrb[0].mxu0
        %v2934 = vadd.f32 0.0, %v2933
        %v2935 = vpop.f32.mrb[0].mxu0
        %v2936 = vpop.f32.mrb[0].mxu0
        %v2937 = vadd.f32 0.0, %v2936
        %v2938 = vpop.f32.mrb[0].mxu0
        %2939 = vmatprep.mubr.bf16.mxu0 0
        %2940 = vmatmul.mubr.bf16.gmra.mrb[0].mxu0 %v2287
        %v2941 = vpop.f32.mrb[0].mxu0
        %v2942 = vadd.f32 0.0, %v2941
        %v2943 = vpop.f32.mrb[0].mxu0
        %v2944 = vpop.f32.mrb[0].mxu0
        %v2945 = vadd.f32 0.0, %v2944
        %v2946 = vpop.f32.mrb[0].mxu0
        %2947 = vmatprep.mubr.bf16.mxu0 0
        %2948 = vmatmul.mubr.bf16.gmra.mrb[0].mxu0 %v2290
        %v2949 = vpop.f32.mrb[0].mxu0
        %v2950 = vadd.f32 0.0, %v2949
        %v2951 = vpop.f32.mrb[0].mxu0
        %v2952 = vpop.f32.mrb[0].mxu0
        %v2953 = vadd.f32 0.0, %v2952
        %v2954 = vpop.f32.mrb[0].mxu0
        %2955 = vmatprep.mubr.bf16.mxu0 0
        %2956 = vmatmul.mubr.bf16.gmra.mrb[0].mxu0 %v2293
        %v2957 = vpop.f32.mrb[0].mxu0
        %v2958 = vadd.f32 0.0, %v2957
        %v2959 = vpop.f32.mrb[0].mxu0
        %v2960 = vpop.f32.mrb[0].mxu0
        %v2961 = vadd.f32 0.0, %v2960
        %v2962 = vpop.f32.mrb[0].mxu0
        %2963 = vmatprep.mubr.bf16.mxu0 0
        %2964 = vmatmul.mubr.bf16.gmra.mrb[0].mxu0 %v2296
        %v2965 = vpop.f32.mrb[0].mxu0
        %v2966 = vadd.f32 0.0, %v2965
        %v2967 = vpop.f32.mrb[0].mxu0
        %v2968 = vpop.f32.mrb[0].mxu0
        %v2969 = vadd.f32 0.0, %v2968
        %v2970 = vpop.f32.mrb[0].mxu0
        %2971 = vmatprep.mubr.bf16.mxu0 0
        %2972 = vmatmul.mubr.bf16.gmra.mrb[0].mxu0 %v2299
        %v2973 = vpop.f32.mrb[0].mxu0
        %v2974 = vadd.f32 0.0, %v2973
        %v2975 = vpop.f32.mrb[0].mxu0
        %v2976 = vpop.f32.mrb[0].mxu0
        %v2977 = vadd.f32 0.0, %v2976
        %v2978 = vpop.f32.mrb[0].mxu0
        %2979 = vmatprep.mubr.bf16.mxu0 0
        %2980 = vmatmul.mubr.bf16.gmra.mrb[0].mxu0 %v2302
        %v2981 = vpop.f32.mrb[0].mxu0
        %v2982 = vadd.f32 0.0, %v2981
        %v2983 = vpop.f32.mrb[0].mxu0
        %v2984 = vpop.f32.mrb[0].mxu0
        %v2985 = vadd.f32 0.0, %v2984
        %v2986 = vpop.f32.mrb[0].mxu0
        %2987 = vmatprep.mubr.bf16.mxu0 0
        %2988 = vmatmul.mubr.bf16.gmra.mrb[0].mxu0 %v2305
        %v2989 = vpop.f32.mrb[0].mxu0
        %v2990 = vadd.f32 0.0, %v2989
        %v2991 = vpop.f32.mrb[0].mxu0
        %v2992 = vpop.f32.mrb[0].mxu0
        %v2993 = vadd.f32 0.0, %v2992
        %v2994 = vpop.f32.mrb[0].mxu0
        %2995 = vmatprep.mubr.bf16.mxu0 0
        %2996 = vmatmul.mubr.bf16.gmra.mrb[0].mxu0 %v2308
        %v2997 = vpop.f32.mrb[0].mxu0
        %v2998 = vadd.f32 0.0, %v2997
        %v2999 = vpop.f32.mrb[0].mxu0
        %v3000 = vpop.f32.mrb[0].mxu0
        %v3001 = vadd.f32 0.0, %v3000
        %v3002 = vpop.f32.mrb[0].mxu0
        %3003 = vmatprep.mubr.bf16.mxu0 0
        %3004 = vmatmul.mubr.bf16.gmra.mrb[0].mxu0 %v2311
        %v3005 = vpop.f32.mrb[0].mxu0
        %v3006 = vadd.f32 0.0, %v3005
        %v3007 = vpop.f32.mrb[0].mxu0
        %v3008 = vpop.f32.mrb[0].mxu0
        %v3009 = vadd.f32 0.0, %v3008
        %v3010 = vpop.f32.mrb[0].mxu0
        %3011 = vmatprep.mubr.bf16.mxu0 0
        %3012 = vmatmul.mubr.bf16.gmra.mrb[0].mxu0 %v2314
        %v3013 = vpop.f32.mrb[0].mxu0
        %v3014 = vadd.f32 0.0, %v3013
        %v3015 = vpop.f32.mrb[0].mxu0
        %v3016 = vpop.f32.mrb[0].mxu0
        %v3017 = vadd.f32 0.0, %v3016
        %v3018 = vpop.f32.mrb[0].mxu0
        %3019 = vmatprep.mubr.bf16.mxu0 0
        %3020 = vmatmul.mubr.bf16.gmra.mrb[0].mxu0 %v2317
        %v3021 = vpop.f32.mrb[0].mxu0
        %v3022 = vadd.f32 0.0, %v3021
        %v3023 = vpop.f32.mrb[0].mxu0
        %v3024 = vpop.f32.mrb[0].mxu0
        %v3025 = vadd.f32 0.0, %v3024
        %v3026 = vpop.f32.mrb[0].mxu0
        %3027 = vmatprep.mubr.bf16.mxu0 0
        %3028 = vmatmul.mubr.bf16.gmra.mrb[0].mxu0 %v2320
        %v3029 = vpop.f32.mrb[0].mxu0
        %v3030 = vadd.f32 0.0, %v3029
        %v3031 = vpop.f32.mrb[0].mxu0
        %v3032 = vpop.f32.mrb[0].mxu0
        %v3033 = vadd.f32 0.0, %v3032
        %v3034 = vpop.f32.mrb[0].mxu0
        %3035 = vmatprep.mubr.bf16.mxu0 0
        %3036 = vmatmul.mubr.bf16.gmra.mrb[0].mxu0 %v2323
        %v3037 = vpop.f32.mrb[0].mxu0
        %v3038 = vadd.f32 0.0, %v3037
        %v3039 = vpop.f32.mrb[0].mxu0
        %v3040 = vpop.f32.mrb[0].mxu0
        %v3041 = vadd.f32 0.0, %v3040
        %v3042 = vpop.f32.mrb[0].mxu0
        %3043 = vmatprep.mubr.bf16.mxu0 0
        %3044 = vmatmul.mubr.bf16.gmra.mrb[0].mxu0 %v2326
        %v3045 = vpop.f32.mrb[0].mxu0
        %v3046 = vadd.f32 0.0, %v3045
        %v3047 = vpop.f32.mrb[0].mxu0
        %v3048 = vpop.f32.mrb[0].mxu0
        %v3049 = vadd.f32 0.0, %v3048
        %v3050 = vpop.f32.mrb[0].mxu0
        %3051 = vmatprep.mubr.bf16.mxu0 0
        %3052 = vmatmul.mubr.bf16.gmra.mrb[0].mxu0 %v2329
        %v3053 = vpop.f32.mrb[0].mxu0
        %v3054 = vadd.f32 0.0, %v3053
        %v3055 = vpop.f32.mrb[0].mxu0
        %v3056 = vpop.f32.mrb[0].mxu0
        %v3057 = vadd.f32 0.0, %v3056
        %v3058 = vpop.f32.mrb[0].mxu0
        %3059 = vmatprep.mubr.bf16.mxu0 0
        %3060 = vmatmul.mubr.bf16.gmra.mrb[0].mxu0 %v2332
        %v3061 = vpop.f32.mrb[0].mxu0
        %v3062 = vadd.f32 0.0, %v3061
        %v3063 = vpop.f32.mrb[0].mxu0
        %v3064 = vpop.f32.mrb[0].mxu0
        %v3065 = vadd.f32 0.0, %v3064
        %v3066 = vpop.f32.mrb[0].mxu0
        %3067 = vmatprep.mubr.bf16.mxu0 0
        %3068 = vmatmul.mubr.bf16.gmra.mrb[0].mxu0 %v2335
        %v3069 = vpop.f32.mrb[0].mxu0
        %v3070 = vadd.f32 0.0, %v3069
        %v3071 = vpop.f32.mrb[0].mxu0
        %v3072 = vpop.f32.mrb[0].mxu0
        %v3073 = vadd.f32 0.0, %v3072
        %v3074 = vpop.f32.mrb[0].mxu0
        %3075 = vmatprep.mubr.bf16.mxu0 0
        %3076 = vmatmul.mubr.bf16.gmra.mrb[0].mxu0 %v2338
        %v3077 = vpop.f32.mrb[0].mxu0
        %v3078 = vadd.f32 0.0, %v3077
        %v3079 = vpop.f32.mrb[0].mxu0
        %v3080 = vpop.f32.mrb[0].mxu0
        %v3081 = vadd.f32 0.0, %v3080
        %v3082 = vpop.f32.mrb[0].mxu0
        %3083 = vmatprep.mubr.bf16.mxu0 0
        %3084 = vmatmul.mubr.bf16.gmra.mrb[0].mxu0 %v2341
        %v3085 = vpop.f32.mrb[0].mxu0
        %v3086 = vadd.f32 0.0, %v3085
        %v3087 = vpop.f32.mrb[0].mxu0
        %v3088 = vpop.f32.mrb[0].mxu0
        %v3089 = vadd.f32 0.0, %v3088
        %v3090 = vpop.f32.mrb[0].mxu0
        %3091 = vmatprep.mubr.bf16.mxu0 0
        %3092 = vmatmul.mubr.bf16.gmra.mrb[0].mxu0 %v2344
        %v3093 = vpop.f32.mrb[0].mxu0
        %v3094 = vadd.f32 0.0, %v3093
        %v3095 = vpop.f32.mrb[0].mxu0
        %v3096 = vpop.f32.mrb[0].mxu0
        %v3097 = vadd.f32 0.0, %v3096
        %v3098 = vpop.f32.mrb[0].mxu0
        %3099 = vmatprep.mubr.bf16.mxu0 0
        %3100 = vmatmul.mubr.bf16.gmra.mrb[0].mxu0 %v2347
        %v3101 = vpop.f32.mrb[0].mxu0
        %v3102 = vadd.f32 0.0, %v3101
        %v3103 = vpop.f32.mrb[0].mxu0
        %v3104 = vpop.f32.mrb[0].mxu0
        %v3105 = vadd.f32 0.0, %v3104
        %v3106 = vpop.f32.mrb[0].mxu0
        %3107 = vmatprep.mubr.bf16.mxu0 0
        %3108 = vmatmul.mubr.bf16.gmra.mrb[0].mxu0 %v2350
        %v3109 = vpop.f32.mrb[0].mxu0
        %v3110 = vadd.f32 0.0, %v3109
        %v3111 = vpop.f32.mrb[0].mxu0
        %v3112 = vpop.f32.mrb[0].mxu0
        %v3113 = vadd.f32 0.0, %v3112
        %v3114 = vpop.f32.mrb[0].mxu0
        %3115 = vmatprep.mubr.bf16.mxu0 0
        %3116 = vmatmul.mubr.bf16.gmra.mrb[0].mxu0 %v2353
        %v3117 = vpop.f32.mrb[0].mxu0
        %v3118 = vadd.f32 0.0, %v3117
        %v3119 = vpop.f32.mrb[0].mxu0
        %v3120 = vpop.f32.mrb[0].mxu0
        %v3121 = vadd.f32 0.0, %v3120
        %v3122 = vpop.f32.mrb[0].mxu0
        %3123 = vmatprep.mubr.bf16.mxu0 0
        %3124 = vmatmul.mubr.bf16.gmra.mrb[0].mxu0 %v2356
        %v3125 = vpop.f32.mrb[0].mxu0
        %v3126 = vadd.f32 0.0, %v3125
        %v3127 = vpop.f32.mrb[0].mxu0
        %v3128 = vpop.f32.mrb[0].mxu0
        %v3129 = vadd.f32 0.0, %v3128
        %v3130 = vpop.f32.mrb[0].mxu0
        %3131 = vmatprep.mubr.bf16.mxu0 0
        %3132 = vmatmul.mubr.bf16.gmra.mrb[0].mxu0 %v2359
        %v3133 = vpop.f32.mrb[0].mxu0
        %v3134 = vadd.f32 0.0, %v3133
        %v3135 = vpop.f32.mrb[0].mxu0
        %v3136 = vpop.f32.mrb[0].mxu0
        %v3137 = vadd.f32 0.0, %v3136
        %v3138 = vpop.f32.mrb[0].mxu0
        %3139 = vmatprep.mubr.bf16.mxu0 0
        %3140 = vmatmul.mubr.bf16.gmra.mrb[0].mxu0 %v2362
        %v3141 = vpop.f32.mrb[0].mxu0
        %v3142 = vadd.f32 0.0, %v3141
        %v3143 = vpop.f32.mrb[0].mxu0
        %v3144 = vpop.f32.mrb[0].mxu0
        %v3145 = vadd.f32 0.0, %v3144
        %v3146 = vpop.f32.mrb[0].mxu0
        %3147 = vmatprep.mubr.bf16.mxu0 0
        %3148 = vmatmul.mubr.bf16.gmra.mrb[0].mxu0 %v2365
        %v3149 = vpop.f32.mrb[0].mxu0
        %v3150 = vadd.f32 0.0, %v3149
        %v3151 = vpop.f32.mrb[0].mxu0
        %v3152 = vpop.f32.mrb[0].mxu0
        %v3153 = vadd.f32 0.0, %v3152
        %v3154 = vpop.f32.mrb[0].mxu0
        %3155 = vmatprep.mubr.bf16.mxu0 0
        %3156 = vmatmul.mubr.bf16.gmra.mrb[0].mxu0 %v2368
        %v3157 = vpop.f32.mrb[0].mxu0
        %v3158 = vadd.f32 0.0, %v3157
        %v3159 = vpop.f32.mrb[0].mxu0
        %v3160 = vpop.f32.mrb[0].mxu0
        %v3161 = vadd.f32 0.0, %v3160
        %v3162 = vpop.f32.mrb[0].mxu0
        %3163 = vmatprep.mubr.bf16.mxu0 0
        %3164 = vmatmul.mubr.bf16.gmra.mrb[0].mxu0 %v2371
        %v3165 = vpop.f32.mrb[0].mxu0
        %v3166 = vadd.f32 0.0, %v3165
        %v3167 = vpop.f32.mrb[0].mxu0
        %v3168 = vpop.f32.mrb[0].mxu0
        %v3169 = vadd.f32 0.0, %v3168
        %v3170 = vpop.f32.mrb[0].mxu0
        %3171 = vmatprep.mubr.bf16.mxu0 0
        %3172 = vmatmul.mubr.bf16.gmra.mrb[0].mxu0 %v2374
        %v3173 = vpop.f32.mrb[0].mxu0
        %v3174 = vadd.f32 0.0, %v3173
        %v3175 = vpop.f32.mrb[0].mxu0
        %v3176 = vpop.f32.mrb[0].mxu0
        %v3177 = vadd.f32 0.0, %v3176
        %v3178 = vpop.f32.mrb[0].mxu0
        %3179 = vmatprep.mubr.bf16.mxu0 0
        %3180 = vmatmul.mubr.bf16.gmra.mrb[0].mxu0 %v2377
        %v3181 = vpop.f32.mrb[0].mxu0
        %v3182 = vadd.f32 0.0, %v3181
        %v3183 = vpop.f32.mrb[0].mxu0
        %v3184 = vpop.f32.mrb[0].mxu0
        %v3185 = vadd.f32 0.0, %v3184
        %v3186 = vpop.f32.mrb[0].mxu0
        %3187 = vmatprep.mubr.bf16.mxu0 0
        %3188 = vmatmul.mubr.bf16.gmra.mrb[0].mxu0 %v2380
        %v3189 = vpop.f32.mrb[0].mxu0
        %v3190 = vadd.f32 0.0, %v3189
        %v3191 = vpop.f32.mrb[0].mxu0
        %v3192 = vpop.f32.mrb[0].mxu0
        %v3193 = vadd.f32 0.0, %v3192
        %v3194 = vpop.f32.mrb[0].mxu0
        %3195 = vmatprep.mubr.bf16.mxu0 0
        %3196 = vmatmul.mubr.bf16.gmra.mrb[0].mxu0 %v2383
        %v3197 = vpop.f32.mrb[0].mxu0
        %v3198 = vadd.f32 0.0, %v3197
        %v3199 = vpop.f32.mrb[0].mxu0
        %v3200 = vpop.f32.mrb[0].mxu0
        %v3201 = vadd.f32 0.0, %v3200
        %v3202 = vpop.f32.mrb[0].mxu0
        %3203 = vmatprep.mubr.bf16.mxu0 0
        %3204 = vmatmul.mubr.bf16.gmra.mrb[0].mxu0 %v2386
        %v3205 = vpop.f32.mrb[0].mxu0
        %v3206 = vadd.f32 0.0, %v3205
        %v3207 = vpop.f32.mrb[0].mxu0
        %v3208 = vpop.f32.mrb[0].mxu0
        %v3209 = vadd.f32 0.0, %v3208
        %v3210 = vpop.f32.mrb[0].mxu0
        %3211 = vmatprep.mubr.bf16.mxu0 0
        %3212 = vmatmul.mubr.bf16.gmra.mrb[0].mxu0 %v2389
        %v3213 = vpop.f32.mrb[0].mxu0
        %v3214 = vadd.f32 0.0, %v3213
        %v3215 = vpop.f32.mrb[0].mxu0
        %v3216 = vpop.f32.mrb[0].mxu0
        %v3217 = vadd.f32 0.0, %v3216
        %v3218 = vpop.f32.mrb[0].mxu0
        %3219 = vmatprep.mubr.bf16.mxu0 0
        %3220 = vmatmul.mubr.bf16.gmra.mrb[0].mxu0 %v2392
        %v3221 = vpop.f32.mrb[0].mxu0
        %v3222 = vadd.f32 0.0, %v3221
        %v3223 = vpop.f32.mrb[0].mxu0
        %v3224 = vpop.f32.mrb[0].mxu0
        %v3225 = vadd.f32 0.0, %v3224
        %v3226 = vpop.f32.mrb[0].mxu0
        %3227 = vmatprep.mubr.bf16.mxu0 0
        %3228 = vmatmul.mubr.bf16.gmra.mrb[0].mxu0 %v2395
        %v3229 = vpop.f32.mrb[0].mxu0
        %v3230 = vadd.f32 0.0, %v3229
        %v3231 = vpop.f32.mrb[0].mxu0
        %v3232 = vpop.f32.mrb[0].mxu0
        %v3233 = vadd.f32 0.0, %v3232
        %v3234 = vpop.f32.mrb[0].mxu0
        %3235 = vmatprep.mubr.bf16.mxu0 0
        %3236 = vmatmul.mubr.bf16.gmra.mrb[0].mxu0 %v2398
        %v3237 = vpop.f32.mrb[0].mxu0
        %v3238 = vadd.f32 0.0, %v3237
        %v3239 = vpop.f32.mrb[0].mxu0
        %v3240 = vpop.f32.mrb[0].mxu0
        %v3241 = vadd.f32 0.0, %v3240
        %v3242 = vpop.f32.mrb[0].mxu0
        %3243 = vmatprep.mubr.bf16.mxu0 0
        %3244 = vmatmul.mubr.bf16.gmra.mrb[0].mxu0 %v2401
        %v3245 = vpop.f32.mrb[0].mxu0
        %v3246 = vadd.f32 0.0, %v3245
        %v3247 = vpop.f32.mrb[0].mxu0
        %v3248 = vpop.f32.mrb[0].mxu0
        %v3249 = vadd.f32 0.0, %v3248
        %v3250 = vpop.f32.mrb[0].mxu0
        %3251 = vmatprep.mubr.bf16.mxu0 0
        %3252 = vmatmul.mubr.bf16.gmra.mrb[0].mxu0 %v2404
        %v3253 = vpop.f32.mrb[0].mxu0
        %v3254 = vadd.f32 0.0, %v3253
        %v3255 = vpop.f32.mrb[0].mxu0
        %v3256 = vpop.f32.mrb[0].mxu0
        %v3257 = vadd.f32 0.0, %v3256
        %v3258 = vpop.f32.mrb[0].mxu0
        %3259 = vmatprep.mubr.bf16.mxu0 0
        %3260 = vmatmul.mubr.bf16.gmra.mrb[0].mxu0 %v2407
        %v3261 = vpop.f32.mrb[0].mxu0
        %v3262 = vadd.f32 0.0, %v3261
        %v3263 = vpop.f32.mrb[0].mxu0
        %v3264 = vpop.f32.mrb[0].mxu0
        %v3265 = vadd.f32 0.0, %v3264
        %v3266 = vpop.f32.mrb[0].mxu0
        %3267 = vmatprep.mubr.bf16.mxu0 0
        %3268 = vmatmul.mubr.bf16.gmra.mrb[0].mxu0 %v2410
        %v3269 = vpop.f32.mrb[0].mxu0
        %v3270 = vadd.f32 0.0, %v3269
        %v3271 = vpop.f32.mrb[0].mxu0
        %v3272 = vpop.f32.mrb[0].mxu0
        %v3273 = vadd.f32 0.0, %v3272
        %v3274 = vpop.f32.mrb[0].mxu0
        %3275 = vmatprep.mubr.bf16.mxu0 0
        %3276 = vmatmul.mubr.bf16.gmra.mrb[0].mxu0 %v2413
        %v3277 = vpop.f32.mrb[0].mxu0
        %v3278 = vadd.f32 0.0, %v3277
        %v3279 = vpop.f32.mrb[0].mxu0
        %v3280 = vpop.f32.mrb[0].mxu0
        %v3281 = vadd.f32 0.0, %v3280
        %v3282 = vpop.f32.mrb[0].mxu0
        %3283 = vmatprep.mubr.bf16.mxu0 0
        %3284 = vmatmul.mubr.bf16.gmra.mrb[0].mxu0 %v2416
        %v3285 = vpop.f32.mrb[0].mxu0
        %v3286 = vadd.f32 0.0, %v3285
        %v3287 = vpop.f32.mrb[0].mxu0
        %v3288 = vpop.f32.mrb[0].mxu0
        %v3289 = vadd.f32 0.0, %v3288
        %v3290 = vpop.f32.mrb[0].mxu0
        %3291 = vmatprep.mubr.bf16.mxu0 0
        %3292 = vmatmul.mubr.bf16.gmra.mrb[0].mxu0 %v2419
        %v3293 = vpop.f32.mrb[0].mxu0
        %v3294 = vadd.f32 0.0, %v3293
        %v3295 = vpop.f32.mrb[0].mxu0
        %v3296 = vpop.f32.mrb[0].mxu0
        %v3297 = vadd.f32 0.0, %v3296
        %v3298 = vpop.f32.mrb[0].mxu0
        %3299 = vmatprep.mubr.bf16.mxu0 0
        %3300 = vmatmul.mubr.bf16.gmra.mrb[0].mxu0 %v2422
        %v3301 = vpop.f32.mrb[0].mxu0
        %v3302 = vadd.f32 0.0, %v3301
        %v3303 = vpop.f32.mrb[0].mxu0
        %v3304 = vpop.f32.mrb[0].mxu0
        %v3305 = vadd.f32 0.0, %v3304
        %v3306 = vpop.f32.mrb[0].mxu0
        %3307 = vmatprep.mubr.bf16.mxu0 0
        %3308 = vmatmul.mubr.bf16.gmra.mrb[0].mxu0 %v2425
        %v3309 = vpop.f32.mrb[0].mxu0
        %v3310 = vadd.f32 0.0, %v3309
        %v3311 = vpop.f32.mrb[0].mxu0
        %v3312 = vpop.f32.mrb[0].mxu0
        %v3313 = vadd.f32 0.0, %v3312
        %v3314 = vpop.f32.mrb[0].mxu0
        %3315 = vmatprep.mubr.bf16.mxu0 0
        %3316 = vmatmul.mubr.bf16.gmra.mrb[0].mxu0 %v2428
        %v3317 = vpop.f32.mrb[0].mxu0
        %v3318 = vadd.f32 0.0, %v3317
        %v3319 = vpop.f32.mrb[0].mxu0
        %v3320 = vpop.f32.mrb[0].mxu0
        %v3321 = vadd.f32 0.0, %v3320
        %v3322 = vpop.f32.mrb[0].mxu0
        %3323 = vmatprep.mubr.bf16.mxu0 0
        %3324 = vmatmul.mubr.bf16.gmra.mrb[0].mxu0 %v2431
        %v3325 = vpop.f32.mrb[0].mxu0
        %v3326 = vadd.f32 0.0, %v3325
        %v3327 = vpop.f32.mrb[0].mxu0
        %v3328 = vpop.f32.mrb[0].mxu0
        %v3329 = vadd.f32 0.0, %v3328
        %v3330 = vpop.f32.mrb[0].mxu0
        %3331 = vmatprep.mubr.bf16.mxu0 0
        %3332 = vmatmul.mubr.bf16.gmra.mrb[0].mxu0 %v2434
        %v3333 = vpop.f32.mrb[0].mxu0
        %v3334 = vadd.f32 0.0, %v3333
        %v3335 = vpop.f32.mrb[0].mxu0
        %v3336 = vpop.f32.mrb[0].mxu0
        %v3337 = vadd.f32 0.0, %v3336
        %v3338 = vpop.f32.mrb[0].mxu0
        %3339 = vmatprep.mubr.bf16.mxu0 0
        %3340 = vmatmul.mubr.bf16.gmra.mrb[0].mxu0 %v2437
        %v3341 = vpop.f32.mrb[0].mxu0
        %v3342 = vadd.f32 0.0, %v3341
        %v3343 = vpop.f32.mrb[0].mxu0
        %v3344 = vpop.f32.mrb[0].mxu0
        %v3345 = vadd.f32 0.0, %v3344
        %v3346 = vpop.f32.mrb[0].mxu0
        %3347 = vmatprep.mubr.bf16.mxu0 0
        %3348 = vmatmul.mubr.bf16.gmra.mrb[0].mxu0 %v2440
        %v3349 = vpop.f32.mrb[0].mxu0
        %v3350 = vadd.f32 0.0, %v3349
        %v3351 = vpop.f32.mrb[0].mxu0
        %v3352 = vpop.f32.mrb[0].mxu0
        %v3353 = vadd.f32 0.0, %v3352
        %v3354 = vpop.f32.mrb[0].mxu0
        %3355 = vmatprep.mubr.bf16.mxu0 0
        %3356 = vmatmul.mubr.bf16.gmra.mrb[0].mxu0 %v2443
        %v3357 = vpop.f32.mrb[0].mxu0
        %v3358 = vadd.f32 0.0, %v3357
        %v3359 = vpop.f32.mrb[0].mxu0
        %v3360 = vpop.f32.mrb[0].mxu0
        %v3361 = vadd.f32 0.0, %v3360
        %v3362 = vpop.f32.mrb[0].mxu0
        %3363 = vmatprep.mubr.bf16.mxu0 0
        %3364 = vmatmul.mubr.bf16.gmra.mrb[0].mxu0 %v2446
        %v3365 = vpop.f32.mrb[0].mxu0
        %v3366 = vadd.f32 0.0, %v3365
        %v3367 = vpop.f32.mrb[0].mxu0
        %v3368 = vpop.f32.mrb[0].mxu0
        %v3369 = vadd.f32 0.0, %v3368
        %v3370 = vpop.f32.mrb[0].mxu0
        %3371 = vmatprep.mubr.bf16.mxu0 0
        %3372 = vmatmul.mubr.bf16.gmra.mrb[0].mxu0 %v2449
        %v3373 = vpop.f32.mrb[0].mxu0
        %v3374 = vadd.f32 0.0, %v3373
        %v3375 = vpop.f32.mrb[0].mxu0
        %v3376 = vpop.f32.mrb[0].mxu0
        %v3377 = vadd.f32 0.0, %v3376
        %v3378 = vpop.f32.mrb[0].mxu0
        %3379 = vmatprep.mubr.bf16.mxu0 0
        %3380 = vmatmul.mubr.bf16.gmra.mrb[0].mxu0 %v2452
        %v3381 = vpop.f32.mrb[0].mxu0
        %v3382 = vadd.f32 0.0, %v3381
        %v3383 = vpop.f32.mrb[0].mxu0
        %v3384 = vpop.f32.mrb[0].mxu0
        %v3385 = vadd.f32 0.0, %v3384
        %v3386 = vpop.f32.mrb[0].mxu0
        %3387 = vmatprep.mubr.bf16.mxu0 0
        %3388 = vmatmul.mubr.bf16.gmra.mrb[0].mxu0 %v2455
        %v3389 = vpop.f32.mrb[0].mxu0
        %v3390 = vadd.f32 0.0, %v3389
        %v3391 = vpop.f32.mrb[0].mxu0
        %v3392 = vpop.f32.mrb[0].mxu0
        %v3393 = vadd.f32 0.0, %v3392
        %v3394 = vpop.f32.mrb[0].mxu0
        %3395 = vmatprep.mubr.bf16.mxu0 0
        %3396 = vmatmul.mubr.bf16.gmra.mrb[0].mxu0 %v2458
        %v3397 = vpop.f32.mrb[0].mxu0
        %v3398 = vadd.f32 0.0, %v3397
        %v3399 = vpop.f32.mrb[0].mxu0
        %v3400 = vpop.f32.mrb[0].mxu0
        %v3401 = vadd.f32 0.0, %v3400
        %v3402 = vpop.f32.mrb[0].mxu0
        %3403 = vmatprep.mubr.bf16.mxu0 0
        %3404 = vmatmul.mubr.bf16.gmra.mrb[0].mxu0 %v2461
        %v3405 = vpop.f32.mrb[0].mxu0
        %v3406 = vadd.f32 0.0, %v3405
        %v3407 = vpop.f32.mrb[0].mxu0
        %v3408 = vpop.f32.mrb[0].mxu0
        %v3409 = vadd.f32 0.0, %v3408
        %v3410 = vpop.f32.mrb[0].mxu0
        %3411 = vmatprep.mubr.bf16.mxu0 0
        %3412 = vmatmul.mubr.bf16.gmra.mrb[0].mxu0 %v2464
        %v3413 = vpop.f32.mrb[0].mxu0
        %v3414 = vadd.f32 0.0, %v3413
        %v3415 = vpop.f32.mrb[0].mxu0
        %v3416 = vpop.f32.mrb[0].mxu0
        %v3417 = vadd.f32 0.0, %v3416
        %v3418 = vpop.f32.mrb[0].mxu0
        %3419 = vmatprep.mubr.bf16.mxu0 0
        %3420 = vmatmul.mubr.bf16.gmra.mrb[0].mxu0 %v2467
        %v3421 = vpop.f32.mrb[0].mxu0
        %v3422 = vadd.f32 0.0, %v3421
        %v3423 = vpop.f32.mrb[0].mxu0
        %v3424 = vpop.f32.mrb[0].mxu0
        %v3425 = vadd.f32 0.0, %v3424
        %v3426 = vpop.f32.mrb[0].mxu0
        %3427 = vmatprep.mubr.bf16.mxu0 0
        %3428 = vmatmul.mubr.bf16.gmra.mrb[0].mxu0 %v2470
        %v3429 = vpop.f32.mrb[0].mxu0
        %v3430 = vadd.f32 0.0, %v3429
        %v3431 = vpop.f32.mrb[0].mxu0
        %v3432 = vpop.f32.mrb[0].mxu0
        %v3433 = vadd.f32 0.0, %v3432
        %v3434 = vpop.f32.mrb[0].mxu0
        %3435 = vmatprep.mubr.bf16.mxu0 0
        %3436 = vmatmul.mubr.bf16.gmra.mrb[0].mxu0 %v2473
        %v3437 = vpop.f32.mrb[0].mxu0
        %v3438 = vadd.f32 0.0, %v3437
        %v3439 = vpop.f32.mrb[0].mxu0
        %v3440 = vpop.f32.mrb[0].mxu0
        %v3441 = vadd.f32 0.0, %v3440
        %v3442 = vpop.f32.mrb[0].mxu0
        %3443 = vmatprep.mubr.bf16.mxu0 0
        %3444 = vmatmul.mubr.bf16.gmra.mrb[0].mxu0 %v2476
        %v3445 = vpop.f32.mrb[0].mxu0
        %v3446 = vadd.f32 0.0, %v3445
        %v3447 = vpop.f32.mrb[0].mxu0
        %v3448 = vpop.f32.mrb[0].mxu0
        %v3449 = vadd.f32 0.0, %v3448
        %v3450 = vpop.f32.mrb[0].mxu0
        %3451 = vmatprep.mubr.bf16.mxu0 0
        %3452 = vmatmul.mubr.bf16.gmra.mrb[0].mxu0 %v2479
        %v3453 = vpop.f32.mrb[0].mxu0
        %v3454 = vadd.f32 0.0, %v3453
        %v3455 = vpop.f32.mrb[0].mxu0
        %v3456 = vpop.f32.mrb[0].mxu0
        %v3457 = vadd.f32 0.0, %v3456
        %v3458 = vpop.f32.mrb[0].mxu0
        %3459 = vmatprep.mubr.bf16.mxu0 0
        %3460 = vmatmul.mubr.bf16.gmra.mrb[0].mxu0 %v2482
        %v3461 = vpop.f32.mrb[0].mxu0
        %v3462 = vadd.f32 0.0, %v3461
        %v3463 = vpop.f32.mrb[0].mxu0
        %v3464 = vpop.f32.mrb[0].mxu0
        %v3465 = vadd.f32 0.0, %v3464
        %v3466 = vpop.f32.mrb[0].mxu0
        %3467 = vmatprep.mubr.bf16.mxu0 0
        %3468 = vmatmul.mubr.bf16.gmra.mrb[0].mxu0 %v2485
        %v3469 = vpop.f32.mrb[0].mxu0
        %v3470 = vadd.f32 0.0, %v3469
        %v3471 = vpop.f32.mrb[0].mxu0
        %v3472 = vpop.f32.mrb[0].mxu0
        %v3473 = vadd.f32 0.0, %v3472
        %v3474 = vpop.f32.mrb[0].mxu0
        %3475 = vmatprep.mubr.bf16.mxu0 0
        %3476 = vmatmul.mubr.bf16.gmra.mrb[0].mxu0 %v2488
        %v3477 = vpop.f32.mrb[0].mxu0
        %v3478 = vadd.f32 0.0, %v3477
        %v3479 = vpop.f32.mrb[0].mxu0
        %v3480 = vpop.f32.mrb[0].mxu0
        %v3481 = vadd.f32 0.0, %v3480
        %v3482 = vpop.f32.mrb[0].mxu0
        %3483 = vmatprep.mubr.bf16.mxu0 0
        %3484 = vmatmul.mubr.bf16.gmra.mrb[0].mxu0 %v2491
        %v3485 = vpop.f32.mrb[0].mxu0
        %v3486 = vadd.f32 0.0, %v3485
        %v3487 = vpop.f32.mrb[0].mxu0
        %v3488 = vpop.f32.mrb[0].mxu0
        %v3489 = vadd.f32 0.0, %v3488
        %v3490 = vpop.f32.mrb[0].mxu0
        %3491 = vmatprep.mubr.bf16.mxu0 0
        %3492 = vmatmul.mubr.bf16.gmra.mrb[0].mxu0 %v2494
        %v3493 = vpop.f32.mrb[0].mxu0
        %v3494 = vadd.f32 0.0, %v3493
        %v3495 = vpop.f32.mrb[0].mxu0
        %v3496 = vpop.f32.mrb[0].mxu0
        %v3497 = vadd.f32 0.0, %v3496
        %v3498 = vpop.f32.mrb[0].mxu0
        %3499 = vmatprep.mubr.bf16.mxu0 0
        %3500 = vmatmul.mubr.bf16.gmra.mrb[0].mxu0 %v2497
        %v3501 = vpop.f32.mrb[0].mxu0
        %v3502 = vadd.f32 0.0, %v3501
        %v3503 = vpop.f32.mrb[0].mxu0
        %v3504 = vpop.f32.mrb[0].mxu0
        %v3505 = vadd.f32 0.0, %v3504
        %v3506 = vpop.f32.mrb[0].mxu0
        %3507 = vmatprep.mubr.bf16.mxu0 0
        %3508 = vmatmul.mubr.bf16.gmra.mrb[0].mxu0 %v2500
        %v3509 = vpop.f32.mrb[0].mxu0
        %v3510 = vadd.f32 0.0, %v3509
        %v3511 = vpop.f32.mrb[0].mxu0
        %v3512 = vpop.f32.mrb[0].mxu0
        %v3513 = vadd.f32 0.0, %v3512
        %v3514 = vpop.f32.mrb[0].mxu0
        %3515 = vmatprep.mubr.bf16.mxu0 0
        %3516 = vmatmul.mubr.bf16.gmra.mrb[0].mxu0 %v2503
        %v3517 = vpop.f32.mrb[0].mxu0
        %v3518 = vadd.f32 0.0, %v3517
        %v3519 = vpop.f32.mrb[0].mxu0
        %v3520 = vpop.f32.mrb[0].mxu0
        %v3521 = vadd.f32 0.0, %v3520
        %v3522 = vpop.f32.mrb[0].mxu0
        %3523 = vmatprep.mubr.bf16.mxu0 0
        %3524 = vmatmul.mubr.bf16.gmra.mrb[0].mxu0 %v2506
        %v3525 = vpop.f32.mrb[0].mxu0
        %v3526 = vadd.f32 0.0, %v3525
        %v3527 = vpop.f32.mrb[0].mxu0
        %v3528 = vpop.f32.mrb[0].mxu0
        %v3529 = vadd.f32 0.0, %v3528
        %v3530 = vpop.f32.mrb[0].mxu0
        %3531 = vmatprep.mubr.bf16.mxu0 0
        %3532 = vmatmul.mubr.bf16.gmra.mrb[0].mxu0 %v2509
        %v3533 = vpop.f32.mrb[0].mxu0
        %v3534 = vadd.f32 0.0, %v3533
        %v3535 = vpop.f32.mrb[0].mxu0
        %v3536 = vpop.f32.mrb[0].mxu0
        %v3537 = vadd.f32 0.0, %v3536
        %v3538 = vpop.f32.mrb[0].mxu0
        %3539 = vmatprep.mubr.bf16.mxu0 0
        %3540 = vmatmul.mubr.bf16.gmra.mrb[0].mxu0 %v2512
        %v3541 = vpop.f32.mrb[0].mxu0
        %v3542 = vadd.f32 0.0, %v3541
        %v3543 = vpop.f32.mrb[0].mxu0
        %v3544 = vpop.f32.mrb[0].mxu0
        %v3545 = vadd.f32 0.0, %v3544
        %v3546 = vpop.f32.mrb[0].mxu0
        %3547 = vmatprep.mubr.bf16.mxu0 0
        %3548 = vmatmul.mubr.bf16.gmra.mrb[0].mxu0 %v2515
        %v3549 = vpop.f32.mrb[0].mxu0
        %v3550 = vadd.f32 0.0, %v3549
        %v3551 = vpop.f32.mrb[0].mxu0
        %v3552 = vpop.f32.mrb[0].mxu0
        %v3553 = vadd.f32 0.0, %v3552
        %v3554 = vpop.f32.mrb[0].mxu0
        %3555 = vmatprep.mubr.bf16.mxu0 0
        %3556 = vmatmul.mubr.bf16.gmra.mrb[0].mxu0 %v2518
        %v3557 = vpop.f32.mrb[0].mxu0
        %v3558 = vadd.f32 0.0, %v3557
        %v3559 = vpop.f32.mrb[0].mxu0
        %v3560 = vpop.f32.mrb[0].mxu0
        %v3561 = vadd.f32 0.0, %v3560
        %v3562 = vpop.f32.mrb[0].mxu0
        %3563 = vmatprep.mubr.bf16.mxu0 0
        %3564 = vmatmul.mubr.bf16.gmra.mrb[0].mxu0 %v2521
        %v3565 = vpop.f32.mrb[0].mxu0
        %v3566 = vadd.f32 0.0, %v3565
        %v3567 = vpop.f32.mrb[0].mxu0
        %v3568 = vpop.f32.mrb[0].mxu0
        %v3569 = vadd.f32 0.0, %v3568
        %v3570 = vpop.f32.mrb[0].mxu0
        %3571 = vmatprep.mubr.bf16.mxu0 0
        %3572 = vmatmul.mubr.bf16.gmra.mrb[0].mxu0 %v2524
        %v3573 = vpop.f32.mrb[0].mxu0
        %v3574 = vadd.f32 0.0, %v3573
        %v3575 = vpop.f32.mrb[0].mxu0
        %v3576 = vpop.f32.mrb[0].mxu0
        %v3577 = vadd.f32 0.0, %v3576
        %v3578 = vpop.f32.mrb[0].mxu0
        %3579 = vmatprep.mubr.bf16.mxu0 0
        %3580 = vmatmul.mubr.bf16.gmra.mrb[0].mxu0 %v2527
        %v3581 = vpop.f32.mrb[0].mxu0
        %v3582 = vadd.f32 0.0, %v3581
        %v3583 = vpop.f32.mrb[0].mxu0
        %v3584 = vpop.f32.mrb[0].mxu0
        %v3585 = vadd.f32 0.0, %v3584
        %v3586 = vpop.f32.mrb[0].mxu0
        %3587 = vmatprep.mubr.bf16.mxu0 0
        %3588 = vmatmul.mubr.bf16.gmra.mrb[0].mxu0 %v2530
        %v3589 = vpop.f32.mrb[0].mxu0
        %v3590 = vadd.f32 0.0, %v3589
        %v3591 = vpop.f32.mrb[0].mxu0
        %v3592 = vpop.f32.mrb[0].mxu0
        %v3593 = vadd.f32 0.0, %v3592
        %v3594 = vpop.f32.mrb[0].mxu0
        %3595 = vdwg.mxu0
        %vm3596 = vcmask 80896
        %v3597 = vsel %vm3596, %v2574, -inf
        %v3598 = vsel %vm3596, %v2638, -inf
        %v3599 = vmax.f32 %v3597, %v3598
        %v3600 = vsel %vm3596, %v2702, -inf
        %v3601 = vmax.f32 %v3599, %v3600
        %v3602 = vsel %vm3596, %v2766, -inf
        %v3603 = vmax.f32 %v3601, %v3602
        %v3604 = vsel %vm3596, %v2830, -inf
        %v3605 = vmax.f32 %v3603, %v3604
        %v3606 = vsel %vm3596, %v2894, -inf
        %v3607 = vmax.f32 %v3605, %v3606
        %v3608 = vsel %vm3596, %v2958, -inf
        %v3609 = vmax.f32 %v3607, %v3608
        %v3610 = vsel %vm3596, %v3022, -inf
        %v3611 = vmax.f32 %v3609, %v3610
        %v3612 = vsel %vm3596, %v3086, -inf
        %v3613 = vmax.f32 %v3611, %v3612
        %v3614 = vsel %vm3596, %v3150, -inf
        %v3615 = vmax.f32 %v3613, %v3614
        %v3616 = vsel %vm3596, %v3214, -inf
        %v3617 = vmax.f32 %v3615, %v3616
        %v3618 = vsel %vm3596, %v3278, -inf
        %v3619 = vmax.f32 %v3617, %v3618
        %v3620 = vsel %vm3596, %v3342, -inf
        %v3621 = vmax.f32 %v3619, %v3620
        %v3622 = vsel %vm3596, %v3406, -inf
        %v3623 = vmax.f32 %v3621, %v3622
        %v3624 = vsel %vm3596, %v3470, -inf
        %v3625 = vmax.f32 %v3623, %v3624
        %v3626 = vsel %vm3596, %v3534, -inf
        %v3627 = vmax.f32 %v3625, %v3626
        %v3628 = vsel %vm3596, %v2577, -inf
        %v3629 = vsel %vm3596, %v2641, -inf
        %v3630 = vmax.f32 %v3628, %v3629
        %v3631 = vsel %vm3596, %v2705, -inf
        %v3632 = vmax.f32 %v3630, %v3631
        %v3633 = vsel %vm3596, %v2769, -inf
        %v3634 = vmax.f32 %v3632, %v3633
        %v3635 = vsel %vm3596, %v2833, -inf
        %v3636 = vmax.f32 %v3634, %v3635
        %v3637 = vsel %vm3596, %v2897, -inf
        %v3638 = vmax.f32 %v3636, %v3637
        %v3639 = vsel %vm3596, %v2961, -inf
        %v3640 = vmax.f32 %v3638, %v3639
        %v3641 = vsel %vm3596, %v3025, -inf
        %v3642 = vmax.f32 %v3640, %v3641
        %v3643 = vsel %vm3596, %v3089, -inf
        %v3644 = vmax.f32 %v3642, %v3643
        %v3645 = vsel %vm3596, %v3153, -inf
        %v3646 = vmax.f32 %v3644, %v3645
        %v3647 = vsel %vm3596, %v3217, -inf
        %v3648 = vmax.f32 %v3646, %v3647
        %v3649 = vsel %vm3596, %v3281, -inf
        %v3650 = vmax.f32 %v3648, %v3649
        %v3651 = vsel %vm3596, %v3345, -inf
        %v3652 = vmax.f32 %v3650, %v3651
        %v3653 = vsel %vm3596, %v3409, -inf
        %v3654 = vmax.f32 %v3652, %v3653
        %v3655 = vsel %vm3596, %v3473, -inf
        %v3656 = vmax.f32 %v3654, %v3655
        %v3657 = vsel %vm3596, %v3537, -inf
        %v3658 = vmax.f32 %v3656, %v3657
        %v3659 = vsel %vm3596, %v2582, -inf
        %v3660 = vsel %vm3596, %v2646, -inf
        %v3661 = vmax.f32 %v3659, %v3660
        %v3662 = vsel %vm3596, %v2710, -inf
        %v3663 = vmax.f32 %v3661, %v3662
        %v3664 = vsel %vm3596, %v2774, -inf
        %v3665 = vmax.f32 %v3663, %v3664
        %v3666 = vsel %vm3596, %v2838, -inf
        %v3667 = vmax.f32 %v3665, %v3666
        %v3668 = vsel %vm3596, %v2902, -inf
        %v3669 = vmax.f32 %v3667, %v3668
        %v3670 = vsel %vm3596, %v2966, -inf
        %v3671 = vmax.f32 %v3669, %v3670
        %v3672 = vsel %vm3596, %v3030, -inf
        %v3673 = vmax.f32 %v3671, %v3672
        %v3674 = vsel %vm3596, %v3094, -inf
        %v3675 = vmax.f32 %v3673, %v3674
        %v3676 = vsel %vm3596, %v3158, -inf
        %v3677 = vmax.f32 %v3675, %v3676
        %v3678 = vsel %vm3596, %v3222, -inf
        %v3679 = vmax.f32 %v3677, %v3678
        %v3680 = vsel %vm3596, %v3286, -inf
        %v3681 = vmax.f32 %v3679, %v3680
        %v3682 = vsel %vm3596, %v3350, -inf
        %v3683 = vmax.f32 %v3681, %v3682
        %v3684 = vsel %vm3596, %v3414, -inf
        %v3685 = vmax.f32 %v3683, %v3684
        %v3686 = vsel %vm3596, %v3478, -inf
        %v3687 = vmax.f32 %v3685, %v3686
        %v3688 = vsel %vm3596, %v3542, -inf
        %v3689 = vmax.f32 %v3687, %v3688
        %v3690 = vsel %vm3596, %v2585, -inf
        %v3691 = vsel %vm3596, %v2649, -inf
        %v3692 = vmax.f32 %v3690, %v3691
        %v3693 = vsel %vm3596, %v2713, -inf
        %v3694 = vmax.f32 %v3692, %v3693
        %v3695 = vsel %vm3596, %v2777, -inf
        %v3696 = vmax.f32 %v3694, %v3695
        %v3697 = vsel %vm3596, %v2841, -inf
        %v3698 = vmax.f32 %v3696, %v3697
        %v3699 = vsel %vm3596, %v2905, -inf
        %v3700 = vmax.f32 %v3698, %v3699
        %v3701 = vsel %vm3596, %v2969, -inf
        %v3702 = vmax.f32 %v3700, %v3701
        %v3703 = vsel %vm3596, %v3033, -inf
        %v3704 = vmax.f32 %v3702, %v3703
        %v3705 = vsel %vm3596, %v3097, -inf
        %v3706 = vmax.f32 %v3704, %v3705
        %v3707 = vsel %vm3596, %v3161, -inf
        %v3708 = vmax.f32 %v3706, %v3707
        %v3709 = vsel %vm3596, %v3225, -inf
        %v3710 = vmax.f32 %v3708, %v3709
        %v3711 = vsel %vm3596, %v3289, -inf
        %v3712 = vmax.f32 %v3710, %v3711
        %v3713 = vsel %vm3596, %v3353, -inf
        %v3714 = vmax.f32 %v3712, %v3713
        %v3715 = vsel %vm3596, %v3417, -inf
        %v3716 = vmax.f32 %v3714, %v3715
        %v3717 = vsel %vm3596, %v3481, -inf
        %v3718 = vmax.f32 %v3716, %v3717
        %v3719 = vsel %vm3596, %v3545, -inf
        %v3720 = vmax.f32 %v3718, %v3719
        %v3721 = vsel %vm3596, %v2590, -inf
        %v3722 = vsel %vm3596, %v2654, -inf
        %v3723 = vmax.f32 %v3721, %v3722
        %v3724 = vsel %vm3596, %v2718, -inf
        %v3725 = vmax.f32 %v3723, %v3724
        %v3726 = vsel %vm3596, %v2782, -inf
        %v3727 = vmax.f32 %v3725, %v3726
        %v3728 = vsel %vm3596, %v2846, -inf
        %v3729 = vmax.f32 %v3727, %v3728
        %v3730 = vsel %vm3596, %v2910, -inf
        %v3731 = vmax.f32 %v3729, %v3730
        %v3732 = vsel %vm3596, %v2974, -inf
        %v3733 = vmax.f32 %v3731, %v3732
        %v3734 = vsel %vm3596, %v3038, -inf
        %v3735 = vmax.f32 %v3733, %v3734
        %v3736 = vsel %vm3596, %v3102, -inf
        %v3737 = vmax.f32 %v3735, %v3736
        %v3738 = vsel %vm3596, %v3166, -inf
        %v3739 = vmax.f32 %v3737, %v3738
        %v3740 = vsel %vm3596, %v3230, -inf
        %v3741 = vmax.f32 %v3739, %v3740
        %v3742 = vsel %vm3596, %v3294, -inf
        %v3743 = vmax.f32 %v3741, %v3742
        %v3744 = vsel %vm3596, %v3358, -inf
        %v3745 = vmax.f32 %v3743, %v3744
        %v3746 = vsel %vm3596, %v3422, -inf
        %v3747 = vmax.f32 %v3745, %v3746
        %v3748 = vsel %vm3596, %v3486, -inf
        %v3749 = vmax.f32 %v3747, %v3748
        %v3750 = vsel %vm3596, %v3550, -inf
        %v3751 = vmax.f32 %v3749, %v3750
        %v3752 = vsel %vm3596, %v2593, -inf
        %v3753 = vsel %vm3596, %v2657, -inf
        %v3754 = vmax.f32 %v3752, %v3753
        %v3755 = vsel %vm3596, %v2721, -inf
        %v3756 = vmax.f32 %v3754, %v3755
        %v3757 = vsel %vm3596, %v2785, -inf
        %v3758 = vmax.f32 %v3756, %v3757
        %v3759 = vsel %vm3596, %v2849, -inf
        %v3760 = vmax.f32 %v3758, %v3759
        %v3761 = vsel %vm3596, %v2913, -inf
        %v3762 = vmax.f32 %v3760, %v3761
        %v3763 = vsel %vm3596, %v2977, -inf
        %v3764 = vmax.f32 %v3762, %v3763
        %v3765 = vsel %vm3596, %v3041, -inf
        %v3766 = vmax.f32 %v3764, %v3765
        %v3767 = vsel %vm3596, %v3105, -inf
        %v3768 = vmax.f32 %v3766, %v3767
        %v3769 = vsel %vm3596, %v3169, -inf
        %v3770 = vmax.f32 %v3768, %v3769
        %v3771 = vsel %vm3596, %v3233, -inf
        %v3772 = vmax.f32 %v3770, %v3771
        %v3773 = vsel %vm3596, %v3297, -inf
        %v3774 = vmax.f32 %v3772, %v3773
        %v3775 = vsel %vm3596, %v3361, -inf
        %v3776 = vmax.f32 %v3774, %v3775
        %v3777 = vsel %vm3596, %v3425, -inf
        %v3778 = vmax.f32 %v3776, %v3777
        %v3779 = vsel %vm3596, %v3489, -inf
        %v3780 = vmax.f32 %v3778, %v3779
        %v3781 = vsel %vm3596, %v3553, -inf
        %v3782 = vmax.f32 %v3780, %v3781
        %v3783 = vsel %vm3596, %v2598, -inf
        %v3784 = vsel %vm3596, %v2662, -inf
        %v3785 = vmax.f32 %v3783, %v3784
        %v3786 = vsel %vm3596, %v2726, -inf
        %v3787 = vmax.f32 %v3785, %v3786
        %v3788 = vsel %vm3596, %v2790, -inf
        %v3789 = vmax.f32 %v3787, %v3788
        %v3790 = vsel %vm3596, %v2854, -inf
        %v3791 = vmax.f32 %v3789, %v3790
        %v3792 = vsel %vm3596, %v2918, -inf
        %v3793 = vmax.f32 %v3791, %v3792
        %v3794 = vsel %vm3596, %v2982, -inf
        %v3795 = vmax.f32 %v3793, %v3794
        %v3796 = vsel %vm3596, %v3046, -inf
        %v3797 = vmax.f32 %v3795, %v3796
        %v3798 = vsel %vm3596, %v3110, -inf
        %v3799 = vmax.f32 %v3797, %v3798
        %v3800 = vsel %vm3596, %v3174, -inf
        %v3801 = vmax.f32 %v3799, %v3800
        %v3802 = vsel %vm3596, %v3238, -inf
        %v3803 = vmax.f32 %v3801, %v3802
        %v3804 = vsel %vm3596, %v3302, -inf
        %v3805 = vmax.f32 %v3803, %v3804
        %v3806 = vsel %vm3596, %v3366, -inf
        %v3807 = vmax.f32 %v3805, %v3806
        %v3808 = vsel %vm3596, %v3430, -inf
        %v3809 = vmax.f32 %v3807, %v3808
        %v3810 = vsel %vm3596, %v3494, -inf
        %v3811 = vmax.f32 %v3809, %v3810
        %v3812 = vsel %vm3596, %v3558, -inf
        %v3813 = vmax.f32 %v3811, %v3812
        %v3814 = vsel %vm3596, %v2601, -inf
        %v3815 = vsel %vm3596, %v2665, -inf
        %v3816 = vmax.f32 %v3814, %v3815
        %v3817 = vsel %vm3596, %v2729, -inf
        %v3818 = vmax.f32 %v3816, %v3817
        %v3819 = vsel %vm3596, %v2793, -inf
        %v3820 = vmax.f32 %v3818, %v3819
        %v3821 = vsel %vm3596, %v2857, -inf
        %v3822 = vmax.f32 %v3820, %v3821
        %v3823 = vsel %vm3596, %v2921, -inf
        %v3824 = vmax.f32 %v3822, %v3823
        %v3825 = vsel %vm3596, %v2985, -inf
        %v3826 = vmax.f32 %v3824, %v3825
        %v3827 = vsel %vm3596, %v3049, -inf
        %v3828 = vmax.f32 %v3826, %v3827
        %v3829 = vsel %vm3596, %v3113, -inf
        %v3830 = vmax.f32 %v3828, %v3829
        %v3831 = vsel %vm3596, %v3177, -inf
        %v3832 = vmax.f32 %v3830, %v3831
        %v3833 = vsel %vm3596, %v3241, -inf
        %v3834 = vmax.f32 %v3832, %v3833
        %v3835 = vsel %vm3596, %v3305, -inf
        %v3836 = vmax.f32 %v3834, %v3835
        %v3837 = vsel %vm3596, %v3369, -inf
        %v3838 = vmax.f32 %v3836, %v3837
        %v3839 = vsel %vm3596, %v3433, -inf
        %v3840 = vmax.f32 %v3838, %v3839
        %v3841 = vsel %vm3596, %v3497, -inf
        %v3842 = vmax.f32 %v3840, %v3841
        %v3843 = vsel %vm3596, %v3561, -inf
        %v3844 = vmax.f32 %v3842, %v3843
        %v3845 = vsel %vm3596, %v2606, -inf
        %v3846 = vsel %vm3596, %v2670, -inf
        %v3847 = vmax.f32 %v3845, %v3846
        %v3848 = vsel %vm3596, %v2734, -inf
        %v3849 = vmax.f32 %v3847, %v3848
        %v3850 = vsel %vm3596, %v2798, -inf
        %v3851 = vmax.f32 %v3849, %v3850
        %v3852 = vsel %vm3596, %v2862, -inf
        %v3853 = vmax.f32 %v3851, %v3852
        %v3854 = vsel %vm3596, %v2926, -inf
        %v3855 = vmax.f32 %v3853, %v3854
        %v3856 = vsel %vm3596, %v2990, -inf
        %v3857 = vmax.f32 %v3855, %v3856
        %v3858 = vsel %vm3596, %v3054, -inf
        %v3859 = vmax.f32 %v3857, %v3858
        %v3860 = vsel %vm3596, %v3118, -inf
        %v3861 = vmax.f32 %v3859, %v3860
        %v3862 = vsel %vm3596, %v3182, -inf
        %v3863 = vmax.f32 %v3861, %v3862
        %v3864 = vsel %vm3596, %v3246, -inf
        %v3865 = vmax.f32 %v3863, %v3864
        %v3866 = vsel %vm3596, %v3310, -inf
        %v3867 = vmax.f32 %v3865, %v3866
        %v3868 = vsel %vm3596, %v3374, -inf
        %v3869 = vmax.f32 %v3867, %v3868
        %v3870 = vsel %vm3596, %v3438, -inf
        %v3871 = vmax.f32 %v3869, %v3870
        %v3872 = vsel %vm3596, %v3502, -inf
        %v3873 = vmax.f32 %v3871, %v3872
        %v3874 = vsel %vm3596, %v3566, -inf
        %v3875 = vmax.f32 %v3873, %v3874
        %v3876 = vsel %vm3596, %v2609, -inf
        %v3877 = vsel %vm3596, %v2673, -inf
        %v3878 = vmax.f32 %v3876, %v3877
        %v3879 = vsel %vm3596, %v2737, -inf
        %v3880 = vmax.f32 %v3878, %v3879
        %v3881 = vsel %vm3596, %v2801, -inf
        %v3882 = vmax.f32 %v3880, %v3881
        %v3883 = vsel %vm3596, %v2865, -inf
        %v3884 = vmax.f32 %v3882, %v3883
        %v3885 = vsel %vm3596, %v2929, -inf
        %v3886 = vmax.f32 %v3884, %v3885
        %v3887 = vsel %vm3596, %v2993, -inf
        %v3888 = vmax.f32 %v3886, %v3887
        %v3889 = vsel %vm3596, %v3057, -inf
        %v3890 = vmax.f32 %v3888, %v3889
        %v3891 = vsel %vm3596, %v3121, -inf
        %v3892 = vmax.f32 %v3890, %v3891
        %v3893 = vsel %vm3596, %v3185, -inf
        %v3894 = vmax.f32 %v3892, %v3893
        %v3895 = vsel %vm3596, %v3249, -inf
        %v3896 = vmax.f32 %v3894, %v3895
        %v3897 = vsel %vm3596, %v3313, -inf
        %v3898 = vmax.f32 %v3896, %v3897
        %v3899 = vsel %vm3596, %v3377, -inf
        %v3900 = vmax.f32 %v3898, %v3899
        %v3901 = vsel %vm3596, %v3441, -inf
        %v3902 = vmax.f32 %v3900, %v3901
        %v3903 = vsel %vm3596, %v3505, -inf
        %v3904 = vmax.f32 %v3902, %v3903
        %v3905 = vsel %vm3596, %v3569, -inf
        %v3906 = vmax.f32 %v3904, %v3905
        %v3907 = vsel %vm3596, %v2614, -inf
        %v3908 = vsel %vm3596, %v2678, -inf
        %v3909 = vmax.f32 %v3907, %v3908
        %v3910 = vsel %vm3596, %v2742, -inf
        %v3911 = vmax.f32 %v3909, %v3910
        %v3912 = vsel %vm3596, %v2806, -inf
        %v3913 = vmax.f32 %v3911, %v3912
        %v3914 = vsel %vm3596, %v2870, -inf
        %v3915 = vmax.f32 %v3913, %v3914
        %v3916 = vsel %vm3596, %v2934, -inf
        %v3917 = vmax.f32 %v3915, %v3916
        %v3918 = vsel %vm3596, %v2998, -inf
        %v3919 = vmax.f32 %v3917, %v3918
        %v3920 = vsel %vm3596, %v3062, -inf
        %v3921 = vmax.f32 %v3919, %v3920
        %v3922 = vsel %vm3596, %v3126, -inf
        %v3923 = vmax.f32 %v3921, %v3922
        %v3924 = vsel %vm3596, %v3190, -inf
        %v3925 = vmax.f32 %v3923, %v3924
        %v3926 = vsel %vm3596, %v3254, -inf
        %v3927 = vmax.f32 %v3925, %v3926
        %v3928 = vsel %vm3596, %v3318, -inf
        %v3929 = vmax.f32 %v3927, %v3928
        %v3930 = vsel %vm3596, %v3382, -inf
        %v3931 = vmax.f32 %v3929, %v3930
        %v3932 = vsel %vm3596, %v3446, -inf
        %v3933 = vmax.f32 %v3931, %v3932
        %v3934 = vsel %vm3596, %v3510, -inf
        %v3935 = vmax.f32 %v3933, %v3934
        %v3936 = vsel %vm3596, %v3574, -inf
        %v3937 = vmax.f32 %v3935, %v3936
        %v3938 = vsel %vm3596, %v2617, -inf
        %v3939 = vsel %vm3596, %v2681, -inf
        %v3940 = vmax.f32 %v3938, %v3939
        %v3941 = vsel %vm3596, %v2745, -inf
        %v3942 = vmax.f32 %v3940, %v3941
        %v3943 = vsel %vm3596, %v2809, -inf
        %v3944 = vmax.f32 %v3942, %v3943
        %v3945 = vsel %vm3596, %v2873, -inf
        %v3946 = vmax.f32 %v3944, %v3945
        %v3947 = vsel %vm3596, %v2937, -inf
        %v3948 = vmax.f32 %v3946, %v3947
        %v3949 = vsel %vm3596, %v3001, -inf
        %v3950 = vmax.f32 %v3948, %v3949
        %v3951 = vsel %vm3596, %v3065, -inf
        %v3952 = vmax.f32 %v3950, %v3951
        %v3953 = vsel %vm3596, %v3129, -inf
        %v3954 = vmax.f32 %v3952, %v3953
        %v3955 = vsel %vm3596, %v3193, -inf
        %v3956 = vmax.f32 %v3954, %v3955
        %v3957 = vsel %vm3596, %v3257, -inf
        %v3958 = vmax.f32 %v3956, %v3957
        %v3959 = vsel %vm3596, %v3321, -inf
        %v3960 = vmax.f32 %v3958, %v3959
        %v3961 = vsel %vm3596, %v3385, -inf
        %v3962 = vmax.f32 %v3960, %v3961
        %v3963 = vsel %vm3596, %v3449, -inf
        %v3964 = vmax.f32 %v3962, %v3963
        %v3965 = vsel %vm3596, %v3513, -inf
        %v3966 = vmax.f32 %v3964, %v3965
        %v3967 = vsel %vm3596, %v3577, -inf
        %v3968 = vmax.f32 %v3966, %v3967
        %v3969 = vsel %vm3596, %v2622, -inf
        %v3970 = vsel %vm3596, %v2686, -inf
        %v3971 = vmax.f32 %v3969, %v3970
        %v3972 = vsel %vm3596, %v2750, -inf
        %v3973 = vmax.f32 %v3971, %v3972
        %v3974 = vsel %vm3596, %v2814, -inf
        %v3975 = vmax.f32 %v3973, %v3974
        %v3976 = vsel %vm3596, %v2878, -inf
        %v3977 = vmax.f32 %v3975, %v3976
        %v3978 = vsel %vm3596, %v2942, -inf
        %v3979 = vmax.f32 %v3977, %v3978
        %v3980 = vsel %vm3596, %v3006, -inf
        %v3981 = vmax.f32 %v3979, %v3980
        %v3982 = vsel %vm3596, %v3070, -inf
        %v3983 = vmax.f32 %v3981, %v3982
        %v3984 = vsel %vm3596, %v3134, -inf
        %v3985 = vmax.f32 %v3983, %v3984
        %v3986 = vsel %vm3596, %v3198, -inf
        %v3987 = vmax.f32 %v3985, %v3986
        %v3988 = vsel %vm3596, %v3262, -inf
        %v3989 = vmax.f32 %v3987, %v3988
        %v3990 = vsel %vm3596, %v3326, -inf
        %v3991 = vmax.f32 %v3989, %v3990
        %v3992 = vsel %vm3596, %v3390, -inf
        %v3993 = vmax.f32 %v3991, %v3992
        %v3994 = vsel %vm3596, %v3454, -inf
        %v3995 = vmax.f32 %v3993, %v3994
        %v3996 = vsel %vm3596, %v3518, -inf
        %v3997 = vmax.f32 %v3995, %v3996
        %v3998 = vsel %vm3596, %v3582, -inf
        %v3999 = vmax.f32 %v3997, %v3998
        %v4000 = vsel %vm3596, %v2625, -inf
        %v4001 = vsel %vm3596, %v2689, -inf
        %v4002 = vmax.f32 %v4000, %v4001
        %v4003 = vsel %vm3596, %v2753, -inf
        %v4004 = vmax.f32 %v4002, %v4003
        %v4005 = vsel %vm3596, %v2817, -inf
        %v4006 = vmax.f32 %v4004, %v4005
        %v4007 = vsel %vm3596, %v2881, -inf
        %v4008 = vmax.f32 %v4006, %v4007
        %v4009 = vsel %vm3596, %v2945, -inf
        %v4010 = vmax.f32 %v4008, %v4009
        %v4011 = vsel %vm3596, %v3009, -inf
        %v4012 = vmax.f32 %v4010, %v4011
        %v4013 = vsel %vm3596, %v3073, -inf
        %v4014 = vmax.f32 %v4012, %v4013
        %v4015 = vsel %vm3596, %v3137, -inf
        %v4016 = vmax.f32 %v4014, %v4015
        %v4017 = vsel %vm3596, %v3201, -inf
        %v4018 = vmax.f32 %v4016, %v4017
        %v4019 = vsel %vm3596, %v3265, -inf
        %v4020 = vmax.f32 %v4018, %v4019
        %v4021 = vsel %vm3596, %v3329, -inf
        %v4022 = vmax.f32 %v4020, %v4021
        %v4023 = vsel %vm3596, %v3393, -inf
        %v4024 = vmax.f32 %v4022, %v4023
        %v4025 = vsel %vm3596, %v3457, -inf
        %v4026 = vmax.f32 %v4024, %v4025
        %v4027 = vsel %vm3596, %v3521, -inf
        %v4028 = vmax.f32 %v4026, %v4027
        %v4029 = vsel %vm3596, %v3585, -inf
        %v4030 = vmax.f32 %v4028, %v4029
        %v4031 = vsel %vm3596, %v2630, -inf
        %v4032 = vsel %vm3596, %v2694, -inf
        %v4033 = vmax.f32 %v4031, %v4032
        %v4034 = vsel %vm3596, %v2758, -inf
        %v4035 = vmax.f32 %v4033, %v4034
        %v4036 = vsel %vm3596, %v2822, -inf
        %v4037 = vmax.f32 %v4035, %v4036
        %v4038 = vsel %vm3596, %v2886, -inf
        %v4039 = vmax.f32 %v4037, %v4038
        %v4040 = vsel %vm3596, %v2950, -inf
        %v4041 = vmax.f32 %v4039, %v4040
        %v4042 = vsel %vm3596, %v3014, -inf
        %v4043 = vmax.f32 %v4041, %v4042
        %v4044 = vsel %vm3596, %v3078, -inf
        %v4045 = vmax.f32 %v4043, %v4044
        %v4046 = vsel %vm3596, %v3142, -inf
        %v4047 = vmax.f32 %v4045, %v4046
        %v4048 = vsel %vm3596, %v3206, -inf
        %v4049 = vmax.f32 %v4047, %v4048
        %v4050 = vsel %vm3596, %v3270, -inf
        %v4051 = vmax.f32 %v4049, %v4050
        %v4052 = vsel %vm3596, %v3334, -inf
        %v4053 = vmax.f32 %v4051, %v4052
        %v4054 = vsel %vm3596, %v3398, -inf
        %v4055 = vmax.f32 %v4053, %v4054
        %v4056 = vsel %vm3596, %v3462, -inf
        %v4057 = vmax.f32 %v4055, %v4056
        %v4058 = vsel %vm3596, %v3526, -inf
        %v4059 = vmax.f32 %v4057, %v4058
        %v4060 = vsel %vm3596, %v3590, -inf
        %v4061 = vmax.f32 %v4059, %v4060
        %v4062 = vsel %vm3596, %v2633, -inf
        %v4063 = vsel %vm3596, %v2697, -inf
        %v4064 = vmax.f32 %v4062, %v4063
        %v4065 = vsel %vm3596, %v2761, -inf
        %v4066 = vmax.f32 %v4064, %v4065
        %v4067 = vsel %vm3596, %v2825, -inf
        %v4068 = vmax.f32 %v4066, %v4067
        %v4069 = vsel %vm3596, %v2889, -inf
        %v4070 = vmax.f32 %v4068, %v4069
        %v4071 = vsel %vm3596, %v2953, -inf
        %v4072 = vmax.f32 %v4070, %v4071
        %v4073 = vsel %vm3596, %v3017, -inf
        %v4074 = vmax.f32 %v4072, %v4073
        %v4075 = vsel %vm3596, %v3081, -inf
        %v4076 = vmax.f32 %v4074, %v4075
        %v4077 = vsel %vm3596, %v3145, -inf
        %v4078 = vmax.f32 %v4076, %v4077
        %v4079 = vsel %vm3596, %v3209, -inf
        %v4080 = vmax.f32 %v4078, %v4079
        %v4081 = vsel %vm3596, %v3273, -inf
        %v4082 = vmax.f32 %v4080, %v4081
        %v4083 = vsel %vm3596, %v3337, -inf
        %v4084 = vmax.f32 %v4082, %v4083
        %v4085 = vsel %vm3596, %v3401, -inf
        %v4086 = vmax.f32 %v4084, %v4085
        %v4087 = vsel %vm3596, %v3465, -inf
        %v4088 = vmax.f32 %v4086, %v4087
        %v4089 = vsel %vm3596, %v3529, -inf
        %v4090 = vmax.f32 %v4088, %v4089
        %v4091 = vsel %vm3596, %v3593, -inf
        %v4092 = vmax.f32 %v4090, %v4091
        %v4093 = vld [vmem:[%s2] sm:$0x1]
        %v4095 = vlaneseq
        %v4096 = vshrl.u32 %v4095, 7
        %v4097 = vsub.s32 0, %v4096
        %v4098 = vrot.slane %v4093, %v4097
        %v4100 = vadd.f32 %v3627, %v4098
        %v4101 = vadd.f32 %v3658, %v4098
        %v4102 = vadd.f32 %v3689, %v4098
        %v4103 = vadd.f32 %v3720, %v4098
        %v4104 = vadd.f32 %v3751, %v4098
        %v4105 = vadd.f32 %v3782, %v4098
        %v4106 = vadd.f32 %v3813, %v4098
        %v4107 = vadd.f32 %v3844, %v4098
        %v4108 = vadd.f32 %v3875, %v4098
        %v4109 = vadd.f32 %v3906, %v4098
        %v4110 = vadd.f32 %v3937, %v4098
        %v4111 = vadd.f32 %v3968, %v4098
        %v4112 = vadd.f32 %v3999, %v4098
        %v4113 = vadd.f32 %v4030, %v4098
        %v4114 = vadd.f32 %v4061, %v4098
        %v4115 = vadd.f32 %v4092, %v4098
        %v4116 = vmax.f32 %v4100, 0.0
        %v4117 = vmax.f32 %v4101, 0.0
        %v4118 = vmax.f32 %v4102, 0.0
        %v4119 = vmax.f32 %v4103, 0.0
        %v4120 = vmax.f32 %v4104, 0.0
        %v4121 = vmax.f32 %v4105, 0.0
        %v4122 = vmax.f32 %v4106, 0.0
        %v4123 = vmax.f32 %v4107, 0.0
        %v4124 = vmax.f32 %v4108, 0.0
        %v4125 = vmax.f32 %v4109, 0.0
        %v4126 = vmax.f32 %v4110, 0.0
        %v4127 = vmax.f32 %v4111, 0.0
        %v4128 = vmax.f32 %v4112, 0.0
        %v4129 = vmax.f32 %v4113, 0.0
        %v4130 = vmax.f32 %v4114, 0.0
        %v4131 = vmax.f32 %v4115, 0.0
        %4132 = vst.msk [vmem:[%s1233] sm:$0xff] %vm3596, %v4116
        %4133 = vst.msk [vmem:[%s1233 + $0x8] sm:$0xff] %vm3596, %v4117
        %4134 = vst.msk [vmem:[%s1233 + $0x10] sm:$0xff] %vm3596, %v4118
        %4135 = vst.msk [vmem:[%s1233 + $0x18] sm:$0xff] %vm3596, %v4119
        %4136 = vst.msk [vmem:[%s1233 + $0x20] sm:$0xff] %vm3596, %v4120
        %4137 = vst.msk [vmem:[%s1233 + $0x28] sm:$0xff] %vm3596, %v4121
        %4138 = vst.msk [vmem:[%s1233 + $0x30] sm:$0xff] %vm3596, %v4122
        %4139 = vst.msk [vmem:[%s1233 + $0x38] sm:$0xff] %vm3596, %v4123
        %4140 = vst.msk [vmem:[%s1233 + $0x40] sm:$0xff] %vm3596, %v4124
        %4141 = vst.msk [vmem:[%s1233 + $0x48] sm:$0xff] %vm3596, %v4125
        %4142 = vst.msk [vmem:[%s1233 + $0x50] sm:$0xff] %vm3596, %v4126
        %4143 = vst.msk [vmem:[%s1233 + $0x58] sm:$0xff] %vm3596, %v4127
        %4144 = vst.msk [vmem:[%s1233 + $0x60] sm:$0xff] %vm3596, %v4128
        %4145 = vst.msk [vmem:[%s1233 + $0x68] sm:$0xff] %vm3596, %v4129
        %4146 = vst.msk [vmem:[%s1233 + $0x70] sm:$0xff] %vm3596, %v4130
        %4147 = vst.msk [vmem:[%s1233 + $0x78] sm:$0xff] %vm3596, %v4131
        %s4148 = smul.u32 16, %s14
        %p4149 = scmp.lt.s32.totalorder %s4148, 63
        %s4150 = scalar_select %p4149, %s4148, 63
        %s4151 = smul.addr %s4150, 8
        %s4152 = scalar_lea.vmem %s3, %s4151
        // Predicated region
        $region74: #{model_cnn_classifier_forward.2} parent=68 // pred_check
          %p4153 = pneg %p100
        $region75: #{model_cnn_classifier_forward.2} parent=68 // pred_check_branch
          %4155 = sbr.rel (%p4153) target = $region77
        $region76: #{model_cnn_classifier_forward.2} parent=68 // pred_region
          %s4156 = smul.u32 16, %s14
        $region77: #{model_cnn_classifier_forward.2} parent=68 // pred_fallthru
          _
      $region69: #{model_cnn_classifier_forward.2} parent=5 // pred_fallthru
        _
      %p4157 = scmp.le.s32.totalorder 2, %s9
      // Predicated region
      $region78: #{model_cnn_classifier_forward.2} parent=5 // pred_check
        %p4158 = pneg %p4157
      $region79: #{model_cnn_classifier_forward.2} parent=5 // pred_check_branch
        %4160 = sbr.rel (%p4158) target = $region81
      $region80: #{model_cnn_classifier_forward.2} parent=5 // pred_region
        %s4161 = ssub.s32 %s9, 2
        // Predicated region
        $region82: #{model_cnn_classifier_forward.2} parent=80 // pred_check
          %p4162 = pneg %p106
        $region83: #{model_cnn_classifier_forward.2} parent=80 // pred_check_branch
          %4164 = sbr.rel (%p4162) target = $region85
        $region84: #{model_cnn_classifier_forward.2} parent=80 // pred_region
          %s4165 = smul.u32 16, %s15
          %p4166 = scmp.lt.s32.totalorder %s4165, 63
          %s4167 = scalar_select %p4166, %s4165, 63
          %s4168 = smul.addr %s4167, 8
          %s4169 = scalar_lea.vmem %s3, %s4168
        $region85: #{model_cnn_classifier_forward.2} parent=80 // pred_fallthru
          _
      $region81: #{model_cnn_classifier_forward.2} parent=5 // pred_fallthru
        _
    $region6: #{model_cnn_classifier_forward.2} parent=1 // loop_footer
      %s13 = sadd.s32 1, %s9
    $region7: #{model_cnn_classifier_forward.2} parent=1 // loop_footer_branch
      %8 = sbr.rel target = $region3
    $region8: #{model_cnn_classifier_forward.2} parent=1 // loop_exit
      _

// kernel: model_cnn_classifier_forward.3
$region0: #{model_cnn_classifier_forward.3}
  #allocation0 [shape = 'u32[]', space=smem, size = 0x4, offset = 0x4, fixed_abs, tag = 'smem constant byte address 0x4 - core index']
  #allocation1 [shape = 'u32[144,128]{1,0:T(1,128)}', space=vmem, size = 0x12000, scoped, tag = 'internal scratch']
  %s0 = inlined_call_operand.vmem [shape: f32[8,640], index: 0, kind: input, shape index: {}]
  %s1 = inlined_call_operand.vmem [shape: f32[640,32], index: 1, kind: input, shape index: {}]
  %s2 = inlined_call_operand.vmem [shape: f32[1,32], index: 2, kind: input, shape index: {}]
  %s3 = inlined_call_operand.vmem [shape: f32[32,128], index: 3, kind: input, shape index: {}]
  %s4 = inlined_call_operand.vmem [shape: f32[8,128], index: 4, kind: output, shape index: {}]
  %s5 = sld [smem:[#allocation0]]
  $region26: #{model_cnn_classifier_forward.3} parent=0
    _
  %s7 = ssub.s32 1, %s5
  %s8 = scalar_select 0, %s7, %s5
  // Predicated region
  $region2: #{model_cnn_classifier_forward.3} parent=0 // pred_check
    _
  $region3: #{model_cnn_classifier_forward.3} parent=0 // pred_check_branch
    %10 = sbr.rel (0) target = $region5
  $region4: #{model_cnn_classifier_forward.3} parent=0 // pred_region
    _
  $region5: #{model_cnn_classifier_forward.3} parent=0 // pred_fallthru
    _
  // Predicated region
  $region6: #{model_cnn_classifier_forward.3} parent=0 // pred_check
    _
  $region7: #{model_cnn_classifier_forward.3} parent=0 // pred_check_branch
    %12 = sbr.rel (0) target = $region9
  $region8: #{model_cnn_classifier_forward.3} parent=0 // pred_region
    _
  $region9: #{model_cnn_classifier_forward.3} parent=0 // pred_fallthru
    _
  // Predicated region
  $region10: #{model_cnn_classifier_forward.3} parent=0 // pred_check
    _
  $region11: #{model_cnn_classifier_forward.3} parent=0 // pred_check_branch
    %14 = sbr.rel (0) target = $region13
  $region12: #{model_cnn_classifier_forward.3} parent=0 // pred_region
    _
  $region13: #{model_cnn_classifier_forward.3} parent=0 // pred_fallthru
    _
  // Predicated region
  $region14: #{model_cnn_classifier_forward.3} parent=0 // pred_check
    _
  $region15: #{model_cnn_classifier_forward.3} parent=0 // pred_check_branch
    %16 = sbr.rel (0) target = $region17
  $region16: #{model_cnn_classifier_forward.3} parent=0 // pred_region
    _
  $region17: #{model_cnn_classifier_forward.3} parent=0 // pred_fallthru
    _
  %v17 = vld [vmem:[%s0] sm:$0xff]
  %v18 = vld [vmem:[%s0 + $0x8] sm:$0xff]
  %v19 = vld [vmem:[%s0 + $0x10] sm:$0xff]
  %v20 = vld [vmem:[%s0 + $0x18] sm:$0xff]
  %v21 = vld [vmem:[%s0 + $0x20] sm:$0xff]
  %v22 = vld [vmem:[%s1] sm:$0xff]
  %v23 = vld [vmem:[%s1 + $0x8] sm:$0xff]
  %v24 = vld [vmem:[%s1 + $0x10] sm:$0xff]
  %v25 = vld [vmem:[%s1 + $0x18] sm:$0xff]
  %v26 = vld [vmem:[%s1 + $0x20] sm:$0xff]
  %v27 = vld [vmem:[%s1 + $0x28] sm:$0xff]
  %v28 = vld [vmem:[%s1 + $0x30] sm:$0xff]
  %v29 = vld [vmem:[%s1 + $0x38] sm:$0xff]
  %v30 = vld [vmem:[%s1 + $0x40] sm:$0xff]
  %v31 = vld [vmem:[%s1 + $0x48] sm:$0xff]
  %v32 = vld [vmem:[%s1 + $0x50] sm:$0xff]
  %v33 = vld [vmem:[%s1 + $0x58] sm:$0xff]
  %v34 = vld [vmem:[%s1 + $0x60] sm:$0xff]
  %v35 = vld [vmem:[%s1 + $0x68] sm:$0xff]
  %v36 = vld [vmem:[%s1 + $0x70] sm:$0xff]
  %v37 = vld [vmem:[%s1 + $0x78] sm:$0xff]
  %v38 = vld [vmem:[%s1 + $0x80] sm:$0xff]
  %v39 = vld [vmem:[%s1 + $0x88] sm:$0xff]
  %v40 = vld [vmem:[%s1 + $0x90] sm:$0xff]
  %v41 = vld [vmem:[%s1 + $0x98] sm:$0xff]
  %v42 = vld [vmem:[%s1 + $0xa0] sm:$0xff]
  %v43 = vld [vmem:[%s1 + $0xa8] sm:$0xff]
  %v44 = vld [vmem:[%s1 + $0xb0] sm:$0xff]
  %v45 = vld [vmem:[%s1 + $0xb8] sm:$0xff]
  %v46 = vld [vmem:[%s1 + $0xc0] sm:$0xff]
  %v47 = vld [vmem:[%s1 + $0xc8] sm:$0xff]
  %v48 = vld [vmem:[%s1 + $0xd0] sm:$0xff]
  %v49 = vld [vmem:[%s1 + $0xd8] sm:$0xff]
  %v50 = vld [vmem:[%s1 + $0xe0] sm:$0xff]
  %v51 = vld [vmem:[%s1 + $0xe8] sm:$0xff]
  %v52 = vld [vmem:[%s1 + $0xf0] sm:$0xff]
  %v53 = vld [vmem:[%s1 + $0xf8] sm:$0xff]
  %v54 = vld [vmem:[%s1 + $0x100] sm:$0xff]
  %v55 = vld [vmem:[%s1 + $0x108] sm:$0xff]
  %v56 = vld [vmem:[%s1 + $0x110] sm:$0xff]
  %v57 = vld [vmem:[%s1 + $0x118] sm:$0xff]
  %v58 = vld [vmem:[%s1 + $0x120] sm:$0xff]
  %v59 = vld [vmem:[%s1 + $0x128] sm:$0xff]
  %v60 = vld [vmem:[%s1 + $0x130] sm:$0xff]
  %v61 = vld [vmem:[%s1 + $0x138] sm:$0xff]
  %v62 = vld [vmem:[%s1 + $0x140] sm:$0xff]
  %v63 = vld [vmem:[%s1 + $0x148] sm:$0xff]
  %v64 = vld [vmem:[%s1 + $0x150] sm:$0xff]
  %v65 = vld [vmem:[%s1 + $0x158] sm:$0xff]
  %v66 = vld [vmem:[%s1 + $0x160] sm:$0xff]
  %v67 = vld [vmem:[%s1 + $0x168] sm:$0xff]
  %v68 = vld [vmem:[%s1 + $0x170] sm:$0xff]
  %v69 = vld [vmem:[%s1 + $0x178] sm:$0xff]
  %v70 = vld [vmem:[%s1 + $0x180] sm:$0xff]
  %v71 = vld [vmem:[%s1 + $0x188] sm:$0xff]
  %v72 = vld [vmem:[%s1 + $0x190] sm:$0xff]
  %v73 = vld [vmem:[%s1 + $0x198] sm:$0xff]
  %v74 = vld [vmem:[%s1 + $0x1a0] sm:$0xff]
  %v75 = vld [vmem:[%s1 + $0x1a8] sm:$0xff]
  %v76 = vld [vmem:[%s1 + $0x1b0] sm:$0xff]
  %v77 = vld [vmem:[%s1 + $0x1b8] sm:$0xff]
  %v78 = vld [vmem:[%s1 + $0x1c0] sm:$0xff]
  %v79 = vld [vmem:[%s1 + $0x1c8] sm:$0xff]
  %v80 = vld [vmem:[%s1 + $0x1d0] sm:$0xff]
  %v81 = vld [vmem:[%s1 + $0x1d8] sm:$0xff]
  %v82 = vld [vmem:[%s1 + $0x1e0] sm:$0xff]
  %v83 = vld [vmem:[%s1 + $0x1e8] sm:$0xff]
  %v84 = vld [vmem:[%s1 + $0x1f0] sm:$0xff]
  %v85 = vld [vmem:[%s1 + $0x1f8] sm:$0xff]
  %v86 = vld [vmem:[%s1 + $0x200] sm:$0xff]
  %v87 = vld [vmem:[%s1 + $0x208] sm:$0xff]
  %v88 = vld [vmem:[%s1 + $0x210] sm:$0xff]
  %v89 = vld [vmem:[%s1 + $0x218] sm:$0xff]
  %v90 = vld [vmem:[%s1 + $0x220] sm:$0xff]
  %v91 = vld [vmem:[%s1 + $0x228] sm:$0xff]
  %v92 = vld [vmem:[%s1 + $0x230] sm:$0xff]
  %v93 = vld [vmem:[%s1 + $0x238] sm:$0xff]
  %v94 = vld [vmem:[%s1 + $0x240] sm:$0xff]
  %v95 = vld [vmem:[%s1 + $0x248] sm:$0xff]
  %v96 = vld [vmem:[%s1 + $0x250] sm:$0xff]
  %v97 = vld [vmem:[%s1 + $0x258] sm:$0xff]
  %v98 = vld [vmem:[%s1 + $0x260] sm:$0xff]
  %v99 = vld [vmem:[%s1 + $0x268] sm:$0xff]
  %v100 = vld [vmem:[%s1 + $0x270] sm:$0xff]
  %v101 = vld [vmem:[%s1 + $0x278] sm:$0xff]
  %v102 = vld [vmem:[%s2] sm:$0x1]
  %v104 = vlaneseq
  %v105 = vshrl.u32 %v104, 7
  %v106 = vsub.s32 0, %v105
  %v107 = vrot.slane %v102, %v106
  %109 = vmatprep.subr.mxu0 0.0
  %110 = vmatpush1.msra.mxu0 %v22
  %111 = vmatprep.subr.mxu0 0.0
  %112 = vmatpush1.msra.mxu0 %v23
  %113 = vmatprep.subr.mxu0 0.0
  %114 = vmatpush1.msra.mxu0 %v24
  %115 = vmatprep.subr.mxu0 0.0
  %116 = vmatpush1.msra.mxu0 %v25
  %117 = vmatprep.subr.mxu0 0.0
  %118 = vmatpush1.msra.mxu0 %v26
  %119 = vmatprep.subr.mxu0 0.0
  %120 = vmatpush1.msra.mxu0 %v27
  %121 = vmatprep.subr.mxu0 0.0
  %122 = vmatpush1.msra.mxu0 %v28
  %123 = vmatprep.subr.mxu0 0.0
  %124 = vmatpush1.msra.mxu0 %v29
  %125 = vmatprep.subr.mxu0 0.0
  %126 = vmatpush1.msra.mxu0 %v30
  %127 = vmatprep.subr.mxu0 0.0
  %128 = vmatpush1.msra.mxu0 %v31
  %129 = vmatprep.subr.mxu0 0.0
  %130 = vmatpush1.msra.mxu0 %v32
  %131 = vmatprep.subr.mxu0 0.0
  %132 = vmatpush1.msra.mxu0 %v33
  %133 = vmatprep.subr.mxu0 0.0
  %134 = vmatpush1.msra.mxu0 %v34
  %135 = vmatprep.subr.mxu0 0.0
  %136 = vmatpush1.msra.mxu0 %v35
  %137 = vmatprep.subr.mxu0 0.0
  %138 = vmatpush1.msra.mxu0 %v36
  %139 = vmatprep.subr.mxu0 0.0
  %140 = vmatpush1.msra.mxu0 %v37
  %141 = vmatprep.subr.mxu0 0.0
  %142 = vmatpush1.msra.mxu0 %v38
  %143 = vmatprep.subr.mxu0 0.0
  %144 = vmatpush1.msra.mxu0 %v39
  %145 = vmatprep.subr.mxu0 0.0
  %146 = vmatpush1.msra.mxu0 %v40
  %147 = vmatprep.subr.mxu0 0.0
  %148 = vmatpush1.msra.mxu0 %v41
  %149 = vmatprep.subr.mxu0 0.0
  %150 = vmatpush1.msra.mxu0 %v42
  %151 = vmatprep.subr.mxu0 0.0
  %152 = vmatpush1.msra.mxu0 %v43
  %153 = vmatprep.subr.mxu0 0.0
  %154 = vmatpush1.msra.mxu0 %v44
  %155 = vmatprep.subr.mxu0 0.0
  %156 = vmatpush1.msra.mxu0 %v45
  %157 = vmatprep.subr.mxu0 0.0
  %158 = vmatpush1.msra.mxu0 %v46
  %159 = vmatprep.subr.mxu0 0.0
  %160 = vmatpush1.msra.mxu0 %v47
  %161 = vmatprep.subr.mxu0 0.0
  %162 = vmatpush1.msra.mxu0 %v48
  %163 = vmatprep.subr.mxu0 0.0
  %164 = vmatpush1.msra.mxu0 %v49
  %165 = vmatprep.subr.mxu0 0.0
  %166 = vmatpush1.msra.mxu0 %v50
  %167 = vmatprep.subr.mxu0 0.0
  %168 = vmatpush1.msra.mxu0 %v51
  %169 = vmatprep.subr.mxu0 0.0
  %170 = vmatpush1.msra.mxu0 %v52
  %171 = vmatprep.subr.mxu0 0.0
  %172 = vmatpush1.msra.mxu0 %v53
  %173 = vmatprep.mubr.f32.mxu0 %v18
  %174 = vmatmul.mubr.f32.gmra.mrb[0].mxu0 %v17
  %v175 = vpop.f32.mrb[0].mxu0
  %v176 = vadd.f32 %v107, %v175
  %v177 = vpop.f32.mrb[0].mxu0
  %178 = vdwg.mxu0
  %179 = vmatprep.subr.mxu0 0.0
  %180 = vmatpush1.msra.mxu0 %v54
  %181 = vmatprep.subr.mxu0 0.0
  %182 = vmatpush1.msra.mxu0 %v55
  %183 = vmatprep.subr.mxu0 0.0
  %184 = vmatpush1.msra.mxu0 %v56
  %185 = vmatprep.subr.mxu0 0.0
  %186 = vmatpush1.msra.mxu0 %v57
  %187 = vmatprep.subr.mxu0 0.0
  %188 = vmatpush1.msra.mxu0 %v58
  %189 = vmatprep.subr.mxu0 0.0
  %190 = vmatpush1.msra.mxu0 %v59
  %191 = vmatprep.subr.mxu0 0.0
  %192 = vmatpush1.msra.mxu0 %v60
  %193 = vmatprep.subr.mxu0 0.0
  %194 = vmatpush1.msra.mxu0 %v61
  %195 = vmatprep.subr.mxu0 0.0
  %196 = vmatpush1.msra.mxu0 %v62
  %197 = vmatprep.subr.mxu0 0.0
  %198 = vmatpush1.msra.mxu0 %v63
  %199 = vmatprep.subr.mxu0 0.0
  %200 = vmatpush1.msra.mxu0 %v64
  %201 = vmatprep.subr.mxu0 0.0
  %202 = vmatpush1.msra.mxu0 %v65
  %203 = vmatprep.subr.mxu0 0.0
  %204 = vmatpush1.msra.mxu0 %v66
  %205 = vmatprep.subr.mxu0 0.0
  %206 = vmatpush1.msra.mxu0 %v67
  %207 = vmatprep.subr.mxu0 0.0
  %208 = vmatpush1.msra.mxu0 %v68
  %209 = vmatprep.subr.mxu0 0.0
  %210 = vmatpush1.msra.mxu0 %v69
  %211 = vmatprep.subr.mxu0 0.0
  %212 = vmatpush1.msra.mxu0 %v70
  %213 = vmatprep.subr.mxu0 0.0
  %214 = vmatpush1.msra.mxu0 %v71
  %215 = vmatprep.subr.mxu0 0.0
  %216 = vmatpush1.msra.mxu0 %v72
  %217 = vmatprep.subr.mxu0 0.0
  %218 = vmatpush1.msra.mxu0 %v73
  %219 = vmatprep.subr.mxu0 0.0
  %220 = vmatpush1.msra.mxu0 %v74
  %221 = vmatprep.subr.mxu0 0.0
  %222 = vmatpush1.msra.mxu0 %v75
  %223 = vmatprep.subr.mxu0 0.0
  %224 = vmatpush1.msra.mxu0 %v76
  %225 = vmatprep.subr.mxu0 0.0
  %226 = vmatpush1.msra.mxu0 %v77
  %227 = vmatprep.subr.mxu0 0.0
  %228 = vmatpush1.msra.mxu0 %v78
  %229 = vmatprep.subr.mxu0 0.0
  %230 = vmatpush1.msra.mxu0 %v79
  %231 = vmatprep.subr.mxu0 0.0
  %232 = vmatpush1.msra.mxu0 %v80
  %233 = vmatprep.subr.mxu0 0.0
  %234 = vmatpush1.msra.mxu0 %v81
  %235 = vmatprep.subr.mxu0 0.0
  %236 = vmatpush1.msra.mxu0 %v82
  %237 = vmatprep.subr.mxu0 0.0
  %238 = vmatpush1.msra.mxu0 %v83
  %239 = vmatprep.subr.mxu0 0.0
  %240 = vmatpush1.msra.mxu0 %v84
  %241 = vmatprep.subr.mxu0 0.0
  %242 = vmatpush1.msra.mxu0 %v85
  %243 = vmatprep.mubr.f32.mxu0 %v20
  %244 = vmatmul.mubr.f32.gmra.mrb[0].mxu0 %v19
  %v245 = vpop.f32.mrb[0].mxu0
  %v246 = vadd.f32 %v176, %v245
  %v247 = vpop.f32.mrb[0].mxu0
  %248 = vdwg.mxu0
  %249 = vmatprep.subr.mxu0 0.0
  %250 = vmatpush1.msra.mxu0 %v86
  %251 = vmatprep.subr.mxu0 0.0
  %252 = vmatpush1.msra.mxu0 %v87
  %253 = vmatprep.subr.mxu0 0.0
  %254 = vmatpush1.msra.mxu0 %v88
  %255 = vmatprep.subr.mxu0 0.0
  %256 = vmatpush1.msra.mxu0 %v89
  %257 = vmatprep.subr.mxu0 0.0
  %258 = vmatpush1.msra.mxu0 %v90
  %259 = vmatprep.subr.mxu0 0.0
  %260 = vmatpush1.msra.mxu0 %v91
  %261 = vmatprep.subr.mxu0 0.0
  %262 = vmatpush1.msra.mxu0 %v92
  %263 = vmatprep.subr.mxu0 0.0
  %264 = vmatpush1.msra.mxu0 %v93
  %265 = vmatprep.subr.mxu0 0.0
  %266 = vmatpush1.msra.mxu0 %v94
  %267 = vmatprep.subr.mxu0 0.0
  %268 = vmatpush1.msra.mxu0 %v95
  %269 = vmatprep.subr.mxu0 0.0
  %270 = vmatpush1.msra.mxu0 %v96
  %271 = vmatprep.subr.mxu0 0.0
  %272 = vmatpush1.msra.mxu0 %v97
  %273 = vmatprep.subr.mxu0 0.0
  %274 = vmatpush1.msra.mxu0 %v98
  %275 = vmatprep.subr.mxu0 0.0
  %276 = vmatpush1.msra.mxu0 %v99
  %277 = vmatprep.subr.mxu0 0.0
  %278 = vmatpush1.msra.mxu0 %v100
  %279 = vmatprep.subr.mxu0 0.0
  %280 = vmatpush1.msra.mxu0 %v101
  %281 = vmatprep.subr.mxu0 0.0
  %282 = vmatpush1.msra.mxu0 0.0
  %283 = vmatprep.subr.mxu0 0.0
  %284 = vmatpush1.msra.mxu0 0.0
  %285 = vmatprep.subr.mxu0 0.0
  %286 = vmatpush1.msra.mxu0 0.0
  %287 = vmatprep.subr.mxu0 0.0
  %288 = vmatpush1.msra.mxu0 0.0
  %289 = vmatprep.subr.mxu0 0.0
  %290 = vmatpush1.msra.mxu0 0.0
  %291 = vmatprep.subr.mxu0 0.0
  %292 = vmatpush1.msra.mxu0 0.0
  %293 = vmatprep.subr.mxu0 0.0
  %294 = vmatpush1.msra.mxu0 0.0
  %295 = vmatprep.subr.mxu0 0.0
  %296 = vmatpush1.msra.mxu0 0.0
  %297 = vmatprep.subr.mxu0 0.0
  %298 = vmatpush1.msra.mxu0 0.0
  %299 = vmatprep.subr.mxu0 0.0
  %300 = vmatpush1.msra.mxu0 0.0
  %301 = vmatprep.subr.mxu0 0.0
  %302 = vmatpush1.msra.mxu0 0.0
  %303 = vmatprep.subr.mxu0 0.0
  %304 = vmatpush1.msra.mxu0 0.0
  %305 = vmatprep.subr.mxu0 0.0
  %306 = vmatpush1.msra.mxu0 0.0
  %307 = vmatprep.subr.mxu0 0.0
  %308 = vmatpush1.msra.mxu0 0.0
  %309 = vmatprep.subr.mxu0 0.0
  %310 = vmatpush1.msra.mxu0 0.0
  %311 = vmatprep.subr.mxu0 0.0
  %312 = vmatpush1.msra.mxu0 0.0
  %313 = vmatprep.mubr.f32.mxu0 0.0
  %314 = vmatmul.mubr.f32.gmra.mrb[0].mxu0 %v21
  %v315 = vpop.f32.mrb[0].mxu0
  %v316 = vadd.f32 %v246, %v315
  %v317 = vpop.f32.mrb[0].mxu0
  %318 = vdwg.mxu0
  %v319 = vmax.f32 %v316, 0.0
  %v320 = vld [vmem:[%s3] sm:$0xff]
  %v321 = vld [vmem:[%s3 + $0x8] sm:$0xff]
  %v322 = vld [vmem:[%s3 + $0x10] sm:$0xff]
  %v323 = vld [vmem:[%s3 + $0x18] sm:$0xff]
  %vm324 = vcmask 261120
  %v326 = vsel %vm324, %v319, 0
  %328 = vmatprep.subr.mxu0 0.0
  %329 = vmatpush1.msra.mxu0 %v320
  %330 = vmatprep.subr.mxu0 0.0
  %331 = vmatpush1.msra.mxu0 %v321
  %332 = vmatprep.subr.mxu0 0.0
  %333 = vmatpush1.msra.mxu0 %v322
  %334 = vmatprep.subr.mxu0 0.0
  %335 = vmatpush1.msra.mxu0 %v323
  %336 = vmatprep.subr.mxu0 0.0
  %337 = vmatpush1.msra.mxu0 0.0
  %338 = vmatprep.subr.mxu0 0.0
  %339 = vmatpush1.msra.mxu0 0.0
  %340 = vmatprep.subr.mxu0 0.0
  %341 = vmatpush1.msra.mxu0 0.0
  %342 = vmatprep.subr.mxu0 0.0
  %343 = vmatpush1.msra.mxu0 0.0
  %344 = vmatprep.subr.mxu0 0.0
  %345 = vmatpush1.msra.mxu0 0.0
  %346 = vmatprep.subr.mxu0 0.0
  %347 = vmatpush1.msra.mxu0 0.0
  %348 = vmatprep.subr.mxu0 0.0
  %349 = vmatpush1.msra.mxu0 0.0
  %350 = vmatprep.subr.mxu0 0.0
  %351 = vmatpush1.msra.mxu0 0.0
  %352 = vmatprep.subr.mxu0 0.0
  %353 = vmatpush1.msra.mxu0 0.0
  %354 = vmatprep.subr.mxu0 0.0
  %355 = vmatpush1.msra.mxu0 0.0
  %356 = vmatprep.subr.mxu0 0.0
  %357 = vmatpush1.msra.mxu0 0.0
  %358 = vmatprep.subr.mxu0 0.0
  %359 = vmatpush1.msra.mxu0 0.0
  %360 = vmatprep.subr.mxu0 0.0
  %361 = vmatpush1.msra.mxu0 0.0
  %362 = vmatprep.subr.mxu0 0.0
  %363 = vmatpush1.msra.mxu0 0.0
  %364 = vmatprep.subr.mxu0 0.0
  %365 = vmatpush1.msra.mxu0 0.0
  %366 = vmatprep.subr.mxu0 0.0
  %367 = vmatpush1.msra.mxu0 0.0
  %368 = vmatprep.subr.mxu0 0.0
  %369 = vmatpush1.msra.mxu0 0.0
  %370 = vmatprep.subr.mxu0 0.0
  %371 = vmatpush1.msra.mxu0 0.0
  %372 = vmatprep.subr.mxu0 0.0
  %373 = vmatpush1.msra.mxu0 0.0
  %374 = vmatprep.subr.mxu0 0.0
  %375 = vmatpush1.msra.mxu0 0.0
  %376 = vmatprep.subr.mxu0 0.0
  %377 = vmatpush1.msra.mxu0 0.0
  %378 = vmatprep.subr.mxu0 0.0
  %379 = vmatpush1.msra.mxu0 0.0
  %380 = vmatprep.subr.mxu0 0.0
  %381 = vmatpush1.msra.mxu0 0.0
  %382 = vmatprep.subr.mxu0 0.0
  %383 = vmatpush1.msra.mxu0 0.0
  %384 = vmatprep.subr.mxu0 0.0
  %385 = vmatpush1.msra.mxu0 0.0
  %386 = vmatprep.subr.mxu0 0.0
  %387 = vmatpush1.msra.mxu0 0.0
  %388 = vmatprep.subr.mxu0 0.0
  %389 = vmatpush1.msra.mxu0 0.0
  %390 = vmatprep.subr.mxu0 0.0
  %391 = vmatpush1.msra.mxu0 0.0
  %392 = vmatprep.mubr.f32.mxu0 0.0
  %393 = vmatmul.mubr.f32.gmra.mrb[0].mxu0 %v326
  %v394 = vpop.f32.mrb[0].mxu0
  %v395 = vadd.f32 0.0, %v394
  %v396 = vpop.f32.mrb[0].mxu0
  %397 = vdwg.mxu0
  %398 = vst [vmem:[%s4] sm:$0xff] %v395
  // Predicated region
  $region18: #{model_cnn_classifier_forward.3} parent=0 // pred_check
    _
  $region19: #{model_cnn_classifier_forward.3} parent=0 // pred_check_branch
    %400 = sbr.rel (0) target = $region21
  $region20: #{model_cnn_classifier_forward.3} parent=0 // pred_region
    _
  $region21: #{model_cnn_classifier_forward.3} parent=0 // pred_fallthru
    _
  // Predicated region
  $region22: #{model_cnn_classifier_forward.3} parent=0 // pred_check
    _
  $region23: #{model_cnn_classifier_forward.3} parent=0 // pred_check_branch
    %402 = sbr.rel (0) target = $region25
  $region24: #{model_cnn_classifier_forward.3} parent=0 // pred_region
    _
  $region25: #{model_cnn_classifier_forward.3} parent=0 // pred_fallthru
    _

</llo_original>
